<compile_context>
chip_gen: v7x
topology: tpu7x:2x2x1
jax: 0.10.0
libtpu: 0.0.40
codegen_flags: <defaults>
</compile_context>

<pallas_src>
import functools

import jax
import jax.numpy as jnp
from jax.experimental import pallas as pl
from jax.experimental.pallas import tpu as pltpu

LEAKY_SLOPE = 0.2
BN_EPS = 1e-5
KSIZE = 4
STRIDE = 2
PAD = 1

TILE_M = 256                      # im2col rows per grid step
TILE_K = 512                      # reduction tile (sweepable 256/512)
VMEM_LIMIT = 32 * 1024 * 1024     # fits v5e/v6e/v7x with ample headroom


def _round_up(x, m):
    return ((x + m - 1) // m) * m


# ----------------------------------------------------------------------------
# Pallas kernels
# ----------------------------------------------------------------------------
def _fused_conv_kernel(x_ref, w_ref, scale_ref, shift_ref, o_ref, acc_ref):
    """bf16 im2col matmul (f32 acc) + folded bias/eval-BN affine + LeakyReLU."""
    k = pl.program_id(1)

    @pl.when(k == 0)
    def _():
        acc_ref[...] = jnp.zeros_like(acc_ref)

    acc_ref[...] += jnp.dot(x_ref[...], w_ref[...],
                            preferred_element_type=jnp.float32)

    @pl.when(k == pl.num_programs(1) - 1)
    def _():
        # Conv -> BN(+bias) -> LeakyReLU(0.2)  (matches the PyTorch block order)
        y = acc_ref[...] * scale_ref[...] + shift_ref[...]
        y = jnp.where(y > 0, y, LEAKY_SLOPE * y)
        o_ref[...] = y.astype(o_ref.dtype)


def _head_kernel(x_ref, w_ref, b_ref, o_ref):
    """AdaptiveAvgPool2d(1) + Flatten + Linear(512, 1) + Sigmoid."""
    feats = jnp.mean(x_ref[...].astype(jnp.float32), axis=1)            # (N, 512)
    logits = jnp.sum(feats * w_ref[...], axis=-1, keepdims=True) + b_ref[...]
    o_ref[...] = jax.nn.sigmoid(logits)                                  # (N, 1)


# ----------------------------------------------------------------------------
# Pallas wrappers
# ----------------------------------------------------------------------------
def fused_conv_matmul(cols, w_mat, scale, shift):
    """cols: (M, K) bf16, w_mat: (K, C) bf16, scale/shift: (1, C) f32."""
    M, K = cols.shape
    Kw, C = w_mat.shape
    assert K == Kw, (K, Kw)

    # Pad K to a lane-friendly multiple of 128 (layer 1: 48 -> 128) and tile it.
    if K >= TILE_K:
        tk = TILE_K
        Kp = _round_up(K, tk)
    else:
        Kp = _round_up(K, 128)
        tk = Kp
    # Pad / tile M so every block is (8,128)-friendly and VMEM is bounded.
    Mp = _round_up(M, 8)
    tm = min(TILE_M, Mp)
    Mp = _round_up(Mp, tm)

    if Kp != K or Mp != M:
        cols = jnp.pad(cols, ((0, Mp - M), (0, Kp - K)))
    if Kp != K:
        w_mat = jnp.pad(w_mat, ((0, Kp - K), (0, 0)))

    nm, nk = Mp // tm, Kp // tk

    out = pl.pallas_call(
        _fused_conv_kernel,
        out_shape=jax.ShapeDtypeStruct((Mp, C), jnp.bfloat16),
        grid_spec=pltpu.PrefetchScalarGridSpec(
            num_scalar_prefetch=0,
            grid=(nm, nk),                                 # K innermost (reduction)
            in_specs=[
                pl.BlockSpec((tm, tk), lambda m, k: (m, k)),
                pl.BlockSpec((tk, C), lambda m, k: (k, 0)),
                pl.BlockSpec((1, C), lambda m, k: (0, 0)),
                pl.BlockSpec((1, C), lambda m, k: (0, 0)),
            ],
            out_specs=pl.BlockSpec((tm, C), lambda m, k: (m, 0)),
            scratch_shapes=[pltpu.VMEM((tm, C), jnp.float32)],
        ),
        compiler_params=pltpu.CompilerParams(
            dimension_semantics=("parallel", "arbitrary"),
            vmem_limit_bytes=VMEM_LIMIT),
    )(cols, w_mat, scale, shift)
    return out[:M] if Mp != M else out


def head_call(feats, lin_w, lin_b):
    N, HW, C = feats.shape
    return pl.pallas_call(
        _head_kernel,
        out_shape=jax.ShapeDtypeStruct((N, 1), jnp.float32),
        grid=(1,),
        in_specs=[
            pl.BlockSpec((N, HW, C), lambda i: (0, 0, 0)),
            pl.BlockSpec((1, C), lambda i: (0, 0)),
            pl.BlockSpec((1, 1), lambda i: (0, 0)),
        ],
        out_specs=pl.BlockSpec((N, 1), lambda i: (0, 0)),
        compiler_params=pltpu.CompilerParams(vmem_limit_bytes=VMEM_LIMIT),
    )(feats, lin_w, lin_b)


# ----------------------------------------------------------------------------
# JAX glue: im2col, parameter init, forward
# ----------------------------------------------------------------------------
def im2col(x_nhwc, k=KSIZE, s=STRIDE, p=PAD):
    N, H, W, C = x_nhwc.shape
    xp = jnp.pad(x_nhwc, ((0, 0), (p, p), (p, p), (0, 0)))
    Ho = (H + 2 * p - k) // s + 1
    Wo = (W + 2 * p - k) // s + 1
    patches = []
    for di in range(k):            # kh
        for dj in range(k):        # kw
            patches.append(
                xp[:, di:di + s * (Ho - 1) + 1:s, dj:dj + s * (Wo - 1) + 1:s, :])
    cols = jnp.stack(patches, axis=3)                    # (N, Ho, Wo, k*k, C)
    return cols.reshape(N * Ho * Wo, k * k * C), Ho, Wo


def init_params(key):
    """Deterministic synthetic parameters matching the PyTorch module shapes."""
    layer_specs = [(3, 64, False), (64, 128, True),
                   (128, 256, True), (256, 512, True)]
    conv_params = []
    for cin, cout, bn in layer_specs:
        key, k1, k2, k3, k4 = jax.random.split(key, 5)
        w = 0.02 * jax.random.normal(k1, (cout, cin, KSIZE, KSIZE), jnp.float32)
        b = 0.02 * jax.random.normal(k2, (cout,), jnp.float32)
        if bn:
            gamma = 1.0 + 0.1 * jax.random.normal(k3, (cout,), jnp.float32)
            beta = 0.1 * jax.random.normal(k4, (cout,), jnp.float32)
            running_mean = jnp.zeros((cout,), jnp.float32)
            running_var = jnp.ones((cout,), jnp.float32)
            scale = gamma / jnp.sqrt(running_var + BN_EPS)
            shift = beta + (b - running_mean) * scale
        else:
            scale = jnp.ones((cout,), jnp.float32)
            shift = b
        # (C_out, C_in, KH, KW) -> (KH, KW, C_in, C_out) -> (KH*KW*C_in, C_out)
        w_mat = jnp.transpose(w, (2, 3, 1, 0)).reshape(cin * KSIZE * KSIZE, cout)
        conv_params.append((w_mat.astype(jnp.bfloat16),
                            scale.reshape(1, cout), shift.reshape(1, cout)))

    key, k1, k2 = jax.random.split(key, 3)
    lin_w = 0.02 * jax.random.normal(k1, (1, 512), jnp.float32)   # torch Linear (out, in)
    lin_b = 0.02 * jax.random.normal(k2, (1,), jnp.float32)
    return conv_params, (lin_w, lin_b.reshape(1, 1))


def discriminator_forward(img_nchw, conv_params, head_params):
    # NCHW -> NHWC; bf16 activations between layers (halves HBM traffic).
    x = jnp.transpose(img_nchw, (0, 2, 3, 1)).astype(jnp.bfloat16)
    N = x.shape[0]
    for w_mat, scale, shift in conv_params:
        cols, Ho, Wo = im2col(x)
        y = fused_conv_matmul(cols, w_mat, scale, shift)
        # Dropout2d(0.25): identity in eval mode.
        x = y.reshape(N, Ho, Wo, w_mat.shape[1])
    feats = x.reshape(N, -1, x.shape[-1])                           # (N, H*W, 512)
    lin_w, lin_b = head_params
    return head_call(feats, lin_w, lin_b)                           # (N, 1)


if __name__ == "__main__":
    key = jax.random.PRNGKey(0)
    kparam, kimg = jax.random.split(key)
    conv_params, head_params = init_params(kparam)

    # Small input consistent with the module: 32x32 RGB -> 16 -> 8 -> 4 -> 2 -> pool.
    img = jax.random.normal(kimg, (2, 3, 32, 32), jnp.float32)      # NCHW

    fwd = jax.jit(functools.partial(discriminator_forward,
                                    conv_params=conv_params,
                                    head_params=head_params))
    out = jax.block_until_ready(fwd(img))
    assert out.shape == (2, 1), out.shape
    assert bool(jnp.all(jnp.isfinite(out)))
    assert bool(jnp.all((out >= 0.0) & (out <= 1.0)))
    print("KERNEL_OK")
</pallas_src>

<mosaic_0001>
module attributes {stable_mosaic.version = 11 : i64} {
  func.func @_fused_conv_kernel(%arg0: i32, %arg1: i32, %arg2: memref<256x128xbf16, #tpu.memory_space<vmem>>, %arg3: memref<128x64xbf16, #tpu.memory_space<vmem>>, %arg4: memref<1x64xf32, #tpu.memory_space<vmem>>, %arg5: memref<1x64xf32, #tpu.memory_space<vmem>>, %arg6: memref<256x64xbf16, #tpu.memory_space<vmem>>, %arg7: memref<256x64xf32, #tpu.memory_space<vmem>>) attributes {dimension_semantics = [#tpu.dimension_semantics<parallel>, #tpu.dimension_semantics<arbitrary>], iteration_bounds = array<i64: 2, 1>, scalar_prefetch = 0 : i64, scratch_operands = 1 : i64, tpu.core_type = #tpu.core_type<tc>, window_params = [{transform_indices = @transform_0, window_bounds = array<i64: 256, 128>}, {transform_indices = @transform_1, window_bounds = array<i64: 128, 64>}, {pipeline_mode = #tpu.pipeline_mode<synchronous>, transform_indices = @transform_2, window_bounds = array<i64: 1, 64>}, {pipeline_mode = #tpu.pipeline_mode<synchronous>, transform_indices = @transform_3, window_bounds = array<i64: 1, 64>}, {transform_indices = @transform_4, window_bounds = array<i64: 256, 64>}]} {
    %c0_i32 = arith.constant 0 : i32
    %0 = arith.cmpi eq, %arg1, %c0_i32 : i32
    %1 = arith.extui %0 : i1 to i32
    %c0_i32_0 = arith.constant 0 : i32
    %2 = arith.cmpi ne, %1, %c0_i32_0 : i32
    scf.if %2 {
      %cst_10 = arith.constant 0.000000e+00 : f32
      %12 = vector.broadcast %cst_10 : f32 to vector<256x64xf32>
      %c0_11 = arith.constant 0 : index
      %c0_12 = arith.constant 0 : index
      %13 = vector.load %arg7[%c0_11, %c0_12] : memref<256x64xf32, #tpu.memory_space<vmem>>, vector<256x64xf32>
      tpu.vector_store %arg7[%c0_11, %c0_12], %12 {strides = array<i32>} : memref<256x64xf32, #tpu.memory_space<vmem>>, vector<256x64xf32>,
    } else {
    }
    %c0 = arith.constant 0 : index
    %c0_1 = arith.constant 0 : index
    %3 = vector.load %arg7[%c0, %c0_1] : memref<256x64xf32, #tpu.memory_space<vmem>>, vector<256x64xf32>
    %c0_2 = arith.constant 0 : index
    %c0_3 = arith.constant 0 : index
    %4 = vector.load %arg2[%c0_2, %c0_3] : memref<256x128xbf16, #tpu.memory_space<vmem>>, vector<256x128xbf16>
    %c0_4 = arith.constant 0 : index
    %c0_5 = arith.constant 0 : index
    %5 = vector.load %arg3[%c0_4, %c0_5] : memref<128x64xbf16, #tpu.memory_space<vmem>>, vector<128x64xbf16>
    %cst = arith.constant dense<0.000000e+00> : vector<256x64xf32>
    %6 = tpu.matmul %4, %5, %cst {dimension_numbers = #tpu.dot_dimension_numbers<[1], [0], [0], [1], [0, 0, 1, 1], [], []>} : vector<256x128xbf16>, vector<128x64xbf16>, vector<256x64xf32> -> vector<256x64xf32>
    %7 = arith.addf %3, %6 : vector<256x64xf32>
    %c0_6 = arith.constant 0 : index
    %c0_7 = arith.constant 0 : index
    %8 = vector.load %arg7[%c0_6, %c0_7] : memref<256x64xf32, #tpu.memory_space<vmem>>, vector<256x64xf32>
    tpu.vector_store %arg7[%c0_6, %c0_7], %7 {strides = array<i32>} : memref<256x64xf32, #tpu.memory_space<vmem>>, vector<256x64xf32>,
    %c0_i32_8 = arith.constant 0 : i32
    %9 = arith.cmpi eq, %arg1, %c0_i32_8 : i32
    %10 = arith.extui %9 : i1 to i32
    %c0_i32_9 = arith.constant 0 : i32
    %11 = arith.cmpi ne, %10, %c0_i32_9 : i32
    scf.if %11 {
      %c0_10 = arith.constant 0 : index
      %c0_11 = arith.constant 0 : index
      %12 = vector.load %arg7[%c0_10, %c0_11] : memref<256x64xf32, #tpu.memory_space<vmem>>, vector<256x64xf32>
      %c0_12 = arith.constant 0 : index
      %c0_13 = arith.constant 0 : index
      %13 = vector.load %arg4[%c0_12, %c0_13] : memref<1x64xf32, #tpu.memory_space<vmem>>, vector<1x64xf32>
      %14 = vector.broadcast %13 : vector<1x64xf32> to vector<256x64xf32>
      %15 = arith.mulf %12, %14 : vector<256x64xf32>
      %c0_14 = arith.constant 0 : index
      %c0_15 = arith.constant 0 : index
      %16 = vector.load %arg5[%c0_14, %c0_15] : memref<1x64xf32, #tpu.memory_space<vmem>>, vector<1x64xf32>
      %17 = vector.broadcast %16 : vector<1x64xf32> to vector<256x64xf32>
      %18 = arith.addf %15, %17 : vector<256x64xf32>
      %cst_16 = arith.constant 0.000000e+00 : f32
      %19 = vector.broadcast %cst_16 : f32 to vector<256x64xf32>
      %20 = arith.cmpf ogt, %18, %19 : vector<256x64xf32>
      %cst_17 = arith.constant 2.000000e-01 : f32
      %21 = vector.broadcast %cst_17 : f32 to vector<256x64xf32>
      %22 = arith.mulf %21, %18 : vector<256x64xf32>
      %23 = arith.select %20, %18, %22 : vector<256x64xi1>, vector<256x64xf32>
      %24 = arith.truncf %23 : vector<256x64xf32> to vector<256x64xbf16>
      %c0_18 = arith.constant 0 : index
      %c0_19 = arith.constant 0 : index
      %25 = vector.load %arg6[%c0_18, %c0_19] : memref<256x64xbf16, #tpu.memory_space<vmem>>, vector<256x64xbf16>
      tpu.vector_store %arg6[%c0_18, %c0_19], %24 {strides = array<i32>} : memref<256x64xbf16, #tpu.memory_space<vmem>>, vector<256x64xbf16>,
    } else {
    }
    return
  }
  func.func @transform_0(%arg0: i32, %arg1: i32) -> (i32, i32) {
    %c0_i32 = arith.constant 0 : i32
    return %arg0, %arg1 : i32, i32
  }
  func.func @transform_1(%arg0: i32, %arg1: i32) -> (i32, i32) {
    %c0_i32 = arith.constant 0 : i32
    %c0_i32_0 = arith.constant 0 : i32
    return %arg1, %c0_i32 : i32, i32
  }
  func.func @transform_2(%arg0: i32, %arg1: i32) -> (i32, i32) {
    %c0_i32 = arith.constant 0 : i32
    %c0_i32_0 = arith.constant 0 : i32
    %c0_i32_1 = arith.constant 0 : i32
    return %c0_i32, %c0_i32_0 : i32, i32
  }
  func.func @transform_3(%arg0: i32, %arg1: i32) -> (i32, i32) {
    %c0_i32 = arith.constant 0 : i32
    %c0_i32_0 = arith.constant 0 : i32
    %c0_i32_1 = arith.constant 0 : i32
    return %c0_i32, %c0_i32_0 : i32, i32
  }
  func.func @transform_4(%arg0: i32, %arg1: i32) -> (i32, i32) {
    %c0_i32 = arith.constant 0 : i32
    %c0_i32_0 = arith.constant 0 : i32
    return %arg0, %c0_i32 : i32, i32
  }
}

module attributes {stable_mosaic.version = 11 : i64} {
  func.func @_fused_conv_kernel(%arg0: i32, %arg1: i32, %arg2: memref<128x512xbf16, #tpu.memory_space<vmem>>, %arg3: memref<512x128xbf16, #tpu.memory_space<vmem>>, %arg4: memref<1x128xf32, #tpu.memory_space<vmem>>, %arg5: memref<1x128xf32, #tpu.memory_space<vmem>>, %arg6: memref<128x128xbf16, #tpu.memory_space<vmem>>, %arg7: memref<128x128xf32, #tpu.memory_space<vmem>>) attributes {dimension_semantics = [#tpu.dimension_semantics<parallel>, #tpu.dimension_semantics<arbitrary>], iteration_bounds = array<i64: 1, 2>, scalar_prefetch = 0 : i64, scratch_operands = 1 : i64, tpu.core_type = #tpu.core_type<tc>, window_params = [{transform_indices = @transform_0, window_bounds = array<i64: 128, 512>}, {transform_indices = @transform_1, window_bounds = array<i64: 512, 128>}, {pipeline_mode = #tpu.pipeline_mode<synchronous>, transform_indices = @transform_2, window_bounds = array<i64: 1, 128>}, {pipeline_mode = #tpu.pipeline_mode<synchronous>, transform_indices = @transform_3, window_bounds = array<i64: 1, 128>}, {transform_indices = @transform_4, window_bounds = array<i64: 128, 128>}]} {
    %c0_i32 = arith.constant 0 : i32
    %0 = arith.cmpi eq, %arg1, %c0_i32 : i32
    %1 = arith.extui %0 : i1 to i32
    %c0_i32_0 = arith.constant 0 : i32
    %2 = arith.cmpi ne, %1, %c0_i32_0 : i32
    scf.if %2 {
      %cst_9 = arith.constant 0.000000e+00 : f32
      %12 = vector.broadcast %cst_9 : f32 to vector<128x128xf32>
      %c0_10 = arith.constant 0 : index
      %c0_11 = arith.constant 0 : index
      %13 = vector.load %arg7[%c0_10, %c0_11] : memref<128x128xf32, #tpu.memory_space<vmem>>, vector<128x128xf32>
      tpu.vector_store %arg7[%c0_10, %c0_11], %12 {strides = array<i32>} : memref<128x128xf32, #tpu.memory_space<vmem>>, vector<128x128xf32>,
    } else {
    }
    %c0 = arith.constant 0 : index
    %c0_1 = arith.constant 0 : index
    %3 = vector.load %arg7[%c0, %c0_1] : memref<128x128xf32, #tpu.memory_space<vmem>>, vector<128x128xf32>
    %c0_2 = arith.constant 0 : index
    %c0_3 = arith.constant 0 : index
    %4 = vector.load %arg2[%c0_2, %c0_3] : memref<128x512xbf16, #tpu.memory_space<vmem>>, vector<128x512xbf16>
    %c0_4 = arith.constant 0 : index
    %c0_5 = arith.constant 0 : index
    %5 = vector.load %arg3[%c0_4, %c0_5] : memref<512x128xbf16, #tpu.memory_space<vmem>>, vector<512x128xbf16>
    %cst = arith.constant dense<0.000000e+00> : vector<128x128xf32>
    %6 = tpu.matmul %4, %5, %cst {dimension_numbers = #tpu.dot_dimension_numbers<[1], [0], [0], [1], [0, 0, 1, 1], [], []>} : vector<128x512xbf16>, vector<512x128xbf16>, vector<128x128xf32> -> vector<128x128xf32>
    %7 = arith.addf %3, %6 : vector<128x128xf32>
    %c0_6 = arith.constant 0 : index
    %c0_7 = arith.constant 0 : index
    %8 = vector.load %arg7[%c0_6, %c0_7] : memref<128x128xf32, #tpu.memory_space<vmem>>, vector<128x128xf32>
    tpu.vector_store %arg7[%c0_6, %c0_7], %7 {strides = array<i32>} : memref<128x128xf32, #tpu.memory_space<vmem>>, vector<128x128xf32>,
    %c1_i32 = arith.constant 1 : i32
    %9 = arith.cmpi eq, %arg1, %c1_i32 : i32
    %10 = arith.extui %9 : i1 to i32
    %c0_i32_8 = arith.constant 0 : i32
    %11 = arith.cmpi ne, %10, %c0_i32_8 : i32
    scf.if %11 {
      %c0_9 = arith.constant 0 : index
      %c0_10 = arith.constant 0 : index
      %12 = vector.load %arg7[%c0_9, %c0_10] : memref<128x128xf32, #tpu.memory_space<vmem>>, vector<128x128xf32>
      %c0_11 = arith.constant 0 : index
      %c0_12 = arith.constant 0 : index
      %13 = vector.load %arg4[%c0_11, %c0_12] : memref<1x128xf32, #tpu.memory_space<vmem>>, vector<1x128xf32>
      %14 = vector.broadcast %13 : vector<1x128xf32> to vector<128x128xf32>
      %15 = arith.mulf %12, %14 : vector<128x128xf32>
      %c0_13 = arith.constant 0 : index
      %c0_14 = arith.constant 0 : index
      %16 = vector.load %arg5[%c0_13, %c0_14] : memref<1x128xf32, #tpu.memory_space<vmem>>, vector<1x128xf32>
      %17 = vector.broadcast %16 : vector<1x128xf32> to vector<128x128xf32>
      %18 = arith.addf %15, %17 : vector<128x128xf32>
      %cst_15 = arith.constant 0.000000e+00 : f32
      %19 = vector.broadcast %cst_15 : f32 to vector<128x128xf32>
      %20 = arith.cmpf ogt, %18, %19 : vector<128x128xf32>
      %cst_16 = arith.constant 2.000000e-01 : f32
      %21 = vector.broadcast %cst_16 : f32 to vector<128x128xf32>
      %22 = arith.mulf %21, %18 : vector<128x128xf32>
      %23 = arith.select %20, %18, %22 : vector<128x128xi1>, vector<128x128xf32>
      %24 = arith.truncf %23 : vector<128x128xf32> to vector<128x128xbf16>
      %c0_17 = arith.constant 0 : index
      %c0_18 = arith.constant 0 : index
      %25 = vector.load %arg6[%c0_17, %c0_18] : memref<128x128xbf16, #tpu.memory_space<vmem>>, vector<128x128xbf16>
      tpu.vector_store %arg6[%c0_17, %c0_18], %24 {strides = array<i32>} : memref<128x128xbf16, #tpu.memory_space<vmem>>, vector<128x128xbf16>,
    } else {
    }
    return
  }
  func.func @transform_0(%arg0: i32, %arg1: i32) -> (i32, i32) {
    %c0_i32 = arith.constant 0 : i32
    return %arg0, %arg1 : i32, i32
  }
  func.func @transform_1(%arg0: i32, %arg1: i32) -> (i32, i32) {
    %c0_i32 = arith.constant 0 : i32
    %c0_i32_0 = arith.constant 0 : i32
    return %arg1, %c0_i32 : i32, i32
  }
  func.func @transform_2(%arg0: i32, %arg1: i32) -> (i32, i32) {
    %c0_i32 = arith.constant 0 : i32
    %c0_i32_0 = arith.constant 0 : i32
    %c0_i32_1 = arith.constant 0 : i32
    return %c0_i32, %c0_i32_0 : i32, i32
  }
  func.func @transform_3(%arg0: i32, %arg1: i32) -> (i32, i32) {
    %c0_i32 = arith.constant 0 : i32
    %c0_i32_0 = arith.constant 0 : i32
    %c0_i32_1 = arith.constant 0 : i32
    return %c0_i32, %c0_i32_0 : i32, i32
  }
  func.func @transform_4(%arg0: i32, %arg1: i32) -> (i32, i32) {
    %c0_i32 = arith.constant 0 : i32
    %c0_i32_0 = arith.constant 0 : i32
    return %arg0, %c0_i32 : i32, i32
  }
}

module attributes {stable_mosaic.version = 11 : i64} {
  func.func @_fused_conv_kernel(%arg0: i32, %arg1: i32, %arg2: memref<32x512xbf16, #tpu.memory_space<vmem>>, %arg3: memref<512x256xbf16, #tpu.memory_space<vmem>>, %arg4: memref<1x256xf32, #tpu.memory_space<vmem>>, %arg5: memref<1x256xf32, #tpu.memory_space<vmem>>, %arg6: memref<32x256xbf16, #tpu.memory_space<vmem>>, %arg7: memref<32x256xf32, #tpu.memory_space<vmem>>) attributes {dimension_semantics = [#tpu.dimension_semantics<parallel>, #tpu.dimension_semantics<arbitrary>], iteration_bounds = array<i64: 1, 4>, scalar_prefetch = 0 : i64, scratch_operands = 1 : i64, tpu.core_type = #tpu.core_type<tc>, window_params = [{transform_indices = @transform_0, window_bounds = array<i64: 32, 512>}, {transform_indices = @transform_1, window_bounds = array<i64: 512, 256>}, {pipeline_mode = #tpu.pipeline_mode<synchronous>, transform_indices = @transform_2, window_bounds = array<i64: 1, 256>}, {pipeline_mode = #tpu.pipeline_mode<synchronous>, transform_indices = @transform_3, window_bounds = array<i64: 1, 256>}, {transform_indices = @transform_4, window_bounds = array<i64: 32, 256>}]} {
    %c0_i32 = arith.constant 0 : i32
    %0 = arith.cmpi eq, %arg1, %c0_i32 : i32
    %1 = arith.extui %0 : i1 to i32
    %c0_i32_0 = arith.constant 0 : i32
    %2 = arith.cmpi ne, %1, %c0_i32_0 : i32
    scf.if %2 {
      %cst_9 = arith.constant 0.000000e+00 : f32
      %12 = vector.broadcast %cst_9 : f32 to vector<32x256xf32>
      %c0_10 = arith.constant 0 : index
      %c0_11 = arith.constant 0 : index
      %13 = vector.load %arg7[%c0_10, %c0_11] : memref<32x256xf32, #tpu.memory_space<vmem>>, vector<32x256xf32>
      tpu.vector_store %arg7[%c0_10, %c0_11], %12 {strides = array<i32>} : memref<32x256xf32, #tpu.memory_space<vmem>>, vector<32x256xf32>,
    } else {
    }
    %c0 = arith.constant 0 : index
    %c0_1 = arith.constant 0 : index
    %3 = vector.load %arg7[%c0, %c0_1] : memref<32x256xf32, #tpu.memory_space<vmem>>, vector<32x256xf32>
    %c0_2 = arith.constant 0 : index
    %c0_3 = arith.constant 0 : index
    %4 = vector.load %arg2[%c0_2, %c0_3] : memref<32x512xbf16, #tpu.memory_space<vmem>>, vector<32x512xbf16>
    %c0_4 = arith.constant 0 : index
    %c0_5 = arith.constant 0 : index
    %5 = vector.load %arg3[%c0_4, %c0_5] : memref<512x256xbf16, #tpu.memory_space<vmem>>, vector<512x256xbf16>
    %cst = arith.constant dense<0.000000e+00> : vector<32x256xf32>
    %6 = tpu.matmul %4, %5, %cst {dimension_numbers = #tpu.dot_dimension_numbers<[1], [0], [0], [1], [0, 0, 1, 1], [], []>} : vector<32x512xbf16>, vector<512x256xbf16>, vector<32x256xf32> -> vector<32x256xf32>
    %7 = arith.addf %3, %6 : vector<32x256xf32>
    %c0_6 = arith.constant 0 : index
    %c0_7 = arith.constant 0 : index
    %8 = vector.load %arg7[%c0_6, %c0_7] : memref<32x256xf32, #tpu.memory_space<vmem>>, vector<32x256xf32>
    tpu.vector_store %arg7[%c0_6, %c0_7], %7 {strides = array<i32>} : memref<32x256xf32, #tpu.memory_space<vmem>>, vector<32x256xf32>,
    %c3_i32 = arith.constant 3 : i32
    %9 = arith.cmpi eq, %arg1, %c3_i32 : i32
    %10 = arith.extui %9 : i1 to i32
    %c0_i32_8 = arith.constant 0 : i32
    %11 = arith.cmpi ne, %10, %c0_i32_8 : i32
    scf.if %11 {
      %c0_9 = arith.constant 0 : index
      %c0_10 = arith.constant 0 : index
      %12 = vector.load %arg7[%c0_9, %c0_10] : memref<32x256xf32, #tpu.memory_space<vmem>>, vector<32x256xf32>
      %c0_11 = arith.constant 0 : index
      %c0_12 = arith.constant 0 : index
      %13 = vector.load %arg4[%c0_11, %c0_12] : memref<1x256xf32, #tpu.memory_space<vmem>>, vector<1x256xf32>
      %14 = vector.broadcast %13 : vector<1x256xf32> to vector<32x256xf32>
      %15 = arith.mulf %12, %14 : vector<32x256xf32>
      %c0_13 = arith.constant 0 : index
      %c0_14 = arith.constant 0 : index
      %16 = vector.load %arg5[%c0_13, %c0_14] : memref<1x256xf32, #tpu.memory_space<vmem>>, vector<1x256xf32>
      %17 = vector.broadcast %16 : vector<1x256xf32> to vector<32x256xf32>
      %18 = arith.addf %15, %17 : vector<32x256xf32>
      %cst_15 = arith.constant 0.000000e+00 : f32
      %19 = vector.broadcast %cst_15 : f32 to vector<32x256xf32>
      %20 = arith.cmpf ogt, %18, %19 : vector<32x256xf32>
      %cst_16 = arith.constant 2.000000e-01 : f32
      %21 = vector.broadcast %cst_16 : f32 to vector<32x256xf32>
      %22 = arith.mulf %21, %18 : vector<32x256xf32>
      %23 = arith.select %20, %18, %22 : vector<32x256xi1>, vector<32x256xf32>
      %24 = arith.truncf %23 : vector<32x256xf32> to vector<32x256xbf16>
      %c0_17 = arith.constant 0 : index
      %c0_18 = arith.constant 0 : index
      %25 = vector.load %arg6[%c0_17, %c0_18] : memref<32x256xbf16, #tpu.memory_space<vmem>>, vector<32x256xbf16>
      tpu.vector_store %arg6[%c0_17, %c0_18], %24 {strides = array<i32>} : memref<32x256xbf16, #tpu.memory_space<vmem>>, vector<32x256xbf16>,
    } else {
    }
    return
  }
  func.func @transform_0(%arg0: i32, %arg1: i32) -> (i32, i32) {
    %c0_i32 = arith.constant 0 : i32
    return %arg0, %arg1 : i32, i32
  }
  func.func @transform_1(%arg0: i32, %arg1: i32) -> (i32, i32) {
    %c0_i32 = arith.constant 0 : i32
    %c0_i32_0 = arith.constant 0 : i32
    return %arg1, %c0_i32 : i32, i32
  }
  func.func @transform_2(%arg0: i32, %arg1: i32) -> (i32, i32) {
    %c0_i32 = arith.constant 0 : i32
    %c0_i32_0 = arith.constant 0 : i32
    %c0_i32_1 = arith.constant 0 : i32
    return %c0_i32, %c0_i32_0 : i32, i32
  }
  func.func @transform_3(%arg0: i32, %arg1: i32) -> (i32, i32) {
    %c0_i32 = arith.constant 0 : i32
    %c0_i32_0 = arith.constant 0 : i32
    %c0_i32_1 = arith.constant 0 : i32
    return %c0_i32, %c0_i32_0 : i32, i32
  }
  func.func @transform_4(%arg0: i32, %arg1: i32) -> (i32, i32) {
    %c0_i32 = arith.constant 0 : i32
    %c0_i32_0 = arith.constant 0 : i32
    return %arg0, %c0_i32 : i32, i32
  }
}

module attributes {stable_mosaic.version = 11 : i64} {
  func.func @_fused_conv_kernel(%arg0: i32, %arg1: i32, %arg2: memref<8x512xbf16, #tpu.memory_space<vmem>>, %arg3: memref<512x512xbf16, #tpu.memory_space<vmem>>, %arg4: memref<1x512xf32, #tpu.memory_space<vmem>>, %arg5: memref<1x512xf32, #tpu.memory_space<vmem>>, %arg6: memref<8x512xbf16, #tpu.memory_space<vmem>>, %arg7: memref<8x512xf32, #tpu.memory_space<vmem>>) attributes {dimension_semantics = [#tpu.dimension_semantics<parallel>, #tpu.dimension_semantics<arbitrary>], iteration_bounds = array<i64: 1, 8>, scalar_prefetch = 0 : i64, scratch_operands = 1 : i64, tpu.core_type = #tpu.core_type<tc>, window_params = [{transform_indices = @transform_0, window_bounds = array<i64: 8, 512>}, {transform_indices = @transform_1, window_bounds = array<i64: 512, 512>}, {pipeline_mode = #tpu.pipeline_mode<synchronous>, transform_indices = @transform_2, window_bounds = array<i64: 1, 512>}, {pipeline_mode = #tpu.pipeline_mode<synchronous>, transform_indices = @transform_3, window_bounds = array<i64: 1, 512>}, {transform_indices = @transform_4, window_bounds = array<i64: 8, 512>}]} {
    %c0_i32 = arith.constant 0 : i32
    %0 = arith.cmpi eq, %arg1, %c0_i32 : i32
    %1 = arith.extui %0 : i1 to i32
    %c0_i32_0 = arith.constant 0 : i32
    %2 = arith.cmpi ne, %1, %c0_i32_0 : i32
    scf.if %2 {
      %cst_9 = arith.constant 0.000000e+00 : f32
      %12 = vector.broadcast %cst_9 : f32 to vector<8x512xf32>
      %c0_10 = arith.constant 0 : index
      %c0_11 = arith.constant 0 : index
      %13 = vector.load %arg7[%c0_10, %c0_11] : memref<8x512xf32, #tpu.memory_space<vmem>>, vector<8x512xf32>
      tpu.vector_store %arg7[%c0_10, %c0_11], %12 {strides = array<i32>} : memref<8x512xf32, #tpu.memory_space<vmem>>, vector<8x512xf32>,
    } else {
    }
    %c0 = arith.constant 0 : index
    %c0_1 = arith.constant 0 : index
    %3 = vector.load %arg7[%c0, %c0_1] : memref<8x512xf32, #tpu.memory_space<vmem>>, vector<8x512xf32>
    %c0_2 = arith.constant 0 : index
    %c0_3 = arith.constant 0 : index
    %4 = vector.load %arg2[%c0_2, %c0_3] : memref<8x512xbf16, #tpu.memory_space<vmem>>, vector<8x512xbf16>
    %c0_4 = arith.constant 0 : index
    %c0_5 = arith.constant 0 : index
    %5 = vector.load %arg3[%c0_4, %c0_5] : memref<512x512xbf16, #tpu.memory_space<vmem>>, vector<512x512xbf16>
    %cst = arith.constant dense<0.000000e+00> : vector<8x512xf32>
    %6 = tpu.matmul %4, %5, %cst {dimension_numbers = #tpu.dot_dimension_numbers<[1], [0], [0], [1], [0, 0, 1, 1], [], []>} : vector<8x512xbf16>, vector<512x512xbf16>, vector<8x512xf32> -> vector<8x512xf32>
    %7 = arith.addf %3, %6 : vector<8x512xf32>
    %c0_6 = arith.constant 0 : index
    %c0_7 = arith.constant 0 : index
    %8 = vector.load %arg7[%c0_6, %c0_7] : memref<8x512xf32, #tpu.memory_space<vmem>>, vector<8x512xf32>
    tpu.vector_store %arg7[%c0_6, %c0_7], %7 {strides = array<i32>} : memref<8x512xf32, #tpu.memory_space<vmem>>, vector<8x512xf32>,
    %c7_i32 = arith.constant 7 : i32
    %9 = arith.cmpi eq, %arg1, %c7_i32 : i32
    %10 = arith.extui %9 : i1 to i32
    %c0_i32_8 = arith.constant 0 : i32
    %11 = arith.cmpi ne, %10, %c0_i32_8 : i32
    scf.if %11 {
      %c0_9 = arith.constant 0 : index
      %c0_10 = arith.constant 0 : index
      %12 = vector.load %arg7[%c0_9, %c0_10] : memref<8x512xf32, #tpu.memory_space<vmem>>, vector<8x512xf32>
      %c0_11 = arith.constant 0 : index
      %c0_12 = arith.constant 0 : index
      %13 = vector.load %arg4[%c0_11, %c0_12] : memref<1x512xf32, #tpu.memory_space<vmem>>, vector<1x512xf32>
      %14 = vector.broadcast %13 : vector<1x512xf32> to vector<8x512xf32>
      %15 = arith.mulf %12, %14 : vector<8x512xf32>
      %c0_13 = arith.constant 0 : index
      %c0_14 = arith.constant 0 : index
      %16 = vector.load %arg5[%c0_13, %c0_14] : memref<1x512xf32, #tpu.memory_space<vmem>>, vector<1x512xf32>
      %17 = vector.broadcast %16 : vector<1x512xf32> to vector<8x512xf32>
      %18 = arith.addf %15, %17 : vector<8x512xf32>
      %cst_15 = arith.constant 0.000000e+00 : f32
      %19 = vector.broadcast %cst_15 : f32 to vector<8x512xf32>
      %20 = arith.cmpf ogt, %18, %19 : vector<8x512xf32>
      %cst_16 = arith.constant 2.000000e-01 : f32
      %21 = vector.broadcast %cst_16 : f32 to vector<8x512xf32>
      %22 = arith.mulf %21, %18 : vector<8x512xf32>
      %23 = arith.select %20, %18, %22 : vector<8x512xi1>, vector<8x512xf32>
      %24 = arith.truncf %23 : vector<8x512xf32> to vector<8x512xbf16>
      %c0_17 = arith.constant 0 : index
      %c0_18 = arith.constant 0 : index
      %25 = vector.load %arg6[%c0_17, %c0_18] : memref<8x512xbf16, #tpu.memory_space<vmem>>, vector<8x512xbf16>
      tpu.vector_store %arg6[%c0_17, %c0_18], %24 {strides = array<i32>} : memref<8x512xbf16, #tpu.memory_space<vmem>>, vector<8x512xbf16>,
    } else {
    }
    return
  }
  func.func @transform_0(%arg0: i32, %arg1: i32) -> (i32, i32) {
    %c0_i32 = arith.constant 0 : i32
    return %arg0, %arg1 : i32, i32
  }
  func.func @transform_1(%arg0: i32, %arg1: i32) -> (i32, i32) {
    %c0_i32 = arith.constant 0 : i32
    %c0_i32_0 = arith.constant 0 : i32
    return %arg1, %c0_i32 : i32, i32
  }
  func.func @transform_2(%arg0: i32, %arg1: i32) -> (i32, i32) {
    %c0_i32 = arith.constant 0 : i32
    %c0_i32_0 = arith.constant 0 : i32
    %c0_i32_1 = arith.constant 0 : i32
    return %c0_i32, %c0_i32_0 : i32, i32
  }
  func.func @transform_3(%arg0: i32, %arg1: i32) -> (i32, i32) {
    %c0_i32 = arith.constant 0 : i32
    %c0_i32_0 = arith.constant 0 : i32
    %c0_i32_1 = arith.constant 0 : i32
    return %c0_i32, %c0_i32_0 : i32, i32
  }
  func.func @transform_4(%arg0: i32, %arg1: i32) -> (i32, i32) {
    %c0_i32 = arith.constant 0 : i32
    %c0_i32_0 = arith.constant 0 : i32
    return %arg0, %c0_i32 : i32, i32
  }
}

module attributes {stable_mosaic.version = 11 : i64} {
  func.func @_head_kernel(%arg0: i32, %arg1: memref<2x4x512xbf16, #tpu.memory_space<vmem>>, %arg2: memref<1x512xf32, #tpu.memory_space<vmem>>, %arg3: memref<1x1xf32, #tpu.memory_space<vmem>>, %arg4: memref<2x1xf32, #tpu.memory_space<vmem>>) attributes {dimension_semantics = [#tpu.dimension_semantics<arbitrary>], iteration_bounds = array<i64: 1>, scalar_prefetch = 0 : i64, scratch_operands = 0 : i64, tpu.core_type = #tpu.core_type<tc>, window_params = [{pipeline_mode = #tpu.pipeline_mode<synchronous>, transform_indices = @transform_0, window_bounds = array<i64: 2, 4, 512>}, {pipeline_mode = #tpu.pipeline_mode<synchronous>, transform_indices = @transform_1, window_bounds = array<i64: 1, 512>}, {pipeline_mode = #tpu.pipeline_mode<synchronous>, transform_indices = @transform_2, window_bounds = array<i64: 1, 1>}, {pipeline_mode = #tpu.pipeline_mode<synchronous>, transform_indices = @transform_3, window_bounds = array<i64: 2, 1>}]} {
    %c0 = arith.constant 0 : index
    %c0_0 = arith.constant 0 : index
    %c0_1 = arith.constant 0 : index
    %0 = vector.load %arg1[%c0, %c0_0, %c0_1] : memref<2x4x512xbf16, #tpu.memory_space<vmem>>, vector<2x4x512xbf16>
    %1 = arith.extf %0 : vector<2x4x512xbf16> to vector<2x4x512xf32>
    %cst = arith.constant dense<0.000000e+00> : vector<2x512xf32>
    %2 = vector.multi_reduction <add>, %1, %cst [1] : vector<2x4x512xf32> to vector<2x512xf32>
    %cst_2 = arith.constant 4.000000e+00 : f32
    %3 = vector.broadcast %cst_2 : f32 to vector<2x512xf32>
    %4 = arith.divf %2, %3 : vector<2x512xf32>
    %c0_3 = arith.constant 0 : index
    %c0_4 = arith.constant 0 : index
    %5 = vector.load %arg2[%c0_3, %c0_4] : memref<1x512xf32, #tpu.memory_space<vmem>>, vector<1x512xf32>
    %6 = vector.broadcast %5 : vector<1x512xf32> to vector<2x512xf32>
    %7 = arith.mulf %4, %6 : vector<2x512xf32>
    %cst_5 = arith.constant dense<0.000000e+00> : vector<2xf32>
    %8 = vector.multi_reduction <add>, %7, %cst_5 [1] : vector<2x512xf32> to vector<2xf32>
    %9 = vector.shape_cast %8 : vector<2xf32> to vector<2x1xf32>
    %c0_6 = arith.constant 0 : index
    %c0_7 = arith.constant 0 : index
    %10 = vector.load %arg3[%c0_6, %c0_7] : memref<1x1xf32, #tpu.memory_space<vmem>>, vector<1x1xf32>
    %11 = vector.broadcast %10 : vector<1x1xf32> to vector<2x1xf32>
    %12 = arith.addf %9, %11 : vector<2x1xf32>
    %13 = arith.negf %12 : vector<2x1xf32>
    %14 = math.exp %13 : vector<2x1xf32>
    %cst_8 = arith.constant 1.000000e+00 : f32
    %15 = vector.broadcast %cst_8 : f32 to vector<2x1xf32>
    %16 = arith.addf %15, %14 : vector<2x1xf32>
    %17 = arith.divf %15, %16 : vector<2x1xf32>
    %c0_9 = arith.constant 0 : index
    %c0_10 = arith.constant 0 : index
    %18 = vector.load %arg4[%c0_9, %c0_10] : memref<2x1xf32, #tpu.memory_space<vmem>>, vector<2x1xf32>
    tpu.vector_store %arg4[%c0_9, %c0_10], %17 {strides = array<i32>} : memref<2x1xf32, #tpu.memory_space<vmem>>, vector<2x1xf32>,
    return
  }
  func.func @transform_0(%arg0: i32) -> (i32, i32, i32) {
    %c0_i32 = arith.constant 0 : i32
    %c0_i32_0 = arith.constant 0 : i32
    %c0_i32_1 = arith.constant 0 : i32
    %c0_i32_2 = arith.constant 0 : i32
    return %c0_i32, %c0_i32_0, %c0_i32_1 : i32, i32, i32
  }
  func.func @transform_1(%arg0: i32) -> (i32, i32) {
    %c0_i32 = arith.constant 0 : i32
    %c0_i32_0 = arith.constant 0 : i32
    %c0_i32_1 = arith.constant 0 : i32
    return %c0_i32, %c0_i32_0 : i32, i32
  }
  func.func @transform_2(%arg0: i32) -> (i32, i32) {
    %c0_i32 = arith.constant 0 : i32
    %c0_i32_0 = arith.constant 0 : i32
    %c0_i32_1 = arith.constant 0 : i32
    return %c0_i32, %c0_i32_0 : i32, i32
  }
  func.func @transform_3(%arg0: i32) -> (i32, i32) {
    %c0_i32 = arith.constant 0 : i32
    %c0_i32_0 = arith.constant 0 : i32
    %c0_i32_1 = arith.constant 0 : i32
    return %c0_i32, %c0_i32_0 : i32, i32
  }
}

</mosaic_0001>

<llo_original>
// kernel: discriminator_forward.5
$region0: #{discriminator_forward.5}
  #allocation0 [shape = 'u32[]', space=smem, size = 0x4, offset = 0x4, fixed_abs, tag = 'smem constant byte address 0x4 - core index']
  #allocation1 [shape = 'u32[144,128]{1,0:T(1,128)}', space=vmem, size = 0x12000, scoped, tag = 'internal scratch']
  #allocation2 [shape = 'f32[256,64]{1,0:T(8,128)}', space=vmem, size = 0x20000, scoped, tag = 'scratch operand']
  %s0 = inlined_call_operand.vmem [shape: bf16[512,128], index: 0, kind: input, shape index: {}]
  %s1 = inlined_call_operand.hbm [shape: bf16[128,64], index: 1, kind: input, shape index: {}]
  %s2 = inlined_call_operand.vmem [shape: f32[1,64], index: 2, kind: input, shape index: {}]
  %s3 = inlined_call_operand.hbm [shape: f32[1,64], index: 3, kind: input, shape index: {}]
  %s4 = inlined_call_operand.vmem [shape: bf16[512,64], index: 4, kind: output, shape index: {}]
  %s5 = sld [smem:[#allocation0]]
  $region65: #{discriminator_forward.5} parent=0
    _
  %s7 = ssub.s32 1, %s5
  %s8 = scalar_select 0, %s7, %s5
  $region1: #{discriminator_forward.5} parent=0
    #allocation3 [shape = 'u8[32768]{0}', space=vmem, size = 0x8000, scoped, tag = 'input window, operand 1, single buffered']
    #allocation4 [shape = 's32[2]{0}', space=sflag, size = 0x8, scoped, tag = 'scoped memory for discriminator_forward.5']
    #allocation5 [shape = 'u8[512]{0}', space=vmem, size = 0x400, scoped, tag = 'input window, operand 3, single buffered']
    #allocation6 [shape = 's32[1]{0}', space=sflag, size = 0x4, scoped, tag = 'scoped memory for discriminator_forward.5']
    %9 = vsyncpa [#allocation4], 0
    %10 = vsyncpa [#allocation6], 0
    loop: start=0, step=1, limit=4
    $region2: #{discriminator_forward.5} parent=1 // loop_pre_header
      _
    $region3: #{discriminator_forward.5} parent=1 // loop_header
      %s12 = sphi 0, %s16
      %p13 = scmp.ge.s32.totalorder %s12, 4
      %s19 = sphi 0, %s31
      %s20 = sphi 0, %s27
      %s21 = sphi 0, %s19
      %s22 = sphi 0, %s20
      %s23 = sphi 0, %s21
      %s24 = sphi 0, %s22
      %s36 = sphi 0, %s38
      %s39 = sphi 0, %s36
      %s40 = sphi 0, %s39
      %s56 = sphi 0, %s40
      %s62 = sphi 0, %s64
      %s65 = sphi 0, %s62
      %s66 = sphi 0, %s65
      %s82 = sphi 0, %s66
      %s86 = sphi 0, %s86
      %s88 = sphi 0, %s86
      %s89 = sphi 0, %s88
      %s103 = sphi 0, %s89
      %s107 = sphi 0, %s107
      %s109 = sphi 0, %s107
      %s110 = sphi 0, %s109
      %s124 = sphi 0, %s110
      %s130 = sphi 0, %s132
      %s133 = sphi 0, %s130
      %s134 = sphi 0, %s133
      %s150 = sphi 0, %s134
    $region4: #{discriminator_forward.5} parent=1 // loop_header_branch
      %15 = sbr.rel (%p13) target = $region8
    $region5: #{discriminator_forward.5} parent=1 // loop_body
      %s17 = ssub.s32 %s12, 1
      %s18 = ssub.s32 %s12, 2
      %s25 = sadd.s32 1, %s20
      %p26 = scmp.ge.s32.totalorder %s25, 1
      %s27 = scalar_select %p26, 0, %s25
      %s28 = sadd.s32 1, %s19
      %s29 = scalar_select %p26, %s28, %s19
      %p30 = scmp.ge.s32.totalorder %s29, 2
      %s31 = scalar_select %p30, 0, %s29
      %s32 = ssub.s32 %s19, %s31
      %s33 = ssub.s32 %s20, %s27
      %s34 = sor.u32 %s32, %s33
      %p35 = scmp.eq.s32.totalorder %s34, 0
      %s37 = sadd.s32 %s36, 1
      %s38 = scalar_select %p35, %s36, %s37
      %p41 = pneg %p35
      %p42 = scmp.eq.s32.totalorder %s12, 1
      %p43 = por %p41, %p42
      %p44 = scmp.ne.s32.totalorder %s36, %s39
      %p45 = scmp.eq.s32.totalorder %s12, 0
      %p46 = por %p44, %p45
      %p47 = scmp.ne.s32.totalorder %s36, %s39
      %p48 = scmp.eq.s32.totalorder %s17, 1
      %p49 = por %p47, %p48
      %p50 = scmp.ne.s32.totalorder %s39, %s40
      %p51 = scmp.eq.s32.totalorder %s17, 0
      %p52 = por %p50, %p51
      %p53 = scmp.ne.s32.totalorder %s39, %s40
      %p54 = scmp.eq.s32.totalorder %s18, 1
      %p55 = por %p53, %p54
      %p57 = scmp.ne.s32.totalorder %s40, %s56
      %p58 = scmp.eq.s32.totalorder %s18, 0
      %p59 = por %p57, %p58
      %s60 = ssub.s32 %s20, %s27
      %p61 = scmp.eq.s32.totalorder %s60, 0
      %s63 = sadd.s32 %s62, 1
      %s64 = scalar_select %p61, %s62, %s63
      %p67 = pneg %p61
      %p68 = scmp.eq.s32.totalorder %s12, 1
      %p69 = por %p67, %p68
      %p70 = scmp.ne.s32.totalorder %s62, %s65
      %p71 = scmp.eq.s32.totalorder %s12, 0
      %p72 = por %p70, %p71
      %p73 = scmp.ne.s32.totalorder %s62, %s65
      %p74 = scmp.eq.s32.totalorder %s17, 1
      %p75 = por %p73, %p74
      %p76 = scmp.ne.s32.totalorder %s65, %s66
      %p77 = scmp.eq.s32.totalorder %s17, 0
      %p78 = por %p76, %p77
      %p79 = scmp.ne.s32.totalorder %s65, %s66
      %p80 = scmp.eq.s32.totalorder %s18, 1
      %p81 = por %p79, %p80
      %p83 = scmp.ne.s32.totalorder %s66, %s82
      %p84 = scmp.eq.s32.totalorder %s18, 0
      %p85 = por %p83, %p84
      %s87 = sadd.s32 %s86, 1
      %p90 = scmp.eq.s32.totalorder %s12, 1
      %p91 = scmp.ne.s32.totalorder %s86, %s88
      %p92 = scmp.eq.s32.totalorder %s12, 0
      %p93 = por %p91, %p92
      %p94 = scmp.ne.s32.totalorder %s86, %s88
      %p95 = scmp.eq.s32.totalorder %s17, 1
      %p96 = por %p94, %p95
      %p97 = scmp.ne.s32.totalorder %s88, %s89
      %p98 = scmp.eq.s32.totalorder %s17, 0
      %p99 = por %p97, %p98
      %p100 = scmp.ne.s32.totalorder %s88, %s89
      %p101 = scmp.eq.s32.totalorder %s18, 1
      %p102 = por %p100, %p101
      %p104 = scmp.ne.s32.totalorder %s89, %s103
      %p105 = scmp.eq.s32.totalorder %s18, 0
      %p106 = por %p104, %p105
      %s108 = sadd.s32 %s107, 1
      %p111 = scmp.eq.s32.totalorder %s12, 1
      %p112 = scmp.ne.s32.totalorder %s107, %s109
      %p113 = scmp.eq.s32.totalorder %s12, 0
      %p114 = por %p112, %p113
      %p115 = scmp.ne.s32.totalorder %s107, %s109
      %p116 = scmp.eq.s32.totalorder %s17, 1
      %p117 = por %p115, %p116
      %p118 = scmp.ne.s32.totalorder %s109, %s110
      %p119 = scmp.eq.s32.totalorder %s17, 0
      %p120 = por %p118, %p119
      %p121 = scmp.ne.s32.totalorder %s109, %s110
      %p122 = scmp.eq.s32.totalorder %s18, 1
      %p123 = por %p121, %p122
      %p125 = scmp.ne.s32.totalorder %s110, %s124
      %p126 = scmp.eq.s32.totalorder %s18, 0
      %p127 = por %p125, %p126
      %s128 = ssub.s32 %s19, %s31
      %p129 = scmp.eq.s32.totalorder %s128, 0
      %s131 = sadd.s32 %s130, 1
      %s132 = scalar_select %p129, %s130, %s131
      %p135 = pneg %p129
      %p136 = scmp.eq.s32.totalorder %s12, 1
      %p137 = por %p135, %p136
      %p138 = scmp.ne.s32.totalorder %s130, %s133
      %p139 = scmp.eq.s32.totalorder %s12, 0
      %p140 = por %p138, %p139
      %p141 = scmp.ne.s32.totalorder %s130, %s133
      %p142 = scmp.eq.s32.totalorder %s17, 1
      %p143 = por %p141, %p142
      %p144 = scmp.ne.s32.totalorder %s133, %s134
      %p145 = scmp.eq.s32.totalorder %s17, 0
      %p146 = por %p144, %p145
      %p147 = scmp.ne.s32.totalorder %s133, %s134
      %p148 = scmp.eq.s32.totalorder %s18, 1
      %p149 = por %p147, %p148
      %p151 = scmp.ne.s32.totalorder %s134, %s150
      %p152 = scmp.eq.s32.totalorder %s18, 0
      %p153 = por %p151, %p152
      %p154 = scmp.le.s32.totalorder 1, %s12
      %p155 = scmp.lt.s32.totalorder %s12, 3
      %p156 = pnand %p154, %p155
      %p157 = pneg %p156
      // Predicated region
      $region9: #{discriminator_forward.5} parent=5 // pred_check
        _
      $region10: #{discriminator_forward.5} parent=5 // pred_check_branch
        %159 = sbr.rel (%p156) target = $region12
      $region11: #{discriminator_forward.5} parent=5 // pred_region
        %s160 = ssub.s32 %s12, 1
        // Predicated region
        $region13: #{discriminator_forward.5} parent=11 // pred_check
          %p161 = pneg %p78
        $region14: #{discriminator_forward.5} parent=11 // pred_check_branch
          %163 = sbr.rel (%p161) target = $region16
        $region15: #{discriminator_forward.5} parent=11 // pred_region
          %s164 = smul.u32 16, %s22
          %s166 = ssub.s32 1024, 1024
          %167 = vsyncadd [#allocation4], %s166
          %s168 = smul.addr %s164, 64
          %s169 = scalar_lea.hbm %s1, %s168
          %s170 = sshll.u32 [#allocation3], 4
          %s171 = int_to_ptr.vmem [resolvable:$true] %s170
          %176 = dma.hbm_to_vmem [thread:$0]  %s169, 1024, %s171, [#allocation4], 64, 64, 4
        $region16: #{discriminator_forward.5} parent=11 // pred_fallthru
          _
        // Predicated region
        $region17: #{discriminator_forward.5} parent=11 // pred_check
          %p177 = pneg %p99
        $region18: #{discriminator_forward.5} parent=11 // pred_check_branch
          %179 = sbr.rel (%p177) target = $region20
        $region19: #{discriminator_forward.5} parent=11 // pred_region
          _
        $region20: #{discriminator_forward.5} parent=11 // pred_fallthru
          _
        // Predicated region
        $region21: #{discriminator_forward.5} parent=11 // pred_check
          %p180 = pneg %p120
        $region22: #{discriminator_forward.5} parent=11 // pred_check_branch
          %182 = sbr.rel (%p180) target = $region24
        $region23: #{discriminator_forward.5} parent=11 // pred_region
          %s184 = ssub.s32 16, 16
          %185 = vsyncadd [#allocation6], %s184
          %s187 = sshll.u32 [#allocation5], 4
          %s188 = int_to_ptr.vmem [resolvable:$true] %s187
          %190 = dma.hbm_to_vmem [thread:$0]  %s3, 16, %s188, [#allocation6]
        $region24: #{discriminator_forward.5} parent=11 // pred_fallthru
          _
      $region12: #{discriminator_forward.5} parent=5 // pred_fallthru
        _
      %p191 = scmp.lt.s32.totalorder %s12, 2
      // Predicated region
      $region25: #{discriminator_forward.5} parent=5 // pred_check
        %p192 = pneg %p191
      $region26: #{discriminator_forward.5} parent=5 // pred_check_branch
        %194 = sbr.rel (%p192) target = $region28
      $region27: #{discriminator_forward.5} parent=5 // pred_region
        // Predicated region
        $region29: #{discriminator_forward.5} parent=27 // pred_check
          %p195 = pneg %p46
        $region30: #{discriminator_forward.5} parent=27 // pred_check_branch
          %197 = sbr.rel (%p195) target = $region32
        $region31: #{discriminator_forward.5} parent=27 // pred_region
          %s198 = smul.u32 32, %s19
          %p199 = scmp.lt.s32.totalorder %s198, 63
          %s200 = scalar_select %p199, %s198, 63
          %p201 = scmp.lt.s32.totalorder %s20, 0
          %s202 = scalar_select %p201, %s20, 0
          %s203 = sadd.s32 %s202, %s200
          %s204 = smul.addr %s203, 4
          %s205 = scalar_lea.vmem %s0, %s204
          %s206 = smul.u32 32, %s19
        $region32: #{discriminator_forward.5} parent=27 // pred_fallthru
          _
      $region28: #{discriminator_forward.5} parent=5 // pred_fallthru
        _
      %p207 = scmp.le.s32.totalorder 1, %s12
      %p208 = scmp.lt.s32.totalorder %s12, 3
      %p209 = pnand %p207, %p208
      %p210 = pneg %p209
      // Predicated region
      $region33: #{discriminator_forward.5} parent=5 // pred_check
        _
      $region34: #{discriminator_forward.5} parent=5 // pred_check_branch
        %212 = sbr.rel (%p209) target = $region36
      $region35: #{discriminator_forward.5} parent=5 // pred_region
        %s213 = ssub.s32 %s12, 1
        // Predicated region
        $region37: #{discriminator_forward.5} parent=35 // pred_check
          %p214 = pneg %p78
        $region38: #{discriminator_forward.5} parent=35 // pred_check_branch
          %216 = sbr.rel (%p214) target = $region40
        $region39: #{discriminator_forward.5} parent=35 // pred_region
          %217 = dma.done [#allocation4], 1024
        $region40: #{discriminator_forward.5} parent=35 // pred_fallthru
          _
        // Predicated region
        $region41: #{discriminator_forward.5} parent=35 // pred_check
          %p218 = pneg %p120
        $region42: #{discriminator_forward.5} parent=35 // pred_check_branch
          %220 = sbr.rel (%p218) target = $region44
        $region43: #{discriminator_forward.5} parent=35 // pred_region
          %221 = dma.done [#allocation6], 16
        $region44: #{discriminator_forward.5} parent=35 // pred_fallthru
          _
        %s222 = smul.u32 32, %s21
        %p223 = scmp.lt.s32.totalorder %s222, 63
        %s224 = scalar_select %p223, %s222, 63
        %p225 = scmp.lt.s32.totalorder %s22, 0
        %s226 = scalar_select %p225, %s22, 0
        %s227 = sadd.s32 %s226, %s224
        %s228 = smul.addr %s227, 4
        %s229 = scalar_lea.vmem %s0, %s228
        %p230 = pneg %p52
        %p231 = pneg %p49
        %p232 = pneg %p78
        %p233 = pneg %p75
        %p234 = pneg %p99
        %p235 = pneg %p96
        %p236 = pneg %p120
        %p237 = pneg %p117
        %p238 = pneg %p146
        %p239 = pneg %p143
        %s240 = smul.u32 32, %s21
        %p241 = scmp.lt.s32.totalorder %s240, 63
        %s242 = scalar_select %p241, %s240, 63
        %s243 = smul.addr %s242, 4
        %s244 = scalar_lea.vmem %s4, %s243
        %s245 = smul.u32 32, %s21
        %p246 = scmp.lt.s32.totalorder %s245, 63
        %s247 = scalar_select %p246, %s245, 63
        %p248 = scmp.lt.s32.totalorder %s22, 0
        %s249 = scalar_select %p248, %s22, 0
        %s250 = sadd.s32 %s249, %s247
        %s251 = smul.addr %s250, 4
        %s252 = scalar_lea.vmem %s0, %s251
        %s253 = smul.u32 32, %s21
        %s254 = smul.u32 16, %s22
        %s255 = smul.u32 32, %s21
        %p256 = scmp.lt.s32.totalorder %s255, 63
        %s257 = scalar_select %p256, %s255, 63
        %s258 = smul.addr %s257, 4
        %s259 = scalar_lea.vmem %s4, %s258
        %s260 = smul.u32 32, %s21
        %p262 = scmp.eq.s32.totalorder %s22, 0
        // Predicated region
        $region45: #{discriminator_forward.5} parent=35 // pred_check
          %p263 = pneg %p262
        $region46: #{discriminator_forward.5} parent=35 // pred_check_branch
          %265 = sbr.rel (%p263) target = $region48
        $region47: #{discriminator_forward.5} parent=35 // pred_region
          %vm266 = vcmask 523264
          %267 = vst.msk [vmem:[#allocation2] sm:$0xff] %vm266, 0.0
          %268 = vst.msk [vmem:[#allocation2 + $0x8] sm:$0xff] %vm266, 0.0
          %269 = vst.msk [vmem:[#allocation2 + $0x10] sm:$0xff] %vm266, 0.0
          %270 = vst.msk [vmem:[#allocation2 + $0x18] sm:$0xff] %vm266, 0.0
          %271 = vst.msk [vmem:[#allocation2 + $0x20] sm:$0xff] %vm266, 0.0
          %272 = vst.msk [vmem:[#allocation2 + $0x28] sm:$0xff] %vm266, 0.0
          %273 = vst.msk [vmem:[#allocation2 + $0x30] sm:$0xff] %vm266, 0.0
          %274 = vst.msk [vmem:[#allocation2 + $0x38] sm:$0xff] %vm266, 0.0
          %275 = vst.msk [vmem:[#allocation2 + $0x40] sm:$0xff] %vm266, 0.0
          %276 = vst.msk [vmem:[#allocation2 + $0x48] sm:$0xff] %vm266, 0.0
          %277 = vst.msk [vmem:[#allocation2 + $0x50] sm:$0xff] %vm266, 0.0
          %278 = vst.msk [vmem:[#allocation2 + $0x58] sm:$0xff] %vm266, 0.0
          %279 = vst.msk [vmem:[#allocation2 + $0x60] sm:$0xff] %vm266, 0.0
          %280 = vst.msk [vmem:[#allocation2 + $0x68] sm:$0xff] %vm266, 0.0
          %281 = vst.msk [vmem:[#allocation2 + $0x70] sm:$0xff] %vm266, 0.0
          %282 = vst.msk [vmem:[#allocation2 + $0x78] sm:$0xff] %vm266, 0.0
          %283 = vst.msk [vmem:[#allocation2 + $0x80] sm:$0xff] %vm266, 0.0
          %284 = vst.msk [vmem:[#allocation2 + $0x88] sm:$0xff] %vm266, 0.0
          %285 = vst.msk [vmem:[#allocation2 + $0x90] sm:$0xff] %vm266, 0.0
          %286 = vst.msk [vmem:[#allocation2 + $0x98] sm:$0xff] %vm266, 0.0
          %287 = vst.msk [vmem:[#allocation2 + $0xa0] sm:$0xff] %vm266, 0.0
          %288 = vst.msk [vmem:[#allocation2 + $0xa8] sm:$0xff] %vm266, 0.0
          %289 = vst.msk [vmem:[#allocation2 + $0xb0] sm:$0xff] %vm266, 0.0
          %290 = vst.msk [vmem:[#allocation2 + $0xb8] sm:$0xff] %vm266, 0.0
          %291 = vst.msk [vmem:[#allocation2 + $0xc0] sm:$0xff] %vm266, 0.0
          %292 = vst.msk [vmem:[#allocation2 + $0xc8] sm:$0xff] %vm266, 0.0
          %293 = vst.msk [vmem:[#allocation2 + $0xd0] sm:$0xff] %vm266, 0.0
          %294 = vst.msk [vmem:[#allocation2 + $0xd8] sm:$0xff] %vm266, 0.0
          %295 = vst.msk [vmem:[#allocation2 + $0xe0] sm:$0xff] %vm266, 0.0
          %296 = vst.msk [vmem:[#allocation2 + $0xe8] sm:$0xff] %vm266, 0.0
          %297 = vst.msk [vmem:[#allocation2 + $0xf0] sm:$0xff] %vm266, 0.0
          %298 = vst.msk [vmem:[#allocation2 + $0xf8] sm:$0xff] %vm266, 0.0
        $region48: #{discriminator_forward.5} parent=35 // pred_fallthru
          _
        %v299 = vld [vmem:[#allocation2] sm:$0xff]
        %v300 = vld [vmem:[#allocation2 + $0x8] sm:$0xff]
        %v301 = vld [vmem:[#allocation2 + $0x10] sm:$0xff]
        %v302 = vld [vmem:[#allocation2 + $0x18] sm:$0xff]
        %v303 = vld [vmem:[#allocation2 + $0x20] sm:$0xff]
        %v304 = vld [vmem:[#allocation2 + $0x28] sm:$0xff]
        %v305 = vld [vmem:[#allocation2 + $0x30] sm:$0xff]
        %v306 = vld [vmem:[#allocation2 + $0x38] sm:$0xff]
        %v307 = vld [vmem:[#allocation2 + $0x40] sm:$0xff]
        %v308 = vld [vmem:[#allocation2 + $0x48] sm:$0xff]
        %v309 = vld [vmem:[#allocation2 + $0x50] sm:$0xff]
        %v310 = vld [vmem:[#allocation2 + $0x58] sm:$0xff]
        %v311 = vld [vmem:[#allocation2 + $0x60] sm:$0xff]
        %v312 = vld [vmem:[#allocation2 + $0x68] sm:$0xff]
        %v313 = vld [vmem:[#allocation2 + $0x70] sm:$0xff]
        %v314 = vld [vmem:[#allocation2 + $0x78] sm:$0xff]
        %v315 = vld [vmem:[#allocation2 + $0x80] sm:$0xff]
        %v316 = vld [vmem:[#allocation2 + $0x88] sm:$0xff]
        %v317 = vld [vmem:[#allocation2 + $0x90] sm:$0xff]
        %v318 = vld [vmem:[#allocation2 + $0x98] sm:$0xff]
        %v319 = vld [vmem:[#allocation2 + $0xa0] sm:$0xff]
        %v320 = vld [vmem:[#allocation2 + $0xa8] sm:$0xff]
        %v321 = vld [vmem:[#allocation2 + $0xb0] sm:$0xff]
        %v322 = vld [vmem:[#allocation2 + $0xb8] sm:$0xff]
        %v323 = vld [vmem:[#allocation2 + $0xc0] sm:$0xff]
        %v324 = vld [vmem:[#allocation2 + $0xc8] sm:$0xff]
        %v325 = vld [vmem:[#allocation2 + $0xd0] sm:$0xff]
        %v326 = vld [vmem:[#allocation2 + $0xd8] sm:$0xff]
        %v327 = vld [vmem:[#allocation2 + $0xe0] sm:$0xff]
        %v328 = vld [vmem:[#allocation2 + $0xe8] sm:$0xff]
        %v329 = vld [vmem:[#allocation2 + $0xf0] sm:$0xff]
        %v330 = vld [vmem:[#allocation2 + $0xf8] sm:$0xff]
        %v331 = vld [vmem:[%s252] sm:$0xf]
        %v332 = vld [vmem:[%s252 + $0x4] sm:$0xf]
        %v333 = vld [vmem:[%s252 + $0x8] sm:$0xf]
        %v334 = vld [vmem:[%s252 + $0xc] sm:$0xf]
        %v335 = vld [vmem:[%s252 + $0x10] sm:$0xf]
        %v336 = vld [vmem:[%s252 + $0x14] sm:$0xf]
        %v337 = vld [vmem:[%s252 + $0x18] sm:$0xf]
        %v338 = vld [vmem:[%s252 + $0x1c] sm:$0xf]
        %v339 = vld [vmem:[%s252 + $0x20] sm:$0xf]
        %v340 = vld [vmem:[%s252 + $0x24] sm:$0xf]
        %v341 = vld [vmem:[%s252 + $0x28] sm:$0xf]
        %v342 = vld [vmem:[%s252 + $0x2c] sm:$0xf]
        %v343 = vld [vmem:[%s252 + $0x30] sm:$0xf]
        %v344 = vld [vmem:[%s252 + $0x34] sm:$0xf]
        %v345 = vld [vmem:[%s252 + $0x38] sm:$0xf]
        %v346 = vld [vmem:[%s252 + $0x3c] sm:$0xf]
        %v347 = vld [vmem:[%s252 + $0x40] sm:$0xf]
        %v348 = vld [vmem:[%s252 + $0x44] sm:$0xf]
        %v349 = vld [vmem:[%s252 + $0x48] sm:$0xf]
        %v350 = vld [vmem:[%s252 + $0x4c] sm:$0xf]
        %v351 = vld [vmem:[%s252 + $0x50] sm:$0xf]
        %v352 = vld [vmem:[%s252 + $0x54] sm:$0xf]
        %v353 = vld [vmem:[%s252 + $0x58] sm:$0xf]
        %v354 = vld [vmem:[%s252 + $0x5c] sm:$0xf]
        %v355 = vld [vmem:[%s252 + $0x60] sm:$0xf]
        %v356 = vld [vmem:[%s252 + $0x64] sm:$0xf]
        %v357 = vld [vmem:[%s252 + $0x68] sm:$0xf]
        %v358 = vld [vmem:[%s252 + $0x6c] sm:$0xf]
        %v359 = vld [vmem:[%s252 + $0x70] sm:$0xf]
        %v360 = vld [vmem:[%s252 + $0x74] sm:$0xf]
        %v361 = vld [vmem:[%s252 + $0x78] sm:$0xf]
        %v362 = vld [vmem:[%s252 + $0x7c] sm:$0xf]
        %v363 = vld [vmem:[#allocation3] sm:$0xf]
        %v364 = vld [vmem:[#allocation3 + $0x4] sm:$0xf]
        %v365 = vld [vmem:[#allocation3 + $0x8] sm:$0xf]
        %v366 = vld [vmem:[#allocation3 + $0xc] sm:$0xf]
        %v367 = vld [vmem:[#allocation3 + $0x10] sm:$0xf]
        %v368 = vld [vmem:[#allocation3 + $0x14] sm:$0xf]
        %v369 = vld [vmem:[#allocation3 + $0x18] sm:$0xf]
        %v370 = vld [vmem:[#allocation3 + $0x1c] sm:$0xf]
        %v371 = vld [vmem:[#allocation3 + $0x20] sm:$0xf]
        %v372 = vld [vmem:[#allocation3 + $0x24] sm:$0xf]
        %v373 = vld [vmem:[#allocation3 + $0x28] sm:$0xf]
        %v374 = vld [vmem:[#allocation3 + $0x2c] sm:$0xf]
        %v375 = vld [vmem:[#allocation3 + $0x30] sm:$0xf]
        %v376 = vld [vmem:[#allocation3 + $0x34] sm:$0xf]
        %v377 = vld [vmem:[#allocation3 + $0x38] sm:$0xf]
        %v378 = vld [vmem:[#allocation3 + $0x3c] sm:$0xf]
        %v411 = vunpack.c.l.b16 %v331
        %v412 = vunpack.c.l.b16 %v332
        %v413 = vunpack.c.l.b16 %v333
        %v414 = vunpack.c.l.b16 %v334
        %v415 = vunpack.c.l.b16 %v335
        %v416 = vunpack.c.l.b16 %v336
        %v417 = vunpack.c.l.b16 %v337
        %v418 = vunpack.c.l.b16 %v338
        %v419 = vunpack.c.l.b16 %v339
        %v420 = vunpack.c.l.b16 %v340
        %v421 = vunpack.c.l.b16 %v341
        %v422 = vunpack.c.l.b16 %v342
        %v423 = vunpack.c.l.b16 %v343
        %v424 = vunpack.c.l.b16 %v344
        %v425 = vunpack.c.l.b16 %v345
        %v426 = vunpack.c.l.b16 %v346
        %v427 = vunpack.c.l.b16 %v347
        %v428 = vunpack.c.l.b16 %v348
        %v429 = vunpack.c.l.b16 %v349
        %v430 = vunpack.c.l.b16 %v350
        %v431 = vunpack.c.l.b16 %v351
        %v432 = vunpack.c.l.b16 %v352
        %v433 = vunpack.c.l.b16 %v353
        %v434 = vunpack.c.l.b16 %v354
        %v435 = vunpack.c.l.b16 %v355
        %v436 = vunpack.c.l.b16 %v356
        %v437 = vunpack.c.l.b16 %v357
        %v438 = vunpack.c.l.b16 %v358
        %v439 = vunpack.c.l.b16 %v359
        %v440 = vunpack.c.l.b16 %v360
        %v441 = vunpack.c.l.b16 %v361
        %v442 = vunpack.c.l.b16 %v362
        %v443 = vpack.c.b16 %v412, %v411
        %v444 = vpack.c.b16 %v414, %v413
        %v445 = vpack.c.b16 %v416, %v415
        %v446 = vpack.c.b16 %v418, %v417
        %v447 = vpack.c.b16 %v420, %v419
        %v448 = vpack.c.b16 %v422, %v421
        %v449 = vpack.c.b16 %v424, %v423
        %v450 = vpack.c.b16 %v426, %v425
        %v451 = vpack.c.b16 %v428, %v427
        %v452 = vpack.c.b16 %v430, %v429
        %v453 = vpack.c.b16 %v432, %v431
        %v454 = vpack.c.b16 %v434, %v433
        %v455 = vpack.c.b16 %v436, %v435
        %v456 = vpack.c.b16 %v438, %v437
        %v457 = vpack.c.b16 %v440, %v439
        %v458 = vpack.c.b16 %v442, %v441
        %v491 = vunpack.c.l.b16 %v363
        %v492 = vunpack.c.l.b16 %v364
        %v493 = vunpack.c.l.b16 %v365
        %v494 = vunpack.c.l.b16 %v366
        %v495 = vunpack.c.l.b16 %v367
        %v496 = vunpack.c.l.b16 %v368
        %v497 = vunpack.c.l.b16 %v369
        %v498 = vunpack.c.l.b16 %v370
        %v499 = vunpack.c.l.b16 %v371
        %v500 = vunpack.c.l.b16 %v372
        %v501 = vunpack.c.l.b16 %v373
        %v502 = vunpack.c.l.b16 %v374
        %v503 = vunpack.c.l.b16 %v375
        %v504 = vunpack.c.l.b16 %v376
        %v505 = vunpack.c.l.b16 %v377
        %v506 = vunpack.c.l.b16 %v378
        %v507 = vpack.c.b16 %v492, %v491
        %v508 = vpack.c.b16 %v494, %v493
        %v509 = vpack.c.b16 %v496, %v495
        %v510 = vpack.c.b16 %v498, %v497
        %v511 = vpack.c.b16 %v500, %v499
        %v512 = vpack.c.b16 %v502, %v501
        %v513 = vpack.c.b16 %v504, %v503
        %v514 = vpack.c.b16 %v506, %v505
        %523 = vmatprep.subr.bf16.mxu0 0
        %524 = vmatpush1.bf16.msra.mxu0 %v507
        %525 = vmatprep.subr.bf16.mxu0 0
        %526 = vmatpush1.bf16.msra.mxu0 %v508
        %527 = vmatprep.subr.bf16.mxu0 0
        %528 = vmatpush1.bf16.msra.mxu0 %v509
        %529 = vmatprep.subr.bf16.mxu0 0
        %530 = vmatpush1.bf16.msra.mxu0 %v510
        %531 = vmatprep.subr.bf16.mxu0 0
        %532 = vmatpush1.bf16.msra.mxu0 %v511
        %533 = vmatprep.subr.bf16.mxu0 0
        %534 = vmatpush1.bf16.msra.mxu0 %v512
        %535 = vmatprep.subr.bf16.mxu0 0
        %536 = vmatpush1.bf16.msra.mxu0 %v513
        %537 = vmatprep.subr.bf16.mxu0 0
        %538 = vmatpush1.bf16.msra.mxu0 %v514
        %539 = vmatprep.subr.bf16.mxu0 0
        %540 = vmatpush1.bf16.msra.mxu0 0
        %541 = vmatprep.subr.bf16.mxu0 0
        %542 = vmatpush1.bf16.msra.mxu0 0
        %543 = vmatprep.subr.bf16.mxu0 0
        %544 = vmatpush1.bf16.msra.mxu0 0
        %545 = vmatprep.subr.bf16.mxu0 0
        %546 = vmatpush1.bf16.msra.mxu0 0
        %547 = vmatprep.subr.bf16.mxu0 0
        %548 = vmatpush1.bf16.msra.mxu0 0
        %549 = vmatprep.subr.bf16.mxu0 0
        %550 = vmatpush1.bf16.msra.mxu0 0
        %551 = vmatprep.subr.bf16.mxu0 0
        %552 = vmatpush1.bf16.msra.mxu0 0
        %553 = vmatprep.subr.bf16.mxu0 0
        %554 = vmatpush1.bf16.msra.mxu0 0
        %555 = vmatprep.mubr.bf16.mxu0 0
        %556 = vmatmul.mubr.bf16.gmra.mrb[0].mxu0 %v443
        %v557 = vpop.f32.mrb[0].mxu0
        %v558 = vadd.f32 0.0, %v557
        %v559 = vpop.f32.mrb[0].mxu0
        %v560 = vpop.f32.mrb[0].mxu0
        %v561 = vadd.f32 0.0, %v560
        %v562 = vpop.f32.mrb[0].mxu0
        %563 = vmatprep.mubr.bf16.mxu0 0
        %564 = vmatmul.mubr.bf16.gmra.mrb[0].mxu0 %v444
        %v565 = vpop.f32.mrb[0].mxu0
        %v566 = vadd.f32 0.0, %v565
        %v567 = vpop.f32.mrb[0].mxu0
        %v568 = vpop.f32.mrb[0].mxu0
        %v569 = vadd.f32 0.0, %v568
        %v570 = vpop.f32.mrb[0].mxu0
        %571 = vmatprep.mubr.bf16.mxu0 0
        %572 = vmatmul.mubr.bf16.gmra.mrb[0].mxu0 %v445
        %v573 = vpop.f32.mrb[0].mxu0
        %v574 = vadd.f32 0.0, %v573
        %v575 = vpop.f32.mrb[0].mxu0
        %v576 = vpop.f32.mrb[0].mxu0
        %v577 = vadd.f32 0.0, %v576
        %v578 = vpop.f32.mrb[0].mxu0
        %579 = vmatprep.mubr.bf16.mxu0 0
        %580 = vmatmul.mubr.bf16.gmra.mrb[0].mxu0 %v446
        %v581 = vpop.f32.mrb[0].mxu0
        %v582 = vadd.f32 0.0, %v581
        %v583 = vpop.f32.mrb[0].mxu0
        %v584 = vpop.f32.mrb[0].mxu0
        %v585 = vadd.f32 0.0, %v584
        %v586 = vpop.f32.mrb[0].mxu0
        %587 = vmatprep.mubr.bf16.mxu0 0
        %588 = vmatmul.mubr.bf16.gmra.mrb[0].mxu0 %v447
        %v589 = vpop.f32.mrb[0].mxu0
        %v590 = vadd.f32 0.0, %v589
        %v591 = vpop.f32.mrb[0].mxu0
        %v592 = vpop.f32.mrb[0].mxu0
        %v593 = vadd.f32 0.0, %v592
        %v594 = vpop.f32.mrb[0].mxu0
        %595 = vmatprep.mubr.bf16.mxu0 0
        %596 = vmatmul.mubr.bf16.gmra.mrb[0].mxu0 %v448
        %v597 = vpop.f32.mrb[0].mxu0
        %v598 = vadd.f32 0.0, %v597
        %v599 = vpop.f32.mrb[0].mxu0
        %v600 = vpop.f32.mrb[0].mxu0
        %v601 = vadd.f32 0.0, %v600
        %v602 = vpop.f32.mrb[0].mxu0
        %603 = vmatprep.mubr.bf16.mxu0 0
        %604 = vmatmul.mubr.bf16.gmra.mrb[0].mxu0 %v449
        %v605 = vpop.f32.mrb[0].mxu0
        %v606 = vadd.f32 0.0, %v605
        %v607 = vpop.f32.mrb[0].mxu0
        %v608 = vpop.f32.mrb[0].mxu0
        %v609 = vadd.f32 0.0, %v608
        %v610 = vpop.f32.mrb[0].mxu0
        %611 = vmatprep.mubr.bf16.mxu0 0
        %612 = vmatmul.mubr.bf16.gmra.mrb[0].mxu0 %v450
        %v613 = vpop.f32.mrb[0].mxu0
        %v614 = vadd.f32 0.0, %v613
        %v615 = vpop.f32.mrb[0].mxu0
        %v616 = vpop.f32.mrb[0].mxu0
        %v617 = vadd.f32 0.0, %v616
        %v618 = vpop.f32.mrb[0].mxu0
        %619 = vmatprep.mubr.bf16.mxu0 0
        %620 = vmatmul.mubr.bf16.gmra.mrb[0].mxu0 %v451
        %v621 = vpop.f32.mrb[0].mxu0
        %v622 = vadd.f32 0.0, %v621
        %v623 = vpop.f32.mrb[0].mxu0
        %v624 = vpop.f32.mrb[0].mxu0
        %v625 = vadd.f32 0.0, %v624
        %v626 = vpop.f32.mrb[0].mxu0
        %627 = vmatprep.mubr.bf16.mxu0 0
        %628 = vmatmul.mubr.bf16.gmra.mrb[0].mxu0 %v452
        %v629 = vpop.f32.mrb[0].mxu0
        %v630 = vadd.f32 0.0, %v629
        %v631 = vpop.f32.mrb[0].mxu0
        %v632 = vpop.f32.mrb[0].mxu0
        %v633 = vadd.f32 0.0, %v632
        %v634 = vpop.f32.mrb[0].mxu0
        %635 = vmatprep.mubr.bf16.mxu0 0
        %636 = vmatmul.mubr.bf16.gmra.mrb[0].mxu0 %v453
        %v637 = vpop.f32.mrb[0].mxu0
        %v638 = vadd.f32 0.0, %v637
        %v639 = vpop.f32.mrb[0].mxu0
        %v640 = vpop.f32.mrb[0].mxu0
        %v641 = vadd.f32 0.0, %v640
        %v642 = vpop.f32.mrb[0].mxu0
        %643 = vmatprep.mubr.bf16.mxu0 0
        %644 = vmatmul.mubr.bf16.gmra.mrb[0].mxu0 %v454
        %v645 = vpop.f32.mrb[0].mxu0
        %v646 = vadd.f32 0.0, %v645
        %v647 = vpop.f32.mrb[0].mxu0
        %v648 = vpop.f32.mrb[0].mxu0
        %v649 = vadd.f32 0.0, %v648
        %v650 = vpop.f32.mrb[0].mxu0
        %651 = vmatprep.mubr.bf16.mxu0 0
        %652 = vmatmul.mubr.bf16.gmra.mrb[0].mxu0 %v455
        %v653 = vpop.f32.mrb[0].mxu0
        %v654 = vadd.f32 0.0, %v653
        %v655 = vpop.f32.mrb[0].mxu0
        %v656 = vpop.f32.mrb[0].mxu0
        %v657 = vadd.f32 0.0, %v656
        %v658 = vpop.f32.mrb[0].mxu0
        %659 = vmatprep.mubr.bf16.mxu0 0
        %660 = vmatmul.mubr.bf16.gmra.mrb[0].mxu0 %v456
        %v661 = vpop.f32.mrb[0].mxu0
        %v662 = vadd.f32 0.0, %v661
        %v663 = vpop.f32.mrb[0].mxu0
        %v664 = vpop.f32.mrb[0].mxu0
        %v665 = vadd.f32 0.0, %v664
        %v666 = vpop.f32.mrb[0].mxu0
        %667 = vmatprep.mubr.bf16.mxu0 0
        %668 = vmatmul.mubr.bf16.gmra.mrb[0].mxu0 %v457
        %v669 = vpop.f32.mrb[0].mxu0
        %v670 = vadd.f32 0.0, %v669
        %v671 = vpop.f32.mrb[0].mxu0
        %v672 = vpop.f32.mrb[0].mxu0
        %v673 = vadd.f32 0.0, %v672
        %v674 = vpop.f32.mrb[0].mxu0
        %675 = vmatprep.mubr.bf16.mxu0 0
        %676 = vmatmul.mubr.bf16.gmra.mrb[0].mxu0 %v458
        %v677 = vpop.f32.mrb[0].mxu0
        %v678 = vadd.f32 0.0, %v677
        %v679 = vpop.f32.mrb[0].mxu0
        %v680 = vpop.f32.mrb[0].mxu0
        %v681 = vadd.f32 0.0, %v680
        %v682 = vpop.f32.mrb[0].mxu0
        %683 = vdwg.mxu0
        %v684 = vadd.f32 %v299, %v558
        %v685 = vadd.f32 %v300, %v561
        %v686 = vadd.f32 %v301, %v566
        %v687 = vadd.f32 %v302, %v569
        %v688 = vadd.f32 %v303, %v574
        %v689 = vadd.f32 %v304, %v577
        %v690 = vadd.f32 %v305, %v582
        %v691 = vadd.f32 %v306, %v585
        %v692 = vadd.f32 %v307, %v590
        %v693 = vadd.f32 %v308, %v593
        %v694 = vadd.f32 %v309, %v598
        %v695 = vadd.f32 %v310, %v601
        %v696 = vadd.f32 %v311, %v606
        %v697 = vadd.f32 %v312, %v609
        %v698 = vadd.f32 %v313, %v614
        %v699 = vadd.f32 %v314, %v617
        %v700 = vadd.f32 %v315, %v622
        %v701 = vadd.f32 %v316, %v625
        %v702 = vadd.f32 %v317, %v630
        %v703 = vadd.f32 %v318, %v633
        %v704 = vadd.f32 %v319, %v638
        %v705 = vadd.f32 %v320, %v641
        %v706 = vadd.f32 %v321, %v646
        %v707 = vadd.f32 %v322, %v649
        %v708 = vadd.f32 %v323, %v654
        %v709 = vadd.f32 %v324, %v657
        %v710 = vadd.f32 %v325, %v662
        %v711 = vadd.f32 %v326, %v665
        %v712 = vadd.f32 %v327, %v670
        %v713 = vadd.f32 %v328, %v673
        %v714 = vadd.f32 %v329, %v678
        %v715 = vadd.f32 %v330, %v681
        %vm716 = vcmask 523264
        %717 = vst.msk [vmem:[#allocation2] sm:$0xff] %vm716, %v684
        %718 = vst.msk [vmem:[#allocation2 + $0x8] sm:$0xff] %vm716, %v685
        %719 = vst.msk [vmem:[#allocation2 + $0x10] sm:$0xff] %vm716, %v686
        %720 = vst.msk [vmem:[#allocation2 + $0x18] sm:$0xff] %vm716, %v687
        %721 = vst.msk [vmem:[#allocation2 + $0x20] sm:$0xff] %vm716, %v688
        %722 = vst.msk [vmem:[#allocation2 + $0x28] sm:$0xff] %vm716, %v689
        %723 = vst.msk [vmem:[#allocation2 + $0x30] sm:$0xff] %vm716, %v690
        %724 = vst.msk [vmem:[#allocation2 + $0x38] sm:$0xff] %vm716, %v691
        %725 = vst.msk [vmem:[#allocation2 + $0x40] sm:$0xff] %vm716, %v692
        %726 = vst.msk [vmem:[#allocation2 + $0x48] sm:$0xff] %vm716, %v693
        %727 = vst.msk [vmem:[#allocation2 + $0x50] sm:$0xff] %vm716, %v694
        %728 = vst.msk [vmem:[#allocation2 + $0x58] sm:$0xff] %vm716, %v695
        %729 = vst.msk [vmem:[#allocation2 + $0x60] sm:$0xff] %vm716, %v696
        %730 = vst.msk [vmem:[#allocation2 + $0x68] sm:$0xff] %vm716, %v697
        %731 = vst.msk [vmem:[#allocation2 + $0x70] sm:$0xff] %vm716, %v698
        %732 = vst.msk [vmem:[#allocation2 + $0x78] sm:$0xff] %vm716, %v699
        %733 = vst.msk [vmem:[#allocation2 + $0x80] sm:$0xff] %vm716, %v700
        %734 = vst.msk [vmem:[#allocation2 + $0x88] sm:$0xff] %vm716, %v701
        %735 = vst.msk [vmem:[#allocation2 + $0x90] sm:$0xff] %vm716, %v702
        %736 = vst.msk [vmem:[#allocation2 + $0x98] sm:$0xff] %vm716, %v703
        %737 = vst.msk [vmem:[#allocation2 + $0xa0] sm:$0xff] %vm716, %v704
        %738 = vst.msk [vmem:[#allocation2 + $0xa8] sm:$0xff] %vm716, %v705
        %739 = vst.msk [vmem:[#allocation2 + $0xb0] sm:$0xff] %vm716, %v706
        %740 = vst.msk [vmem:[#allocation2 + $0xb8] sm:$0xff] %vm716, %v707
        %741 = vst.msk [vmem:[#allocation2 + $0xc0] sm:$0xff] %vm716, %v708
        %742 = vst.msk [vmem:[#allocation2 + $0xc8] sm:$0xff] %vm716, %v709
        %743 = vst.msk [vmem:[#allocation2 + $0xd0] sm:$0xff] %vm716, %v710
        %744 = vst.msk [vmem:[#allocation2 + $0xd8] sm:$0xff] %vm716, %v711
        %745 = vst.msk [vmem:[#allocation2 + $0xe0] sm:$0xff] %vm716, %v712
        %746 = vst.msk [vmem:[#allocation2 + $0xe8] sm:$0xff] %vm716, %v713
        %747 = vst.msk [vmem:[#allocation2 + $0xf0] sm:$0xff] %vm716, %v714
        %748 = vst.msk [vmem:[#allocation2 + $0xf8] sm:$0xff] %vm716, %v715
        // Predicated region
        $region49: #{discriminator_forward.5} parent=35 // pred_check
          %p749 = pneg %p262
        $region50: #{discriminator_forward.5} parent=35 // pred_check_branch
          %751 = sbr.rel (%p749) target = $region52
        $region51: #{discriminator_forward.5} parent=35 // pred_region
          %v752 = vld [vmem:[#allocation2] sm:$0xff]
          %v753 = vld [vmem:[#allocation2 + $0x8] sm:$0xff]
          %v754 = vld [vmem:[#allocation2 + $0x10] sm:$0xff]
          %v755 = vld [vmem:[#allocation2 + $0x18] sm:$0xff]
          %v756 = vld [vmem:[#allocation2 + $0x20] sm:$0xff]
          %v757 = vld [vmem:[#allocation2 + $0x28] sm:$0xff]
          %v758 = vld [vmem:[#allocation2 + $0x30] sm:$0xff]
          %v759 = vld [vmem:[#allocation2 + $0x38] sm:$0xff]
          %v760 = vld [vmem:[#allocation2 + $0x40] sm:$0xff]
          %v761 = vld [vmem:[#allocation2 + $0x48] sm:$0xff]
          %v762 = vld [vmem:[#allocation2 + $0x50] sm:$0xff]
          %v763 = vld [vmem:[#allocation2 + $0x58] sm:$0xff]
          %v764 = vld [vmem:[#allocation2 + $0x60] sm:$0xff]
          %v765 = vld [vmem:[#allocation2 + $0x68] sm:$0xff]
          %v766 = vld [vmem:[#allocation2 + $0x70] sm:$0xff]
          %v767 = vld [vmem:[#allocation2 + $0x78] sm:$0xff]
          %v768 = vld [vmem:[#allocation2 + $0x80] sm:$0xff]
          %v769 = vld [vmem:[#allocation2 + $0x88] sm:$0xff]
          %v770 = vld [vmem:[#allocation2 + $0x90] sm:$0xff]
          %v771 = vld [vmem:[#allocation2 + $0x98] sm:$0xff]
          %v772 = vld [vmem:[#allocation2 + $0xa0] sm:$0xff]
          %v773 = vld [vmem:[#allocation2 + $0xa8] sm:$0xff]
          %v774 = vld [vmem:[#allocation2 + $0xb0] sm:$0xff]
          %v775 = vld [vmem:[#allocation2 + $0xb8] sm:$0xff]
          %v776 = vld [vmem:[#allocation2 + $0xc0] sm:$0xff]
          %v777 = vld [vmem:[#allocation2 + $0xc8] sm:$0xff]
          %v778 = vld [vmem:[#allocation2 + $0xd0] sm:$0xff]
          %v779 = vld [vmem:[#allocation2 + $0xd8] sm:$0xff]
          %v780 = vld [vmem:[#allocation2 + $0xe0] sm:$0xff]
          %v781 = vld [vmem:[#allocation2 + $0xe8] sm:$0xff]
          %v782 = vld [vmem:[#allocation2 + $0xf0] sm:$0xff]
          %v783 = vld [vmem:[#allocation2 + $0xf8] sm:$0xff]
          %v784 = vld [vmem:[%s2] sm:$0x1]
          %v786 = vlaneseq
          %v787 = vshrl.u32 %v786, 7
          %v788 = vsub.s32 0, %v787
          %v789 = vrot.slane %v784, %v788
          %v791 = vmul.f32 %v752, %v789
          %v792 = vmul.f32 %v753, %v789
          %v793 = vmul.f32 %v754, %v789
          %v794 = vmul.f32 %v755, %v789
          %v795 = vmul.f32 %v756, %v789
          %v796 = vmul.f32 %v757, %v789
          %v797 = vmul.f32 %v758, %v789
          %v798 = vmul.f32 %v759, %v789
          %v799 = vmul.f32 %v760, %v789
          %v800 = vmul.f32 %v761, %v789
          %v801 = vmul.f32 %v762, %v789
          %v802 = vmul.f32 %v763, %v789
          %v803 = vmul.f32 %v764, %v789
          %v804 = vmul.f32 %v765, %v789
          %v805 = vmul.f32 %v766, %v789
          %v806 = vmul.f32 %v767, %v789
          %v807 = vmul.f32 %v768, %v789
          %v808 = vmul.f32 %v769, %v789
          %v809 = vmul.f32 %v770, %v789
          %v810 = vmul.f32 %v771, %v789
          %v811 = vmul.f32 %v772, %v789
          %v812 = vmul.f32 %v773, %v789
          %v813 = vmul.f32 %v774, %v789
          %v814 = vmul.f32 %v775, %v789
          %v815 = vmul.f32 %v776, %v789
          %v816 = vmul.f32 %v777, %v789
          %v817 = vmul.f32 %v778, %v789
          %v818 = vmul.f32 %v779, %v789
          %v819 = vmul.f32 %v780, %v789
          %v820 = vmul.f32 %v781, %v789
          %v821 = vmul.f32 %v782, %v789
          %v822 = vmul.f32 %v783, %v789
          %v823 = vld [vmem:[#allocation5] sm:$0x1]
          %v825 = vlaneseq
          %v826 = vshrl.u32 %v825, 7
          %v827 = vsub.s32 0, %v826
          %v828 = vrot.slane %v823, %v827
          %v830 = vadd.f32 %v791, %v828
          %v831 = vadd.f32 %v792, %v828
          %v832 = vadd.f32 %v793, %v828
          %v833 = vadd.f32 %v794, %v828
          %v834 = vadd.f32 %v795, %v828
          %v835 = vadd.f32 %v796, %v828
          %v836 = vadd.f32 %v797, %v828
          %v837 = vadd.f32 %v798, %v828
          %v838 = vadd.f32 %v799, %v828
          %v839 = vadd.f32 %v800, %v828
          %v840 = vadd.f32 %v801, %v828
          %v841 = vadd.f32 %v802, %v828
          %v842 = vadd.f32 %v803, %v828
          %v843 = vadd.f32 %v804, %v828
          %v844 = vadd.f32 %v805, %v828
          %v845 = vadd.f32 %v806, %v828
          %v846 = vadd.f32 %v807, %v828
          %v847 = vadd.f32 %v808, %v828
          %v848 = vadd.f32 %v809, %v828
          %v849 = vadd.f32 %v810, %v828
          %v850 = vadd.f32 %v811, %v828
          %v851 = vadd.f32 %v812, %v828
          %v852 = vadd.f32 %v813, %v828
          %v853 = vadd.f32 %v814, %v828
          %v854 = vadd.f32 %v815, %v828
          %v855 = vadd.f32 %v816, %v828
          %v856 = vadd.f32 %v817, %v828
          %v857 = vadd.f32 %v818, %v828
          %v858 = vadd.f32 %v819, %v828
          %v859 = vadd.f32 %v820, %v828
          %v860 = vadd.f32 %v821, %v828
          %v861 = vadd.f32 %v822, %v828
          %vm862 = vcmp.gt.f32.partialorder %v830, 0.0
          %vm863 = vcmp.gt.f32.partialorder %v831, 0.0
          %vm864 = vcmp.gt.f32.partialorder %v832, 0.0
          %vm865 = vcmp.gt.f32.partialorder %v833, 0.0
          %vm866 = vcmp.gt.f32.partialorder %v834, 0.0
          %vm867 = vcmp.gt.f32.partialorder %v835, 0.0
          %vm868 = vcmp.gt.f32.partialorder %v836, 0.0
          %vm869 = vcmp.gt.f32.partialorder %v837, 0.0
          %vm870 = vcmp.gt.f32.partialorder %v838, 0.0
          %vm871 = vcmp.gt.f32.partialorder %v839, 0.0
          %vm872 = vcmp.gt.f32.partialorder %v840, 0.0
          %vm873 = vcmp.gt.f32.partialorder %v841, 0.0
          %vm874 = vcmp.gt.f32.partialorder %v842, 0.0
          %vm875 = vcmp.gt.f32.partialorder %v843, 0.0
          %vm876 = vcmp.gt.f32.partialorder %v844, 0.0
          %vm877 = vcmp.gt.f32.partialorder %v845, 0.0
          %vm878 = vcmp.gt.f32.partialorder %v846, 0.0
          %vm879 = vcmp.gt.f32.partialorder %v847, 0.0
          %vm880 = vcmp.gt.f32.partialorder %v848, 0.0
          %vm881 = vcmp.gt.f32.partialorder %v849, 0.0
          %vm882 = vcmp.gt.f32.partialorder %v850, 0.0
          %vm883 = vcmp.gt.f32.partialorder %v851, 0.0
          %vm884 = vcmp.gt.f32.partialorder %v852, 0.0
          %vm885 = vcmp.gt.f32.partialorder %v853, 0.0
          %vm886 = vcmp.gt.f32.partialorder %v854, 0.0
          %vm887 = vcmp.gt.f32.partialorder %v855, 0.0
          %vm888 = vcmp.gt.f32.partialorder %v856, 0.0
          %vm889 = vcmp.gt.f32.partialorder %v857, 0.0
          %vm890 = vcmp.gt.f32.partialorder %v858, 0.0
          %vm891 = vcmp.gt.f32.partialorder %v859, 0.0
          %vm892 = vcmp.gt.f32.partialorder %v860, 0.0
          %vm893 = vcmp.gt.f32.partialorder %v861, 0.0
          %v894 = vmul.f32 %v830, 0.2
          %v895 = vmul.f32 %v831, 0.2
          %v896 = vmul.f32 %v832, 0.2
          %v897 = vmul.f32 %v833, 0.2
          %v898 = vmul.f32 %v834, 0.2
          %v899 = vmul.f32 %v835, 0.2
          %v900 = vmul.f32 %v836, 0.2
          %v901 = vmul.f32 %v837, 0.2
          %v902 = vmul.f32 %v838, 0.2
          %v903 = vmul.f32 %v839, 0.2
          %v904 = vmul.f32 %v840, 0.2
          %v905 = vmul.f32 %v841, 0.2
          %v906 = vmul.f32 %v842, 0.2
          %v907 = vmul.f32 %v843, 0.2
          %v908 = vmul.f32 %v844, 0.2
          %v909 = vmul.f32 %v845, 0.2
          %v910 = vmul.f32 %v846, 0.2
          %v911 = vmul.f32 %v847, 0.2
          %v912 = vmul.f32 %v848, 0.2
          %v913 = vmul.f32 %v849, 0.2
          %v914 = vmul.f32 %v850, 0.2
          %v915 = vmul.f32 %v851, 0.2
          %v916 = vmul.f32 %v852, 0.2
          %v917 = vmul.f32 %v853, 0.2
          %v918 = vmul.f32 %v854, 0.2
          %v919 = vmul.f32 %v855, 0.2
          %v920 = vmul.f32 %v856, 0.2
          %v921 = vmul.f32 %v857, 0.2
          %v922 = vmul.f32 %v858, 0.2
          %v923 = vmul.f32 %v859, 0.2
          %v924 = vmul.f32 %v860, 0.2
          %v925 = vmul.f32 %v861, 0.2
          %v926 = vsel %vm862, %v830, %v894
          %v927 = vsel %vm863, %v831, %v895
          %v928 = vsel %vm864, %v832, %v896
          %v929 = vsel %vm865, %v833, %v897
          %v930 = vsel %vm866, %v834, %v898
          %v931 = vsel %vm867, %v835, %v899
          %v932 = vsel %vm868, %v836, %v900
          %v933 = vsel %vm869, %v837, %v901
          %v934 = vsel %vm870, %v838, %v902
          %v935 = vsel %vm871, %v839, %v903
          %v936 = vsel %vm872, %v840, %v904
          %v937 = vsel %vm873, %v841, %v905
          %v938 = vsel %vm874, %v842, %v906
          %v939 = vsel %vm875, %v843, %v907
          %v940 = vsel %vm876, %v844, %v908
          %v941 = vsel %vm877, %v845, %v909
          %v942 = vsel %vm878, %v846, %v910
          %v943 = vsel %vm879, %v847, %v911
          %v944 = vsel %vm880, %v848, %v912
          %v945 = vsel %vm881, %v849, %v913
          %v946 = vsel %vm882, %v850, %v914
          %v947 = vsel %vm883, %v851, %v915
          %v948 = vsel %vm884, %v852, %v916
          %v949 = vsel %vm885, %v853, %v917
          %v950 = vsel %vm886, %v854, %v918
          %v951 = vsel %vm887, %v855, %v919
          %v952 = vsel %vm888, %v856, %v920
          %v953 = vsel %vm889, %v857, %v921
          %v954 = vsel %vm890, %v858, %v922
          %v955 = vsel %vm891, %v859, %v923
          %v956 = vsel %vm892, %v860, %v924
          %v957 = vsel %vm893, %v861, %v925
          %v958 = vpack.c.bf16 %v927, %v926
          %v959 = vpack.c.bf16 %v929, %v928
          %v960 = vpack.c.bf16 %v931, %v930
          %v961 = vpack.c.bf16 %v933, %v932
          %v962 = vpack.c.bf16 %v935, %v934
          %v963 = vpack.c.bf16 %v937, %v936
          %v964 = vpack.c.bf16 %v939, %v938
          %v965 = vpack.c.bf16 %v941, %v940
          %v966 = vpack.c.bf16 %v943, %v942
          %v967 = vpack.c.bf16 %v945, %v944
          %v968 = vpack.c.bf16 %v947, %v946
          %v969 = vpack.c.bf16 %v949, %v948
          %v970 = vpack.c.bf16 %v951, %v950
          %v971 = vpack.c.bf16 %v953, %v952
          %v972 = vpack.c.bf16 %v955, %v954
          %v973 = vpack.c.bf16 %v957, %v956
          %v990 = vunpack.c.l.b16 %v958
          %v991 = vunpack.c.h.b16 %v958
          %v992 = vunpack.c.l.b16 %v959
          %v993 = vunpack.c.h.b16 %v959
          %v994 = vunpack.c.l.b16 %v960
          %v995 = vunpack.c.h.b16 %v960
          %v996 = vunpack.c.l.b16 %v961
          %v997 = vunpack.c.h.b16 %v961
          %v998 = vunpack.c.l.b16 %v962
          %v999 = vunpack.c.h.b16 %v962
          %v1000 = vunpack.c.l.b16 %v963
          %v1001 = vunpack.c.h.b16 %v963
          %v1002 = vunpack.c.l.b16 %v964
          %v1003 = vunpack.c.h.b16 %v964
          %v1004 = vunpack.c.l.b16 %v965
          %v1005 = vunpack.c.h.b16 %v965
          %v1006 = vunpack.c.l.b16 %v966
          %v1007 = vunpack.c.h.b16 %v966
          %v1008 = vunpack.c.l.b16 %v967
          %v1009 = vunpack.c.h.b16 %v967
          %v1010 = vunpack.c.l.b16 %v968
          %v1011 = vunpack.c.h.b16 %v968
          %v1012 = vunpack.c.l.b16 %v969
          %v1013 = vunpack.c.h.b16 %v969
          %v1014 = vunpack.c.l.b16 %v970
          %v1015 = vunpack.c.h.b16 %v970
          %v1016 = vunpack.c.l.b16 %v971
          %v1017 = vunpack.c.h.b16 %v971
          %v1018 = vunpack.c.l.b16 %v972
          %v1019 = vunpack.c.h.b16 %v972
          %v1020 = vunpack.c.l.b16 %v973
          %v1021 = vunpack.c.h.b16 %v973
          %v1022 = vpack.c.b16 %v990, %v990
          %v1023 = vpack.c.b16 %v991, %v991
          %v1024 = vpack.c.b16 %v992, %v992
          %v1025 = vpack.c.b16 %v993, %v993
          %v1026 = vpack.c.b16 %v994, %v994
          %v1027 = vpack.c.b16 %v995, %v995
          %v1028 = vpack.c.b16 %v996, %v996
          %v1029 = vpack.c.b16 %v997, %v997
          %v1030 = vpack.c.b16 %v998, %v998
          %v1031 = vpack.c.b16 %v999, %v999
          %v1032 = vpack.c.b16 %v1000, %v1000
          %v1033 = vpack.c.b16 %v1001, %v1001
          %v1034 = vpack.c.b16 %v1002, %v1002
          %v1035 = vpack.c.b16 %v1003, %v1003
          %v1036 = vpack.c.b16 %v1004, %v1004
          %v1037 = vpack.c.b16 %v1005, %v1005
          %v1038 = vpack.c.b16 %v1006, %v1006
          %v1039 = vpack.c.b16 %v1007, %v1007
          %v1040 = vpack.c.b16 %v1008, %v1008
          %v1041 = vpack.c.b16 %v1009, %v1009
          %v1042 = vpack.c.b16 %v1010, %v1010
          %v1043 = vpack.c.b16 %v1011, %v1011
          %v1044 = vpack.c.b16 %v1012, %v1012
          %v1045 = vpack.c.b16 %v1013, %v1013
          %v1046 = vpack.c.b16 %v1014, %v1014
          %v1047 = vpack.c.b16 %v1015, %v1015
          %v1048 = vpack.c.b16 %v1016, %v1016
          %v1049 = vpack.c.b16 %v1017, %v1017
          %v1050 = vpack.c.b16 %v1018, %v1018
          %v1051 = vpack.c.b16 %v1019, %v1019
          %v1052 = vpack.c.b16 %v1020, %v1020
          %v1053 = vpack.c.b16 %v1021, %v1021
          %vm1086 = vcmask 519168
          %1087 = vst.msk [vmem:[%s259] sm:$0xf] %vm1086, %v1022
          %1088 = vst.msk [vmem:[%s259 + $0x4] sm:$0xf] %vm1086, %v1023
          %1089 = vst.msk [vmem:[%s259 + $0x8] sm:$0xf] %vm1086, %v1024
          %1090 = vst.msk [vmem:[%s259 + $0xc] sm:$0xf] %vm1086, %v1025
          %1091 = vst.msk [vmem:[%s259 + $0x10] sm:$0xf] %vm1086, %v1026
          %1092 = vst.msk [vmem:[%s259 + $0x14] sm:$0xf] %vm1086, %v1027
          %1093 = vst.msk [vmem:[%s259 + $0x18] sm:$0xf] %vm1086, %v1028
          %1094 = vst.msk [vmem:[%s259 + $0x1c] sm:$0xf] %vm1086, %v1029
          %1095 = vst.msk [vmem:[%s259 + $0x20] sm:$0xf] %vm1086, %v1030
          %1096 = vst.msk [vmem:[%s259 + $0x24] sm:$0xf] %vm1086, %v1031
          %1097 = vst.msk [vmem:[%s259 + $0x28] sm:$0xf] %vm1086, %v1032
          %1098 = vst.msk [vmem:[%s259 + $0x2c] sm:$0xf] %vm1086, %v1033
          %1099 = vst.msk [vmem:[%s259 + $0x30] sm:$0xf] %vm1086, %v1034
          %1100 = vst.msk [vmem:[%s259 + $0x34] sm:$0xf] %vm1086, %v1035
          %1101 = vst.msk [vmem:[%s259 + $0x38] sm:$0xf] %vm1086, %v1036
          %1102 = vst.msk [vmem:[%s259 + $0x3c] sm:$0xf] %vm1086, %v1037
          %1103 = vst.msk [vmem:[%s259 + $0x40] sm:$0xf] %vm1086, %v1038
          %1104 = vst.msk [vmem:[%s259 + $0x44] sm:$0xf] %vm1086, %v1039
          %1105 = vst.msk [vmem:[%s259 + $0x48] sm:$0xf] %vm1086, %v1040
          %1106 = vst.msk [vmem:[%s259 + $0x4c] sm:$0xf] %vm1086, %v1041
          %1107 = vst.msk [vmem:[%s259 + $0x50] sm:$0xf] %vm1086, %v1042
          %1108 = vst.msk [vmem:[%s259 + $0x54] sm:$0xf] %vm1086, %v1043
          %1109 = vst.msk [vmem:[%s259 + $0x58] sm:$0xf] %vm1086, %v1044
          %1110 = vst.msk [vmem:[%s259 + $0x5c] sm:$0xf] %vm1086, %v1045
          %1111 = vst.msk [vmem:[%s259 + $0x60] sm:$0xf] %vm1086, %v1046
          %1112 = vst.msk [vmem:[%s259 + $0x64] sm:$0xf] %vm1086, %v1047
          %1113 = vst.msk [vmem:[%s259 + $0x68] sm:$0xf] %vm1086, %v1048
          %1114 = vst.msk [vmem:[%s259 + $0x6c] sm:$0xf] %vm1086, %v1049
          %1115 = vst.msk [vmem:[%s259 + $0x70] sm:$0xf] %vm1086, %v1050
          %1116 = vst.msk [vmem:[%s259 + $0x74] sm:$0xf] %vm1086, %v1051
          %1117 = vst.msk [vmem:[%s259 + $0x78] sm:$0xf] %vm1086, %v1052
          %1118 = vst.msk [vmem:[%s259 + $0x7c] sm:$0xf] %vm1086, %v1053
        $region52: #{discriminator_forward.5} parent=35 // pred_fallthru
          _
        %s1119 = smul.u32 32, %s21
        %p1120 = scmp.lt.s32.totalorder %s1119, 63
        %s1121 = scalar_select %p1120, %s1119, 63
        %s1122 = smul.addr %s1121, 4
        %s1123 = scalar_lea.vmem %s4, %s1122
        // Predicated region
        $region53: #{discriminator_forward.5} parent=35 // pred_check
          %p1124 = pneg %p143
        $region54: #{discriminator_forward.5} parent=35 // pred_check_branch
          %1126 = sbr.rel (%p1124) target = $region56
        $region55: #{discriminator_forward.5} parent=35 // pred_region
          %s1127 = smul.u32 32, %s21
        $region56: #{discriminator_forward.5} parent=35 // pred_fallthru
          _
      $region36: #{discriminator_forward.5} parent=5 // pred_fallthru
        _
      %p1128 = scmp.le.s32.totalorder 2, %s12
      // Predicated region
      $region57: #{discriminator_forward.5} parent=5 // pred_check
        %p1129 = pneg %p1128
      $region58: #{discriminator_forward.5} parent=5 // pred_check_branch
        %1131 = sbr.rel (%p1129) target = $region60
      $region59: #{discriminator_forward.5} parent=5 // pred_region
        %s1132 = ssub.s32 %s12, 2
        // Predicated region
        $region61: #{discriminator_forward.5} parent=59 // pred_check
          %p1133 = pneg %p149
        $region62: #{discriminator_forward.5} parent=59 // pred_check_branch
          %1135 = sbr.rel (%p1133) target = $region64
        $region63: #{discriminator_forward.5} parent=59 // pred_region
          %s1136 = smul.u32 32, %s23
          %p1137 = scmp.lt.s32.totalorder %s1136, 63
          %s1138 = scalar_select %p1137, %s1136, 63
          %s1139 = smul.addr %s1138, 4
          %s1140 = scalar_lea.vmem %s4, %s1139
        $region64: #{discriminator_forward.5} parent=59 // pred_fallthru
          _
      $region60: #{discriminator_forward.5} parent=5 // pred_fallthru
        _
    $region6: #{discriminator_forward.5} parent=1 // loop_footer
      %s16 = sadd.s32 1, %s12
    $region7: #{discriminator_forward.5} parent=1 // loop_footer_branch
      %11 = sbr.rel target = $region3
    $region8: #{discriminator_forward.5} parent=1 // loop_exit
      _
    %1141 = vsyncpa [#allocation4], 1
    %s1142 = scalar_lea.sflag [#allocation4], 1
    %1143 = vsyncpa %s1142, 1
    %1144 = vsyncpa [#allocation6], 1

// kernel: discriminator_forward.6
$region0: #{discriminator_forward.6}
  #allocation0 [shape = 'u32[]', space=smem, size = 0x4, offset = 0x4, fixed_abs, tag = 'smem constant byte address 0x4 - core index']
  #allocation1 [shape = 'u32[144,128]{1,0:T(1,128)}', space=vmem, size = 0x12000, scoped, tag = 'internal scratch']
  #allocation2 [shape = 'f32[128,128]{1,0:T(8,128)}', space=vmem, size = 0x10000, scoped, tag = 'scratch operand']
  %s0 = inlined_call_operand.vmem [shape: bf16[128,1024], index: 0, kind: input, shape index: {}]
  %s1 = inlined_call_operand.vmem [shape: bf16[1024,128], index: 1, kind: input, shape index: {}]
  %s2 = inlined_call_operand.vmem [shape: f32[1,128], index: 2, kind: input, shape index: {}]
  %s3 = inlined_call_operand.vmem [shape: f32[1,128], index: 3, kind: input, shape index: {}]
  %s4 = inlined_call_operand.vmem [shape: bf16[128,128], index: 4, kind: output, shape index: {}]
  %s5 = sld [smem:[#allocation0]]
  $region80: #{discriminator_forward.6} parent=0
    _
  %s7 = ssub.s32 1, %s5
  %s8 = scalar_select 0, %s7, %s5
  $region1: #{discriminator_forward.6} parent=0
    #allocation3 [shape = 'u8[262144]{0}', space=vmem, size = 0x40000, scoped, tag = 'input window, operand 0']
    loop: start=0, step=1, limit=4
    $region2: #{discriminator_forward.6} parent=1 // loop_pre_header
      _
    $region3: #{discriminator_forward.6} parent=1 // loop_header
      %s10 = sphi 0, %s14
      %p11 = scmp.ge.s32.totalorder %s10, 4
      %s17 = sphi 0, %s29
      %s18 = sphi 0, %s25
      %s19 = sphi 0, %s17
      %s20 = sphi 0, %s18
      %s21 = sphi 0, %s19
      %s22 = sphi 0, %s20
      %s34 = sphi 0, %s36
      %s37 = sphi 0, %s34
      %s38 = sphi 0, %s37
      %s54 = sphi 0, %s38
      %s60 = sphi 0, %s62
      %s63 = sphi 0, %s60
      %s64 = sphi 0, %s63
      %s80 = sphi 0, %s64
      %s84 = sphi 0, %s84
      %s86 = sphi 0, %s84
      %s87 = sphi 0, %s86
      %s101 = sphi 0, %s87
      %s105 = sphi 0, %s105
      %s107 = sphi 0, %s105
      %s108 = sphi 0, %s107
      %s122 = sphi 0, %s108
      %s128 = sphi 0, %s130
      %s131 = sphi 0, %s128
      %s132 = sphi 0, %s131
      %s148 = sphi 0, %s132
    $region4: #{discriminator_forward.6} parent=1 // loop_header_branch
      %13 = sbr.rel (%p11) target = $region8
    $region5: #{discriminator_forward.6} parent=1 // loop_body
      %s15 = ssub.s32 %s10, 1
      %s16 = ssub.s32 %s10, 2
      %s23 = sadd.s32 1, %s18
      %p24 = scmp.ge.s32.totalorder %s23, 2
      %s25 = scalar_select %p24, 0, %s23
      %s26 = sadd.s32 1, %s17
      %s27 = scalar_select %p24, %s26, %s17
      %p28 = scmp.ge.s32.totalorder %s27, 1
      %s29 = scalar_select %p28, 0, %s27
      %s30 = ssub.s32 %s17, %s29
      %s31 = ssub.s32 %s18, %s25
      %s32 = sor.u32 %s30, %s31
      %p33 = scmp.eq.s32.totalorder %s32, 0
      %s35 = sadd.s32 %s34, 1
      %s36 = scalar_select %p33, %s34, %s35
      %p39 = pneg %p33
      %p40 = scmp.eq.s32.totalorder %s10, 1
      %p41 = por %p39, %p40
      %p42 = scmp.ne.s32.totalorder %s34, %s37
      %p43 = scmp.eq.s32.totalorder %s10, 0
      %p44 = por %p42, %p43
      %p45 = scmp.ne.s32.totalorder %s34, %s37
      %p46 = scmp.eq.s32.totalorder %s15, 1
      %p47 = por %p45, %p46
      %p48 = scmp.ne.s32.totalorder %s37, %s38
      %p49 = scmp.eq.s32.totalorder %s15, 0
      %p50 = por %p48, %p49
      %p51 = scmp.ne.s32.totalorder %s37, %s38
      %p52 = scmp.eq.s32.totalorder %s16, 1
      %p53 = por %p51, %p52
      %p55 = scmp.ne.s32.totalorder %s38, %s54
      %p56 = scmp.eq.s32.totalorder %s16, 0
      %p57 = por %p55, %p56
      %s58 = ssub.s32 %s18, %s25
      %p59 = scmp.eq.s32.totalorder %s58, 0
      %s61 = sadd.s32 %s60, 1
      %s62 = scalar_select %p59, %s60, %s61
      %p65 = pneg %p59
      %p66 = scmp.eq.s32.totalorder %s10, 1
      %p67 = por %p65, %p66
      %p68 = scmp.ne.s32.totalorder %s60, %s63
      %p69 = scmp.eq.s32.totalorder %s10, 0
      %p70 = por %p68, %p69
      %p71 = scmp.ne.s32.totalorder %s60, %s63
      %p72 = scmp.eq.s32.totalorder %s15, 1
      %p73 = por %p71, %p72
      %p74 = scmp.ne.s32.totalorder %s63, %s64
      %p75 = scmp.eq.s32.totalorder %s15, 0
      %p76 = por %p74, %p75
      %p77 = scmp.ne.s32.totalorder %s63, %s64
      %p78 = scmp.eq.s32.totalorder %s16, 1
      %p79 = por %p77, %p78
      %p81 = scmp.ne.s32.totalorder %s64, %s80
      %p82 = scmp.eq.s32.totalorder %s16, 0
      %p83 = por %p81, %p82
      %s85 = sadd.s32 %s84, 1
      %p88 = scmp.eq.s32.totalorder %s10, 1
      %p89 = scmp.ne.s32.totalorder %s84, %s86
      %p90 = scmp.eq.s32.totalorder %s10, 0
      %p91 = por %p89, %p90
      %p92 = scmp.ne.s32.totalorder %s84, %s86
      %p93 = scmp.eq.s32.totalorder %s15, 1
      %p94 = por %p92, %p93
      %p95 = scmp.ne.s32.totalorder %s86, %s87
      %p96 = scmp.eq.s32.totalorder %s15, 0
      %p97 = por %p95, %p96
      %p98 = scmp.ne.s32.totalorder %s86, %s87
      %p99 = scmp.eq.s32.totalorder %s16, 1
      %p100 = por %p98, %p99
      %p102 = scmp.ne.s32.totalorder %s87, %s101
      %p103 = scmp.eq.s32.totalorder %s16, 0
      %p104 = por %p102, %p103
      %s106 = sadd.s32 %s105, 1
      %p109 = scmp.eq.s32.totalorder %s10, 1
      %p110 = scmp.ne.s32.totalorder %s105, %s107
      %p111 = scmp.eq.s32.totalorder %s10, 0
      %p112 = por %p110, %p111
      %p113 = scmp.ne.s32.totalorder %s105, %s107
      %p114 = scmp.eq.s32.totalorder %s15, 1
      %p115 = por %p113, %p114
      %p116 = scmp.ne.s32.totalorder %s107, %s108
      %p117 = scmp.eq.s32.totalorder %s15, 0
      %p118 = por %p116, %p117
      %p119 = scmp.ne.s32.totalorder %s107, %s108
      %p120 = scmp.eq.s32.totalorder %s16, 1
      %p121 = por %p119, %p120
      %p123 = scmp.ne.s32.totalorder %s108, %s122
      %p124 = scmp.eq.s32.totalorder %s16, 0
      %p125 = por %p123, %p124
      %s126 = ssub.s32 %s17, %s29
      %p127 = scmp.eq.s32.totalorder %s126, 0
      %s129 = sadd.s32 %s128, 1
      %s130 = scalar_select %p127, %s128, %s129
      %p133 = pneg %p127
      %p134 = scmp.eq.s32.totalorder %s10, 1
      %p135 = por %p133, %p134
      %p136 = scmp.ne.s32.totalorder %s128, %s131
      %p137 = scmp.eq.s32.totalorder %s10, 0
      %p138 = por %p136, %p137
      %p139 = scmp.ne.s32.totalorder %s128, %s131
      %p140 = scmp.eq.s32.totalorder %s15, 1
      %p141 = por %p139, %p140
      %p142 = scmp.ne.s32.totalorder %s131, %s132
      %p143 = scmp.eq.s32.totalorder %s15, 0
      %p144 = por %p142, %p143
      %p145 = scmp.ne.s32.totalorder %s131, %s132
      %p146 = scmp.eq.s32.totalorder %s16, 1
      %p147 = por %p145, %p146
      %p149 = scmp.ne.s32.totalorder %s132, %s148
      %p150 = scmp.eq.s32.totalorder %s16, 0
      %p151 = por %p149, %p150
      %p152 = scmp.le.s32.totalorder 1, %s10
      %p153 = scmp.lt.s32.totalorder %s10, 3
      %p154 = pnand %p152, %p153
      %p155 = pneg %p154
      // Predicated region
      $region9: #{discriminator_forward.6} parent=5 // pred_check
        _
      $region10: #{discriminator_forward.6} parent=5 // pred_check_branch
        %157 = sbr.rel (%p154) target = $region12
      $region11: #{discriminator_forward.6} parent=5 // pred_region
        %s158 = ssub.s32 %s10, 1
        // Predicated region
        $region13: #{discriminator_forward.6} parent=11 // pred_check
          %p159 = pneg %p97
        $region14: #{discriminator_forward.6} parent=11 // pred_check_branch
          %161 = sbr.rel (%p159) target = $region16
        $region15: #{discriminator_forward.6} parent=11 // pred_region
          _
        $region16: #{discriminator_forward.6} parent=11 // pred_fallthru
          _
        // Predicated region
        $region17: #{discriminator_forward.6} parent=11 // pred_check
          %p162 = pneg %p118
        $region18: #{discriminator_forward.6} parent=11 // pred_check_branch
          %164 = sbr.rel (%p162) target = $region20
        $region19: #{discriminator_forward.6} parent=11 // pred_region
          _
        $region20: #{discriminator_forward.6} parent=11 // pred_fallthru
          _
      $region12: #{discriminator_forward.6} parent=5 // pred_fallthru
        _
      %p165 = scmp.lt.s32.totalorder %s10, 2
      // Predicated region
      $region21: #{discriminator_forward.6} parent=5 // pred_check
        %p166 = pneg %p165
      $region22: #{discriminator_forward.6} parent=5 // pred_check_branch
        %168 = sbr.rel (%p166) target = $region24
      $region23: #{discriminator_forward.6} parent=5 // pred_region
        // Predicated region
        $region25: #{discriminator_forward.6} parent=23 // pred_check
          %p169 = pneg %p44
        $region26: #{discriminator_forward.6} parent=23 // pred_check_branch
          %171 = sbr.rel (%p169) target = $region28
        $region27: #{discriminator_forward.6} parent=23 // pred_region
          %s172 = sand.u32 %s34, 1
          %s173 = sand.u32 %s34, 1
          %s174 = smul.addr %s173, 256
          %s175 = scalar_lea.vmem [#allocation3], %s174
          %s176 = smul.u32 16, %s17
          %s177 = smul.u32 4, %s18
          %s178 = smul.addr %s176, 8
          %s179 = sadd.s32 %s177, %s178
          %s180 = smul.addr %s179, 4
          %s181 = scalar_lea.vmem %s0, %s180
          // Predicated region
          $region29: #{discriminator_forward.6} parent=27 // pred_check
            _
          $region30: #{discriminator_forward.6} parent=27 // pred_check_branch
            %183 = sbr.rel (0) target = $region32
          $region31: #{discriminator_forward.6} parent=27 // pred_region
            // Predicated region
            $region33: #{discriminator_forward.6} parent=31 // pred_check
              _
            $region34: #{discriminator_forward.6} parent=31 // pred_check_branch
              %185 = sbr.rel (0) target = $region36
            $region35: #{discriminator_forward.6} parent=31 // pred_region
              loop: start=0, step=1, limit=1
              $region37: #{discriminator_forward.6} parent=35 // loop_pre_header
                _
              $region38: #{discriminator_forward.6} parent=35 // loop_header
                %s187 = sphi 0, %s191
                %p188 = scmp.ge.s32.totalorder %s187, 1
                %s192 = sphi %s181, %s181
                %s193 = sphi %s175, %s175
              $region39: #{discriminator_forward.6} parent=35 // loop_header_branch
                %190 = sbr.rel (%p188) target = $region43
              $region40: #{discriminator_forward.6} parent=35 // loop_body
                %v194 = vld [vmem:[%s192] sm:$0xff]
                %195 = vst [vmem:[%s193] sm:$0xff] %v194
                %v196 = vld [vmem:[%s192 + $0x8] sm:$0xff]
                %197 = vst [vmem:[%s193 + $0x8] sm:$0xff] %v196
                %v198 = vld [vmem:[%s192 + $0x20] sm:$0xff]
                %199 = vst [vmem:[%s193 + $0x10] sm:$0xff] %v198
                %v200 = vld [vmem:[%s192 + $0x28] sm:$0xff]
                %201 = vst [vmem:[%s193 + $0x18] sm:$0xff] %v200
                %v202 = vld [vmem:[%s192 + $0x40] sm:$0xff]
                %203 = vst [vmem:[%s193 + $0x20] sm:$0xff] %v202
                %v204 = vld [vmem:[%s192 + $0x48] sm:$0xff]
                %205 = vst [vmem:[%s193 + $0x28] sm:$0xff] %v204
                %v206 = vld [vmem:[%s192 + $0x60] sm:$0xff]
                %207 = vst [vmem:[%s193 + $0x30] sm:$0xff] %v206
                %v208 = vld [vmem:[%s192 + $0x68] sm:$0xff]
                %209 = vst [vmem:[%s193 + $0x38] sm:$0xff] %v208
                %v210 = vld [vmem:[%s192 + $0x80] sm:$0xff]
                %211 = vst [vmem:[%s193 + $0x40] sm:$0xff] %v210
                %v212 = vld [vmem:[%s192 + $0x88] sm:$0xff]
                %213 = vst [vmem:[%s193 + $0x48] sm:$0xff] %v212
                %v214 = vld [vmem:[%s192 + $0xa0] sm:$0xff]
                %215 = vst [vmem:[%s193 + $0x50] sm:$0xff] %v214
                %v216 = vld [vmem:[%s192 + $0xa8] sm:$0xff]
                %217 = vst [vmem:[%s193 + $0x58] sm:$0xff] %v216
                %v218 = vld [vmem:[%s192 + $0xc0] sm:$0xff]
                %219 = vst [vmem:[%s193 + $0x60] sm:$0xff] %v218
                %v220 = vld [vmem:[%s192 + $0xc8] sm:$0xff]
                %221 = vst [vmem:[%s193 + $0x68] sm:$0xff] %v220
                %v222 = vld [vmem:[%s192 + $0xe0] sm:$0xff]
                %223 = vst [vmem:[%s193 + $0x70] sm:$0xff] %v222
                %v224 = vld [vmem:[%s192 + $0xe8] sm:$0xff]
                %225 = vst [vmem:[%s193 + $0x78] sm:$0xff] %v224
                %v226 = vld [vmem:[%s192 + $0x100] sm:$0xff]
                %227 = vst [vmem:[%s193 + $0x80] sm:$0xff] %v226
                %v228 = vld [vmem:[%s192 + $0x108] sm:$0xff]
                %229 = vst [vmem:[%s193 + $0x88] sm:$0xff] %v228
                %v230 = vld [vmem:[%s192 + $0x120] sm:$0xff]
                %231 = vst [vmem:[%s193 + $0x90] sm:$0xff] %v230
                %v232 = vld [vmem:[%s192 + $0x128] sm:$0xff]
                %233 = vst [vmem:[%s193 + $0x98] sm:$0xff] %v232
                %v234 = vld [vmem:[%s192 + $0x140] sm:$0xff]
                %235 = vst [vmem:[%s193 + $0xa0] sm:$0xff] %v234
                %v236 = vld [vmem:[%s192 + $0x148] sm:$0xff]
                %237 = vst [vmem:[%s193 + $0xa8] sm:$0xff] %v236
                %v238 = vld [vmem:[%s192 + $0x160] sm:$0xff]
                %239 = vst [vmem:[%s193 + $0xb0] sm:$0xff] %v238
                %v240 = vld [vmem:[%s192 + $0x168] sm:$0xff]
                %241 = vst [vmem:[%s193 + $0xb8] sm:$0xff] %v240
                %v242 = vld [vmem:[%s192 + $0x180] sm:$0xff]
                %243 = vst [vmem:[%s193 + $0xc0] sm:$0xff] %v242
                %v244 = vld [vmem:[%s192 + $0x188] sm:$0xff]
                %245 = vst [vmem:[%s193 + $0xc8] sm:$0xff] %v244
                %v246 = vld [vmem:[%s192 + $0x1a0] sm:$0xff]
                %247 = vst [vmem:[%s193 + $0xd0] sm:$0xff] %v246
                %v248 = vld [vmem:[%s192 + $0x1a8] sm:$0xff]
                %249 = vst [vmem:[%s193 + $0xd8] sm:$0xff] %v248
                %v250 = vld [vmem:[%s192 + $0x1c0] sm:$0xff]
                %251 = vst [vmem:[%s193 + $0xe0] sm:$0xff] %v250
                %v252 = vld [vmem:[%s192 + $0x1c8] sm:$0xff]
                %253 = vst [vmem:[%s193 + $0xe8] sm:$0xff] %v252
                %v254 = vld [vmem:[%s192 + $0x1e0] sm:$0xff]
                %255 = vst [vmem:[%s193 + $0xf0] sm:$0xff] %v254
                %v256 = vld [vmem:[%s192 + $0x1e8] sm:$0xff]
                %257 = vst [vmem:[%s193 + $0xf8] sm:$0xff] %v256
              $region41: #{discriminator_forward.6} parent=35 // loop_footer
                %s191 = sadd.s32 1, %s187
              $region42: #{discriminator_forward.6} parent=35 // loop_footer_branch
                %186 = sbr.rel target = $region38
              $region43: #{discriminator_forward.6} parent=35 // loop_exit
                _
            $region36: #{discriminator_forward.6} parent=31 // pred_fallthru
              _
            // Predicated region
            $region44: #{discriminator_forward.6} parent=31 // pred_check
              _
            $region45: #{discriminator_forward.6} parent=31 // pred_check_branch
              %259 = sbr.rel target = $region47
            $region46: #{discriminator_forward.6} parent=31 // pred_region
              _
            $region47: #{discriminator_forward.6} parent=31 // pred_fallthru
              _
          $region32: #{discriminator_forward.6} parent=27 // pred_fallthru
            _
          %260 = vnop
        $region28: #{discriminator_forward.6} parent=23 // pred_fallthru
          _
        // Predicated region
        $region48: #{discriminator_forward.6} parent=23 // pred_check
          %p261 = pneg %p70
        $region49: #{discriminator_forward.6} parent=23 // pred_check_branch
          %263 = sbr.rel (%p261) target = $region51
        $region50: #{discriminator_forward.6} parent=23 // pred_region
          %s264 = smul.u32 64, %s18
          %p265 = scmp.lt.s32.totalorder %s264, 127
          %s266 = scalar_select %p265, %s264, 127
          %s267 = smul.addr %s266, 4
          %s268 = scalar_lea.vmem %s1, %s267
          %s269 = smul.u32 64, %s18
        $region51: #{discriminator_forward.6} parent=23 // pred_fallthru
          _
      $region24: #{discriminator_forward.6} parent=5 // pred_fallthru
        _
      %p270 = scmp.le.s32.totalorder 1, %s10
      %p271 = scmp.lt.s32.totalorder %s10, 3
      %p272 = pnand %p270, %p271
      %p273 = pneg %p272
      // Predicated region
      $region52: #{discriminator_forward.6} parent=5 // pred_check
        _
      $region53: #{discriminator_forward.6} parent=5 // pred_check_branch
        %275 = sbr.rel (%p272) target = $region55
      $region54: #{discriminator_forward.6} parent=5 // pred_region
        %s276 = ssub.s32 %s10, 1
        %s277 = sand.u32 %s37, 1
        %s278 = sand.u32 %s37, 1
        %s279 = smul.addr %s278, 256
        %s280 = scalar_lea.vmem [#allocation3], %s279
        // Predicated region
        $region56: #{discriminator_forward.6} parent=54 // pred_check
          %p281 = pneg %p50
        $region57: #{discriminator_forward.6} parent=54 // pred_check_branch
          %283 = sbr.rel (%p281) target = $region59
        $region58: #{discriminator_forward.6} parent=54 // pred_region
          _
        $region59: #{discriminator_forward.6} parent=54 // pred_fallthru
          _
        %s284 = sand.u32 %s37, 1
        %s285 = sand.u32 %s37, 1
        %s286 = smul.addr %s285, 256
        %s287 = scalar_lea.vmem [#allocation3], %s286
        %p288 = pneg %p50
        %p289 = pneg %p47
        %s290 = smul.u32 64, %s20
        %p291 = scmp.lt.s32.totalorder %s290, 127
        %s292 = scalar_select %p291, %s290, 127
        %s293 = smul.addr %s292, 4
        %s294 = scalar_lea.vmem %s1, %s293
        %p295 = pneg %p76
        %p296 = pneg %p73
        %p297 = pneg %p97
        %p298 = pneg %p94
        %p299 = pneg %p118
        %p300 = pneg %p115
        %p301 = pneg %p144
        %p302 = pneg %p141
        %s303 = smul.u32 16, %s19
        %p304 = scmp.lt.s32.totalorder %s303, 15
        %s305 = scalar_select %p304, %s303, 15
        %s306 = smul.addr %s305, 4
        %s307 = scalar_lea.vmem %s4, %s306
        %s308 = smul.u32 16, %s19
        %s309 = smul.u32 4, %s20
        %s310 = smul.u32 64, %s20
        %p311 = scmp.lt.s32.totalorder %s310, 127
        %s312 = scalar_select %p311, %s310, 127
        %s313 = smul.addr %s312, 4
        %s314 = scalar_lea.vmem %s1, %s313
        %s315 = smul.u32 64, %s20
        %s316 = smul.u32 16, %s19
        %p317 = scmp.lt.s32.totalorder %s316, 15
        %s318 = scalar_select %p317, %s316, 15
        %s319 = smul.addr %s318, 4
        %s320 = scalar_lea.vmem %s4, %s319
        %s321 = smul.u32 16, %s19
        %p323 = scmp.eq.s32.totalorder %s20, 0
        // Predicated region
        $region60: #{discriminator_forward.6} parent=54 // pred_check
          %p324 = pneg %p323
        $region61: #{discriminator_forward.6} parent=54 // pred_check_branch
          %326 = sbr.rel (%p324) target = $region63
        $region62: #{discriminator_forward.6} parent=54 // pred_region
          %327 = vst [vmem:[#allocation2] sm:$0xff] 0.0
          %328 = vst [vmem:[#allocation2 + $0x8] sm:$0xff] 0.0
          %329 = vst [vmem:[#allocation2 + $0x10] sm:$0xff] 0.0
          %330 = vst [vmem:[#allocation2 + $0x18] sm:$0xff] 0.0
          %331 = vst [vmem:[#allocation2 + $0x20] sm:$0xff] 0.0
          %332 = vst [vmem:[#allocation2 + $0x28] sm:$0xff] 0.0
          %333 = vst [vmem:[#allocation2 + $0x30] sm:$0xff] 0.0
          %334 = vst [vmem:[#allocation2 + $0x38] sm:$0xff] 0.0
          %335 = vst [vmem:[#allocation2 + $0x40] sm:$0xff] 0.0
          %336 = vst [vmem:[#allocation2 + $0x48] sm:$0xff] 0.0
          %337 = vst [vmem:[#allocation2 + $0x50] sm:$0xff] 0.0
          %338 = vst [vmem:[#allocation2 + $0x58] sm:$0xff] 0.0
          %339 = vst [vmem:[#allocation2 + $0x60] sm:$0xff] 0.0
          %340 = vst [vmem:[#allocation2 + $0x68] sm:$0xff] 0.0
          %341 = vst [vmem:[#allocation2 + $0x70] sm:$0xff] 0.0
          %342 = vst [vmem:[#allocation2 + $0x78] sm:$0xff] 0.0
        $region63: #{discriminator_forward.6} parent=54 // pred_fallthru
          _
        %v343 = vld [vmem:[#allocation2] sm:$0xff]
        %v344 = vld [vmem:[#allocation2 + $0x8] sm:$0xff]
        %v345 = vld [vmem:[#allocation2 + $0x10] sm:$0xff]
        %v346 = vld [vmem:[#allocation2 + $0x18] sm:$0xff]
        %v347 = vld [vmem:[#allocation2 + $0x20] sm:$0xff]
        %v348 = vld [vmem:[#allocation2 + $0x28] sm:$0xff]
        %v349 = vld [vmem:[#allocation2 + $0x30] sm:$0xff]
        %v350 = vld [vmem:[#allocation2 + $0x38] sm:$0xff]
        %v351 = vld [vmem:[#allocation2 + $0x40] sm:$0xff]
        %v352 = vld [vmem:[#allocation2 + $0x48] sm:$0xff]
        %v353 = vld [vmem:[#allocation2 + $0x50] sm:$0xff]
        %v354 = vld [vmem:[#allocation2 + $0x58] sm:$0xff]
        %v355 = vld [vmem:[#allocation2 + $0x60] sm:$0xff]
        %v356 = vld [vmem:[#allocation2 + $0x68] sm:$0xff]
        %v357 = vld [vmem:[#allocation2 + $0x70] sm:$0xff]
        %v358 = vld [vmem:[#allocation2 + $0x78] sm:$0xff]
        %v359 = vld [vmem:[%s280] sm:$0xff]
        %v360 = vld [vmem:[%s280 + $0x8] sm:$0xff]
        %v361 = vld [vmem:[%s280 + $0x10] sm:$0xff]
        %v362 = vld [vmem:[%s280 + $0x18] sm:$0xff]
        %v363 = vld [vmem:[%s280 + $0x20] sm:$0xff]
        %v364 = vld [vmem:[%s280 + $0x28] sm:$0xff]
        %v365 = vld [vmem:[%s280 + $0x30] sm:$0xff]
        %v366 = vld [vmem:[%s280 + $0x38] sm:$0xff]
        %v367 = vld [vmem:[%s280 + $0x40] sm:$0xff]
        %v368 = vld [vmem:[%s280 + $0x48] sm:$0xff]
        %v369 = vld [vmem:[%s280 + $0x50] sm:$0xff]
        %v370 = vld [vmem:[%s280 + $0x58] sm:$0xff]
        %v371 = vld [vmem:[%s280 + $0x60] sm:$0xff]
        %v372 = vld [vmem:[%s280 + $0x68] sm:$0xff]
        %v373 = vld [vmem:[%s280 + $0x70] sm:$0xff]
        %v374 = vld [vmem:[%s280 + $0x78] sm:$0xff]
        %v375 = vld [vmem:[%s280 + $0x80] sm:$0xff]
        %v376 = vld [vmem:[%s280 + $0x88] sm:$0xff]
        %v377 = vld [vmem:[%s280 + $0x90] sm:$0xff]
        %v378 = vld [vmem:[%s280 + $0x98] sm:$0xff]
        %v379 = vld [vmem:[%s280 + $0xa0] sm:$0xff]
        %v380 = vld [vmem:[%s280 + $0xa8] sm:$0xff]
        %v381 = vld [vmem:[%s280 + $0xb0] sm:$0xff]
        %v382 = vld [vmem:[%s280 + $0xb8] sm:$0xff]
        %v383 = vld [vmem:[%s280 + $0xc0] sm:$0xff]
        %v384 = vld [vmem:[%s280 + $0xc8] sm:$0xff]
        %v385 = vld [vmem:[%s280 + $0xd0] sm:$0xff]
        %v386 = vld [vmem:[%s280 + $0xd8] sm:$0xff]
        %v387 = vld [vmem:[%s280 + $0xe0] sm:$0xff]
        %v388 = vld [vmem:[%s280 + $0xe8] sm:$0xff]
        %v389 = vld [vmem:[%s280 + $0xf0] sm:$0xff]
        %v390 = vld [vmem:[%s280 + $0xf8] sm:$0xff]
        %v391 = vld [vmem:[%s314] sm:$0xf]
        %v392 = vld [vmem:[%s314 + $0x4] sm:$0xf]
        %v393 = vld [vmem:[%s314 + $0x8] sm:$0xf]
        %v394 = vld [vmem:[%s314 + $0xc] sm:$0xf]
        %v395 = vld [vmem:[%s314 + $0x10] sm:$0xf]
        %v396 = vld [vmem:[%s314 + $0x14] sm:$0xf]
        %v397 = vld [vmem:[%s314 + $0x18] sm:$0xf]
        %v398 = vld [vmem:[%s314 + $0x1c] sm:$0xf]
        %v399 = vld [vmem:[%s314 + $0x20] sm:$0xf]
        %v400 = vld [vmem:[%s314 + $0x24] sm:$0xf]
        %v401 = vld [vmem:[%s314 + $0x28] sm:$0xf]
        %v402 = vld [vmem:[%s314 + $0x2c] sm:$0xf]
        %v403 = vld [vmem:[%s314 + $0x30] sm:$0xf]
        %v404 = vld [vmem:[%s314 + $0x34] sm:$0xf]
        %v405 = vld [vmem:[%s314 + $0x38] sm:$0xf]
        %v406 = vld [vmem:[%s314 + $0x3c] sm:$0xf]
        %v407 = vld [vmem:[%s314 + $0x40] sm:$0xf]
        %v408 = vld [vmem:[%s314 + $0x44] sm:$0xf]
        %v409 = vld [vmem:[%s314 + $0x48] sm:$0xf]
        %v410 = vld [vmem:[%s314 + $0x4c] sm:$0xf]
        %v411 = vld [vmem:[%s314 + $0x50] sm:$0xf]
        %v412 = vld [vmem:[%s314 + $0x54] sm:$0xf]
        %v413 = vld [vmem:[%s314 + $0x58] sm:$0xf]
        %v414 = vld [vmem:[%s314 + $0x5c] sm:$0xf]
        %v415 = vld [vmem:[%s314 + $0x60] sm:$0xf]
        %v416 = vld [vmem:[%s314 + $0x64] sm:$0xf]
        %v417 = vld [vmem:[%s314 + $0x68] sm:$0xf]
        %v418 = vld [vmem:[%s314 + $0x6c] sm:$0xf]
        %v419 = vld [vmem:[%s314 + $0x70] sm:$0xf]
        %v420 = vld [vmem:[%s314 + $0x74] sm:$0xf]
        %v421 = vld [vmem:[%s314 + $0x78] sm:$0xf]
        %v422 = vld [vmem:[%s314 + $0x7c] sm:$0xf]
        %v423 = vld [vmem:[%s314 + $0x80] sm:$0xf]
        %v424 = vld [vmem:[%s314 + $0x84] sm:$0xf]
        %v425 = vld [vmem:[%s314 + $0x88] sm:$0xf]
        %v426 = vld [vmem:[%s314 + $0x8c] sm:$0xf]
        %v427 = vld [vmem:[%s314 + $0x90] sm:$0xf]
        %v428 = vld [vmem:[%s314 + $0x94] sm:$0xf]
        %v429 = vld [vmem:[%s314 + $0x98] sm:$0xf]
        %v430 = vld [vmem:[%s314 + $0x9c] sm:$0xf]
        %v431 = vld [vmem:[%s314 + $0xa0] sm:$0xf]
        %v432 = vld [vmem:[%s314 + $0xa4] sm:$0xf]
        %v433 = vld [vmem:[%s314 + $0xa8] sm:$0xf]
        %v434 = vld [vmem:[%s314 + $0xac] sm:$0xf]
        %v435 = vld [vmem:[%s314 + $0xb0] sm:$0xf]
        %v436 = vld [vmem:[%s314 + $0xb4] sm:$0xf]
        %v437 = vld [vmem:[%s314 + $0xb8] sm:$0xf]
        %v438 = vld [vmem:[%s314 + $0xbc] sm:$0xf]
        %v439 = vld [vmem:[%s314 + $0xc0] sm:$0xf]
        %v440 = vld [vmem:[%s314 + $0xc4] sm:$0xf]
        %v441 = vld [vmem:[%s314 + $0xc8] sm:$0xf]
        %v442 = vld [vmem:[%s314 + $0xcc] sm:$0xf]
        %v443 = vld [vmem:[%s314 + $0xd0] sm:$0xf]
        %v444 = vld [vmem:[%s314 + $0xd4] sm:$0xf]
        %v445 = vld [vmem:[%s314 + $0xd8] sm:$0xf]
        %v446 = vld [vmem:[%s314 + $0xdc] sm:$0xf]
        %v447 = vld [vmem:[%s314 + $0xe0] sm:$0xf]
        %v448 = vld [vmem:[%s314 + $0xe4] sm:$0xf]
        %v449 = vld [vmem:[%s314 + $0xe8] sm:$0xf]
        %v450 = vld [vmem:[%s314 + $0xec] sm:$0xf]
        %v451 = vld [vmem:[%s314 + $0xf0] sm:$0xf]
        %v452 = vld [vmem:[%s314 + $0xf4] sm:$0xf]
        %v453 = vld [vmem:[%s314 + $0xf8] sm:$0xf]
        %v454 = vld [vmem:[%s314 + $0xfc] sm:$0xf]
        %v487 = vunpack.c.l.b16 %v359
        %v488 = vunpack.c.h.b16 %v359
        %v489 = vunpack.c.l.b16 %v360
        %v490 = vunpack.c.h.b16 %v360
        %v491 = vunpack.c.l.b16 %v361
        %v492 = vunpack.c.h.b16 %v361
        %v493 = vunpack.c.l.b16 %v362
        %v494 = vunpack.c.h.b16 %v362
        %v495 = vunpack.c.l.b16 %v363
        %v496 = vunpack.c.h.b16 %v363
        %v497 = vunpack.c.l.b16 %v364
        %v498 = vunpack.c.h.b16 %v364
        %v499 = vunpack.c.l.b16 %v365
        %v500 = vunpack.c.h.b16 %v365
        %v501 = vunpack.c.l.b16 %v366
        %v502 = vunpack.c.h.b16 %v366
        %v503 = vunpack.c.l.b16 %v367
        %v504 = vunpack.c.h.b16 %v367
        %v505 = vunpack.c.l.b16 %v368
        %v506 = vunpack.c.h.b16 %v368
        %v507 = vunpack.c.l.b16 %v369
        %v508 = vunpack.c.h.b16 %v369
        %v509 = vunpack.c.l.b16 %v370
        %v510 = vunpack.c.h.b16 %v370
        %v511 = vunpack.c.l.b16 %v371
        %v512 = vunpack.c.h.b16 %v371
        %v513 = vunpack.c.l.b16 %v372
        %v514 = vunpack.c.h.b16 %v372
        %v515 = vunpack.c.l.b16 %v373
        %v516 = vunpack.c.h.b16 %v373
        %v517 = vunpack.c.l.b16 %v374
        %v518 = vunpack.c.h.b16 %v374
        %v519 = vunpack.c.l.b16 %v375
        %v520 = vunpack.c.h.b16 %v375
        %v521 = vunpack.c.l.b16 %v376
        %v522 = vunpack.c.h.b16 %v376
        %v523 = vunpack.c.l.b16 %v377
        %v524 = vunpack.c.h.b16 %v377
        %v525 = vunpack.c.l.b16 %v378
        %v526 = vunpack.c.h.b16 %v378
        %v527 = vunpack.c.l.b16 %v379
        %v528 = vunpack.c.h.b16 %v379
        %v529 = vunpack.c.l.b16 %v380
        %v530 = vunpack.c.h.b16 %v380
        %v531 = vunpack.c.l.b16 %v381
        %v532 = vunpack.c.h.b16 %v381
        %v533 = vunpack.c.l.b16 %v382
        %v534 = vunpack.c.h.b16 %v382
        %v535 = vunpack.c.l.b16 %v383
        %v536 = vunpack.c.h.b16 %v383
        %v537 = vunpack.c.l.b16 %v384
        %v538 = vunpack.c.h.b16 %v384
        %v539 = vunpack.c.l.b16 %v385
        %v540 = vunpack.c.h.b16 %v385
        %v541 = vunpack.c.l.b16 %v386
        %v542 = vunpack.c.h.b16 %v386
        %v543 = vunpack.c.l.b16 %v387
        %v544 = vunpack.c.h.b16 %v387
        %v545 = vunpack.c.l.b16 %v388
        %v546 = vunpack.c.h.b16 %v388
        %v547 = vunpack.c.l.b16 %v389
        %v548 = vunpack.c.h.b16 %v389
        %v549 = vunpack.c.l.b16 %v390
        %v550 = vunpack.c.h.b16 %v390
        %v551 = vpack.c.b16 %v491, %v487
        %v552 = vpack.c.b16 %v492, %v488
        %v553 = vpack.c.b16 %v493, %v489
        %v554 = vpack.c.b16 %v494, %v490
        %v555 = vpack.c.b16 %v499, %v495
        %v556 = vpack.c.b16 %v500, %v496
        %v557 = vpack.c.b16 %v501, %v497
        %v558 = vpack.c.b16 %v502, %v498
        %v559 = vpack.c.b16 %v507, %v503
        %v560 = vpack.c.b16 %v508, %v504
        %v561 = vpack.c.b16 %v509, %v505
        %v562 = vpack.c.b16 %v510, %v506
        %v563 = vpack.c.b16 %v515, %v511
        %v564 = vpack.c.b16 %v516, %v512
        %v565 = vpack.c.b16 %v517, %v513
        %v566 = vpack.c.b16 %v518, %v514
        %v567 = vpack.c.b16 %v523, %v519
        %v568 = vpack.c.b16 %v524, %v520
        %v569 = vpack.c.b16 %v525, %v521
        %v570 = vpack.c.b16 %v526, %v522
        %v571 = vpack.c.b16 %v531, %v527
        %v572 = vpack.c.b16 %v532, %v528
        %v573 = vpack.c.b16 %v533, %v529
        %v574 = vpack.c.b16 %v534, %v530
        %v575 = vpack.c.b16 %v539, %v535
        %v576 = vpack.c.b16 %v540, %v536
        %v577 = vpack.c.b16 %v541, %v537
        %v578 = vpack.c.b16 %v542, %v538
        %v579 = vpack.c.b16 %v547, %v543
        %v580 = vpack.c.b16 %v548, %v544
        %v581 = vpack.c.b16 %v549, %v545
        %v582 = vpack.c.b16 %v550, %v546
        %v679 = vunpack.c.l.b16 %v391
        %v680 = vunpack.c.l.b16 %v392
        %v681 = vunpack.c.l.b16 %v393
        %v682 = vunpack.c.l.b16 %v394
        %v683 = vunpack.c.l.b16 %v395
        %v684 = vunpack.c.l.b16 %v396
        %v685 = vunpack.c.l.b16 %v397
        %v686 = vunpack.c.l.b16 %v398
        %v687 = vunpack.c.l.b16 %v399
        %v688 = vunpack.c.l.b16 %v400
        %v689 = vunpack.c.l.b16 %v401
        %v690 = vunpack.c.l.b16 %v402
        %v691 = vunpack.c.l.b16 %v403
        %v692 = vunpack.c.l.b16 %v404
        %v693 = vunpack.c.l.b16 %v405
        %v694 = vunpack.c.l.b16 %v406
        %v695 = vunpack.c.l.b16 %v407
        %v696 = vunpack.c.l.b16 %v408
        %v697 = vunpack.c.l.b16 %v409
        %v698 = vunpack.c.l.b16 %v410
        %v699 = vunpack.c.l.b16 %v411
        %v700 = vunpack.c.l.b16 %v412
        %v701 = vunpack.c.l.b16 %v413
        %v702 = vunpack.c.l.b16 %v414
        %v703 = vunpack.c.l.b16 %v415
        %v704 = vunpack.c.l.b16 %v416
        %v705 = vunpack.c.l.b16 %v417
        %v706 = vunpack.c.l.b16 %v418
        %v707 = vunpack.c.l.b16 %v419
        %v708 = vunpack.c.l.b16 %v420
        %v709 = vunpack.c.l.b16 %v421
        %v710 = vunpack.c.l.b16 %v422
        %v711 = vunpack.c.l.b16 %v423
        %v712 = vunpack.c.l.b16 %v424
        %v713 = vunpack.c.l.b16 %v425
        %v714 = vunpack.c.l.b16 %v426
        %v715 = vunpack.c.l.b16 %v427
        %v716 = vunpack.c.l.b16 %v428
        %v717 = vunpack.c.l.b16 %v429
        %v718 = vunpack.c.l.b16 %v430
        %v719 = vunpack.c.l.b16 %v431
        %v720 = vunpack.c.l.b16 %v432
        %v721 = vunpack.c.l.b16 %v433
        %v722 = vunpack.c.l.b16 %v434
        %v723 = vunpack.c.l.b16 %v435
        %v724 = vunpack.c.l.b16 %v436
        %v725 = vunpack.c.l.b16 %v437
        %v726 = vunpack.c.l.b16 %v438
        %v727 = vunpack.c.l.b16 %v439
        %v728 = vunpack.c.l.b16 %v440
        %v729 = vunpack.c.l.b16 %v441
        %v730 = vunpack.c.l.b16 %v442
        %v731 = vunpack.c.l.b16 %v443
        %v732 = vunpack.c.l.b16 %v444
        %v733 = vunpack.c.l.b16 %v445
        %v734 = vunpack.c.l.b16 %v446
        %v735 = vunpack.c.l.b16 %v447
        %v736 = vunpack.c.l.b16 %v448
        %v737 = vunpack.c.l.b16 %v449
        %v738 = vunpack.c.l.b16 %v450
        %v739 = vunpack.c.l.b16 %v451
        %v740 = vunpack.c.l.b16 %v452
        %v741 = vunpack.c.l.b16 %v453
        %v742 = vunpack.c.l.b16 %v454
        %v743 = vpack.c.b16 %v680, %v679
        %v744 = vpack.c.b16 %v682, %v681
        %v745 = vpack.c.b16 %v684, %v683
        %v746 = vpack.c.b16 %v686, %v685
        %v747 = vpack.c.b16 %v688, %v687
        %v748 = vpack.c.b16 %v690, %v689
        %v749 = vpack.c.b16 %v692, %v691
        %v750 = vpack.c.b16 %v694, %v693
        %v751 = vpack.c.b16 %v696, %v695
        %v752 = vpack.c.b16 %v698, %v697
        %v753 = vpack.c.b16 %v700, %v699
        %v754 = vpack.c.b16 %v702, %v701
        %v755 = vpack.c.b16 %v704, %v703
        %v756 = vpack.c.b16 %v706, %v705
        %v757 = vpack.c.b16 %v708, %v707
        %v758 = vpack.c.b16 %v710, %v709
        %v759 = vpack.c.b16 %v712, %v711
        %v760 = vpack.c.b16 %v714, %v713
        %v761 = vpack.c.b16 %v716, %v715
        %v762 = vpack.c.b16 %v718, %v717
        %v763 = vpack.c.b16 %v720, %v719
        %v764 = vpack.c.b16 %v722, %v721
        %v765 = vpack.c.b16 %v724, %v723
        %v766 = vpack.c.b16 %v726, %v725
        %v767 = vpack.c.b16 %v728, %v727
        %v768 = vpack.c.b16 %v730, %v729
        %v769 = vpack.c.b16 %v732, %v731
        %v770 = vpack.c.b16 %v734, %v733
        %v771 = vpack.c.b16 %v736, %v735
        %v772 = vpack.c.b16 %v738, %v737
        %v773 = vpack.c.b16 %v740, %v739
        %v774 = vpack.c.b16 %v742, %v741
        %807 = vmatprep.subr.bf16.mxu0 0
        %808 = vmatpush1.bf16.msra.mxu0 %v743
        %809 = vmatprep.subr.bf16.mxu0 0
        %810 = vmatpush1.bf16.msra.mxu0 %v744
        %811 = vmatprep.subr.bf16.mxu0 0
        %812 = vmatpush1.bf16.msra.mxu0 %v745
        %813 = vmatprep.subr.bf16.mxu0 0
        %814 = vmatpush1.bf16.msra.mxu0 %v746
        %815 = vmatprep.subr.bf16.mxu0 0
        %816 = vmatpush1.bf16.msra.mxu0 %v747
        %817 = vmatprep.subr.bf16.mxu0 0
        %818 = vmatpush1.bf16.msra.mxu0 %v748
        %819 = vmatprep.subr.bf16.mxu0 0
        %820 = vmatpush1.bf16.msra.mxu0 %v749
        %821 = vmatprep.subr.bf16.mxu0 0
        %822 = vmatpush1.bf16.msra.mxu0 %v750
        %823 = vmatprep.subr.bf16.mxu0 0
        %824 = vmatpush1.bf16.msra.mxu0 %v751
        %825 = vmatprep.subr.bf16.mxu0 0
        %826 = vmatpush1.bf16.msra.mxu0 %v752
        %827 = vmatprep.subr.bf16.mxu0 0
        %828 = vmatpush1.bf16.msra.mxu0 %v753
        %829 = vmatprep.subr.bf16.mxu0 0
        %830 = vmatpush1.bf16.msra.mxu0 %v754
        %831 = vmatprep.subr.bf16.mxu0 0
        %832 = vmatpush1.bf16.msra.mxu0 %v755
        %833 = vmatprep.subr.bf16.mxu0 0
        %834 = vmatpush1.bf16.msra.mxu0 %v756
        %835 = vmatprep.subr.bf16.mxu0 0
        %836 = vmatpush1.bf16.msra.mxu0 %v757
        %837 = vmatprep.subr.bf16.mxu0 0
        %838 = vmatpush1.bf16.msra.mxu0 %v758
        %839 = vmatprep.mubr.bf16.mxu0 %v552
        %840 = vmatmul.mubr.bf16.gmra.mrb[0].mxu0 %v551
        %v841 = vpop.f32.mrb[0].mxu0
        %v842 = vadd.f32 0.0, %v841
        %v843 = vpop.f32.mrb[0].mxu0
        %v844 = vpop.f32.mrb[0].mxu0
        %v845 = vadd.f32 0.0, %v844
        %v846 = vpop.f32.mrb[0].mxu0
        %847 = vmatprep.mubr.bf16.mxu0 %v556
        %848 = vmatmul.mubr.bf16.gmra.mrb[0].mxu0 %v555
        %v849 = vpop.f32.mrb[0].mxu0
        %v850 = vadd.f32 0.0, %v849
        %v851 = vpop.f32.mrb[0].mxu0
        %v852 = vpop.f32.mrb[0].mxu0
        %v853 = vadd.f32 0.0, %v852
        %v854 = vpop.f32.mrb[0].mxu0
        %855 = vmatprep.mubr.bf16.mxu0 %v560
        %856 = vmatmul.mubr.bf16.gmra.mrb[0].mxu0 %v559
        %v857 = vpop.f32.mrb[0].mxu0
        %v858 = vadd.f32 0.0, %v857
        %v859 = vpop.f32.mrb[0].mxu0
        %v860 = vpop.f32.mrb[0].mxu0
        %v861 = vadd.f32 0.0, %v860
        %v862 = vpop.f32.mrb[0].mxu0
        %863 = vmatprep.mubr.bf16.mxu0 %v564
        %864 = vmatmul.mubr.bf16.gmra.mrb[0].mxu0 %v563
        %v865 = vpop.f32.mrb[0].mxu0
        %v866 = vadd.f32 0.0, %v865
        %v867 = vpop.f32.mrb[0].mxu0
        %v868 = vpop.f32.mrb[0].mxu0
        %v869 = vadd.f32 0.0, %v868
        %v870 = vpop.f32.mrb[0].mxu0
        %871 = vmatprep.mubr.bf16.mxu0 %v568
        %872 = vmatmul.mubr.bf16.gmra.mrb[0].mxu0 %v567
        %v873 = vpop.f32.mrb[0].mxu0
        %v874 = vadd.f32 0.0, %v873
        %v875 = vpop.f32.mrb[0].mxu0
        %v876 = vpop.f32.mrb[0].mxu0
        %v877 = vadd.f32 0.0, %v876
        %v878 = vpop.f32.mrb[0].mxu0
        %879 = vmatprep.mubr.bf16.mxu0 %v572
        %880 = vmatmul.mubr.bf16.gmra.mrb[0].mxu0 %v571
        %v881 = vpop.f32.mrb[0].mxu0
        %v882 = vadd.f32 0.0, %v881
        %v883 = vpop.f32.mrb[0].mxu0
        %v884 = vpop.f32.mrb[0].mxu0
        %v885 = vadd.f32 0.0, %v884
        %v886 = vpop.f32.mrb[0].mxu0
        %887 = vmatprep.mubr.bf16.mxu0 %v576
        %888 = vmatmul.mubr.bf16.gmra.mrb[0].mxu0 %v575
        %v889 = vpop.f32.mrb[0].mxu0
        %v890 = vadd.f32 0.0, %v889
        %v891 = vpop.f32.mrb[0].mxu0
        %v892 = vpop.f32.mrb[0].mxu0
        %v893 = vadd.f32 0.0, %v892
        %v894 = vpop.f32.mrb[0].mxu0
        %895 = vmatprep.mubr.bf16.mxu0 %v580
        %896 = vmatmul.mubr.bf16.gmra.mrb[0].mxu0 %v579
        %v897 = vpop.f32.mrb[0].mxu0
        %v898 = vadd.f32 0.0, %v897
        %v899 = vpop.f32.mrb[0].mxu0
        %v900 = vpop.f32.mrb[0].mxu0
        %v901 = vadd.f32 0.0, %v900
        %v902 = vpop.f32.mrb[0].mxu0
        %903 = vdwg.mxu0
        %904 = vmatprep.subr.bf16.mxu0 0
        %905 = vmatpush1.bf16.msra.mxu0 %v759
        %906 = vmatprep.subr.bf16.mxu0 0
        %907 = vmatpush1.bf16.msra.mxu0 %v760
        %908 = vmatprep.subr.bf16.mxu0 0
        %909 = vmatpush1.bf16.msra.mxu0 %v761
        %910 = vmatprep.subr.bf16.mxu0 0
        %911 = vmatpush1.bf16.msra.mxu0 %v762
        %912 = vmatprep.subr.bf16.mxu0 0
        %913 = vmatpush1.bf16.msra.mxu0 %v763
        %914 = vmatprep.subr.bf16.mxu0 0
        %915 = vmatpush1.bf16.msra.mxu0 %v764
        %916 = vmatprep.subr.bf16.mxu0 0
        %917 = vmatpush1.bf16.msra.mxu0 %v765
        %918 = vmatprep.subr.bf16.mxu0 0
        %919 = vmatpush1.bf16.msra.mxu0 %v766
        %920 = vmatprep.subr.bf16.mxu0 0
        %921 = vmatpush1.bf16.msra.mxu0 %v767
        %922 = vmatprep.subr.bf16.mxu0 0
        %923 = vmatpush1.bf16.msra.mxu0 %v768
        %924 = vmatprep.subr.bf16.mxu0 0
        %925 = vmatpush1.bf16.msra.mxu0 %v769
        %926 = vmatprep.subr.bf16.mxu0 0
        %927 = vmatpush1.bf16.msra.mxu0 %v770
        %928 = vmatprep.subr.bf16.mxu0 0
        %929 = vmatpush1.bf16.msra.mxu0 %v771
        %930 = vmatprep.subr.bf16.mxu0 0
        %931 = vmatpush1.bf16.msra.mxu0 %v772
        %932 = vmatprep.subr.bf16.mxu0 0
        %933 = vmatpush1.bf16.msra.mxu0 %v773
        %934 = vmatprep.subr.bf16.mxu0 0
        %935 = vmatpush1.bf16.msra.mxu0 %v774
        %936 = vmatprep.mubr.bf16.mxu0 %v554
        %937 = vmatmul.mubr.bf16.gmra.mrb[0].mxu0 %v553
        %v938 = vpop.f32.mrb[0].mxu0
        %v939 = vadd.f32 %v842, %v938
        %v940 = vpop.f32.mrb[0].mxu0
        %v941 = vpop.f32.mrb[0].mxu0
        %v942 = vadd.f32 %v845, %v941
        %v943 = vpop.f32.mrb[0].mxu0
        %944 = vmatprep.mubr.bf16.mxu0 %v558
        %945 = vmatmul.mubr.bf16.gmra.mrb[0].mxu0 %v557
        %v946 = vpop.f32.mrb[0].mxu0
        %v947 = vadd.f32 %v850, %v946
        %v948 = vpop.f32.mrb[0].mxu0
        %v949 = vpop.f32.mrb[0].mxu0
        %v950 = vadd.f32 %v853, %v949
        %v951 = vpop.f32.mrb[0].mxu0
        %952 = vmatprep.mubr.bf16.mxu0 %v562
        %953 = vmatmul.mubr.bf16.gmra.mrb[0].mxu0 %v561
        %v954 = vpop.f32.mrb[0].mxu0
        %v955 = vadd.f32 %v858, %v954
        %v956 = vpop.f32.mrb[0].mxu0
        %v957 = vpop.f32.mrb[0].mxu0
        %v958 = vadd.f32 %v861, %v957
        %v959 = vpop.f32.mrb[0].mxu0
        %960 = vmatprep.mubr.bf16.mxu0 %v566
        %961 = vmatmul.mubr.bf16.gmra.mrb[0].mxu0 %v565
        %v962 = vpop.f32.mrb[0].mxu0
        %v963 = vadd.f32 %v866, %v962
        %v964 = vpop.f32.mrb[0].mxu0
        %v965 = vpop.f32.mrb[0].mxu0
        %v966 = vadd.f32 %v869, %v965
        %v967 = vpop.f32.mrb[0].mxu0
        %968 = vmatprep.mubr.bf16.mxu0 %v570
        %969 = vmatmul.mubr.bf16.gmra.mrb[0].mxu0 %v569
        %v970 = vpop.f32.mrb[0].mxu0
        %v971 = vadd.f32 %v874, %v970
        %v972 = vpop.f32.mrb[0].mxu0
        %v973 = vpop.f32.mrb[0].mxu0
        %v974 = vadd.f32 %v877, %v973
        %v975 = vpop.f32.mrb[0].mxu0
        %976 = vmatprep.mubr.bf16.mxu0 %v574
        %977 = vmatmul.mubr.bf16.gmra.mrb[0].mxu0 %v573
        %v978 = vpop.f32.mrb[0].mxu0
        %v979 = vadd.f32 %v882, %v978
        %v980 = vpop.f32.mrb[0].mxu0
        %v981 = vpop.f32.mrb[0].mxu0
        %v982 = vadd.f32 %v885, %v981
        %v983 = vpop.f32.mrb[0].mxu0
        %984 = vmatprep.mubr.bf16.mxu0 %v578
        %985 = vmatmul.mubr.bf16.gmra.mrb[0].mxu0 %v577
        %v986 = vpop.f32.mrb[0].mxu0
        %v987 = vadd.f32 %v890, %v986
        %v988 = vpop.f32.mrb[0].mxu0
        %v989 = vpop.f32.mrb[0].mxu0
        %v990 = vadd.f32 %v893, %v989
        %v991 = vpop.f32.mrb[0].mxu0
        %992 = vmatprep.mubr.bf16.mxu0 %v582
        %993 = vmatmul.mubr.bf16.gmra.mrb[0].mxu0 %v581
        %v994 = vpop.f32.mrb[0].mxu0
        %v995 = vadd.f32 %v898, %v994
        %v996 = vpop.f32.mrb[0].mxu0
        %v997 = vpop.f32.mrb[0].mxu0
        %v998 = vadd.f32 %v901, %v997
        %v999 = vpop.f32.mrb[0].mxu0
        %1000 = vdwg.mxu0
        %v1001 = vadd.f32 %v343, %v939
        %v1002 = vadd.f32 %v344, %v942
        %v1003 = vadd.f32 %v345, %v947
        %v1004 = vadd.f32 %v346, %v950
        %v1005 = vadd.f32 %v347, %v955
        %v1006 = vadd.f32 %v348, %v958
        %v1007 = vadd.f32 %v349, %v963
        %v1008 = vadd.f32 %v350, %v966
        %v1009 = vadd.f32 %v351, %v971
        %v1010 = vadd.f32 %v352, %v974
        %v1011 = vadd.f32 %v353, %v979
        %v1012 = vadd.f32 %v354, %v982
        %v1013 = vadd.f32 %v355, %v987
        %v1014 = vadd.f32 %v356, %v990
        %v1015 = vadd.f32 %v357, %v995
        %v1016 = vadd.f32 %v358, %v998
        %1017 = vst [vmem:[#allocation2] sm:$0xff] %v1001
        %1018 = vst [vmem:[#allocation2 + $0x8] sm:$0xff] %v1002
        %1019 = vst [vmem:[#allocation2 + $0x10] sm:$0xff] %v1003
        %1020 = vst [vmem:[#allocation2 + $0x18] sm:$0xff] %v1004
        %1021 = vst [vmem:[#allocation2 + $0x20] sm:$0xff] %v1005
        %1022 = vst [vmem:[#allocation2 + $0x28] sm:$0xff] %v1006
        %1023 = vst [vmem:[#allocation2 + $0x30] sm:$0xff] %v1007
        %1024 = vst [vmem:[#allocation2 + $0x38] sm:$0xff] %v1008
        %1025 = vst [vmem:[#allocation2 + $0x40] sm:$0xff] %v1009
        %1026 = vst [vmem:[#allocation2 + $0x48] sm:$0xff] %v1010
        %1027 = vst [vmem:[#allocation2 + $0x50] sm:$0xff] %v1011
        %1028 = vst [vmem:[#allocation2 + $0x58] sm:$0xff] %v1012
        %1029 = vst [vmem:[#allocation2 + $0x60] sm:$0xff] %v1013
        %1030 = vst [vmem:[#allocation2 + $0x68] sm:$0xff] %v1014
        %1031 = vst [vmem:[#allocation2 + $0x70] sm:$0xff] %v1015
        %1032 = vst [vmem:[#allocation2 + $0x78] sm:$0xff] %v1016
        %p1033 = scmp.eq.s32.totalorder %s20, 1
        // Predicated region
        $region64: #{discriminator_forward.6} parent=54 // pred_check
          %p1034 = pneg %p1033
        $region65: #{discriminator_forward.6} parent=54 // pred_check_branch
          %1036 = sbr.rel (%p1034) target = $region67
        $region66: #{discriminator_forward.6} parent=54 // pred_region
          %v1037 = vld [vmem:[#allocation2] sm:$0xff]
          %v1038 = vld [vmem:[#allocation2 + $0x8] sm:$0xff]
          %v1039 = vld [vmem:[#allocation2 + $0x10] sm:$0xff]
          %v1040 = vld [vmem:[#allocation2 + $0x18] sm:$0xff]
          %v1041 = vld [vmem:[#allocation2 + $0x20] sm:$0xff]
          %v1042 = vld [vmem:[#allocation2 + $0x28] sm:$0xff]
          %v1043 = vld [vmem:[#allocation2 + $0x30] sm:$0xff]
          %v1044 = vld [vmem:[#allocation2 + $0x38] sm:$0xff]
          %v1045 = vld [vmem:[#allocation2 + $0x40] sm:$0xff]
          %v1046 = vld [vmem:[#allocation2 + $0x48] sm:$0xff]
          %v1047 = vld [vmem:[#allocation2 + $0x50] sm:$0xff]
          %v1048 = vld [vmem:[#allocation2 + $0x58] sm:$0xff]
          %v1049 = vld [vmem:[#allocation2 + $0x60] sm:$0xff]
          %v1050 = vld [vmem:[#allocation2 + $0x68] sm:$0xff]
          %v1051 = vld [vmem:[#allocation2 + $0x70] sm:$0xff]
          %v1052 = vld [vmem:[#allocation2 + $0x78] sm:$0xff]
          %v1053 = vld [vmem:[%s2] sm:$0x1]
          %v1055 = vlaneseq
          %v1056 = vshrl.u32 %v1055, 7
          %v1057 = vsub.s32 0, %v1056
          %v1058 = vrot.slane %v1053, %v1057
          %v1060 = vmul.f32 %v1037, %v1058
          %v1061 = vmul.f32 %v1038, %v1058
          %v1062 = vmul.f32 %v1039, %v1058
          %v1063 = vmul.f32 %v1040, %v1058
          %v1064 = vmul.f32 %v1041, %v1058
          %v1065 = vmul.f32 %v1042, %v1058
          %v1066 = vmul.f32 %v1043, %v1058
          %v1067 = vmul.f32 %v1044, %v1058
          %v1068 = vmul.f32 %v1045, %v1058
          %v1069 = vmul.f32 %v1046, %v1058
          %v1070 = vmul.f32 %v1047, %v1058
          %v1071 = vmul.f32 %v1048, %v1058
          %v1072 = vmul.f32 %v1049, %v1058
          %v1073 = vmul.f32 %v1050, %v1058
          %v1074 = vmul.f32 %v1051, %v1058
          %v1075 = vmul.f32 %v1052, %v1058
          %v1076 = vld [vmem:[%s3] sm:$0x1]
          %v1078 = vlaneseq
          %v1079 = vshrl.u32 %v1078, 7
          %v1080 = vsub.s32 0, %v1079
          %v1081 = vrot.slane %v1076, %v1080
          %v1083 = vadd.f32 %v1060, %v1081
          %v1084 = vadd.f32 %v1061, %v1081
          %v1085 = vadd.f32 %v1062, %v1081
          %v1086 = vadd.f32 %v1063, %v1081
          %v1087 = vadd.f32 %v1064, %v1081
          %v1088 = vadd.f32 %v1065, %v1081
          %v1089 = vadd.f32 %v1066, %v1081
          %v1090 = vadd.f32 %v1067, %v1081
          %v1091 = vadd.f32 %v1068, %v1081
          %v1092 = vadd.f32 %v1069, %v1081
          %v1093 = vadd.f32 %v1070, %v1081
          %v1094 = vadd.f32 %v1071, %v1081
          %v1095 = vadd.f32 %v1072, %v1081
          %v1096 = vadd.f32 %v1073, %v1081
          %v1097 = vadd.f32 %v1074, %v1081
          %v1098 = vadd.f32 %v1075, %v1081
          %vm1099 = vcmp.gt.f32.partialorder %v1083, 0.0
          %vm1100 = vcmp.gt.f32.partialorder %v1084, 0.0
          %vm1101 = vcmp.gt.f32.partialorder %v1085, 0.0
          %vm1102 = vcmp.gt.f32.partialorder %v1086, 0.0
          %vm1103 = vcmp.gt.f32.partialorder %v1087, 0.0
          %vm1104 = vcmp.gt.f32.partialorder %v1088, 0.0
          %vm1105 = vcmp.gt.f32.partialorder %v1089, 0.0
          %vm1106 = vcmp.gt.f32.partialorder %v1090, 0.0
          %vm1107 = vcmp.gt.f32.partialorder %v1091, 0.0
          %vm1108 = vcmp.gt.f32.partialorder %v1092, 0.0
          %vm1109 = vcmp.gt.f32.partialorder %v1093, 0.0
          %vm1110 = vcmp.gt.f32.partialorder %v1094, 0.0
          %vm1111 = vcmp.gt.f32.partialorder %v1095, 0.0
          %vm1112 = vcmp.gt.f32.partialorder %v1096, 0.0
          %vm1113 = vcmp.gt.f32.partialorder %v1097, 0.0
          %vm1114 = vcmp.gt.f32.partialorder %v1098, 0.0
          %v1115 = vmul.f32 %v1083, 0.2
          %v1116 = vmul.f32 %v1084, 0.2
          %v1117 = vmul.f32 %v1085, 0.2
          %v1118 = vmul.f32 %v1086, 0.2
          %v1119 = vmul.f32 %v1087, 0.2
          %v1120 = vmul.f32 %v1088, 0.2
          %v1121 = vmul.f32 %v1089, 0.2
          %v1122 = vmul.f32 %v1090, 0.2
          %v1123 = vmul.f32 %v1091, 0.2
          %v1124 = vmul.f32 %v1092, 0.2
          %v1125 = vmul.f32 %v1093, 0.2
          %v1126 = vmul.f32 %v1094, 0.2
          %v1127 = vmul.f32 %v1095, 0.2
          %v1128 = vmul.f32 %v1096, 0.2
          %v1129 = vmul.f32 %v1097, 0.2
          %v1130 = vmul.f32 %v1098, 0.2
          %v1131 = vsel %vm1099, %v1083, %v1115
          %v1132 = vsel %vm1100, %v1084, %v1116
          %v1133 = vsel %vm1101, %v1085, %v1117
          %v1134 = vsel %vm1102, %v1086, %v1118
          %v1135 = vsel %vm1103, %v1087, %v1119
          %v1136 = vsel %vm1104, %v1088, %v1120
          %v1137 = vsel %vm1105, %v1089, %v1121
          %v1138 = vsel %vm1106, %v1090, %v1122
          %v1139 = vsel %vm1107, %v1091, %v1123
          %v1140 = vsel %vm1108, %v1092, %v1124
          %v1141 = vsel %vm1109, %v1093, %v1125
          %v1142 = vsel %vm1110, %v1094, %v1126
          %v1143 = vsel %vm1111, %v1095, %v1127
          %v1144 = vsel %vm1112, %v1096, %v1128
          %v1145 = vsel %vm1113, %v1097, %v1129
          %v1146 = vsel %vm1114, %v1098, %v1130
          %v1147 = vpack.c.bf16 %v1132, %v1131
          %v1148 = vpack.c.bf16 %v1134, %v1133
          %v1149 = vpack.c.bf16 %v1136, %v1135
          %v1150 = vpack.c.bf16 %v1138, %v1137
          %v1151 = vpack.c.bf16 %v1140, %v1139
          %v1152 = vpack.c.bf16 %v1142, %v1141
          %v1153 = vpack.c.bf16 %v1144, %v1143
          %v1154 = vpack.c.bf16 %v1146, %v1145
          %v1163 = vunpack.c.l.b16 %v1147
          %v1164 = vunpack.c.h.b16 %v1147
          %v1165 = vunpack.c.l.b16 %v1148
          %v1166 = vunpack.c.h.b16 %v1148
          %v1167 = vunpack.c.l.b16 %v1149
          %v1168 = vunpack.c.h.b16 %v1149
          %v1169 = vunpack.c.l.b16 %v1150
          %v1170 = vunpack.c.h.b16 %v1150
          %v1171 = vunpack.c.l.b16 %v1151
          %v1172 = vunpack.c.h.b16 %v1151
          %v1173 = vunpack.c.l.b16 %v1152
          %v1174 = vunpack.c.h.b16 %v1152
          %v1175 = vunpack.c.l.b16 %v1153
          %v1176 = vunpack.c.h.b16 %v1153
          %v1177 = vunpack.c.l.b16 %v1154
          %v1178 = vunpack.c.h.b16 %v1154
          %v1179 = vpack.c.b16 %v1163, %v1163
          %v1180 = vpack.c.b16 %v1164, %v1164
          %v1181 = vpack.c.b16 %v1165, %v1165
          %v1182 = vpack.c.b16 %v1166, %v1166
          %v1183 = vpack.c.b16 %v1167, %v1167
          %v1184 = vpack.c.b16 %v1168, %v1168
          %v1185 = vpack.c.b16 %v1169, %v1169
          %v1186 = vpack.c.b16 %v1170, %v1170
          %v1187 = vpack.c.b16 %v1171, %v1171
          %v1188 = vpack.c.b16 %v1172, %v1172
          %v1189 = vpack.c.b16 %v1173, %v1173
          %v1190 = vpack.c.b16 %v1174, %v1174
          %v1191 = vpack.c.b16 %v1175, %v1175
          %v1192 = vpack.c.b16 %v1176, %v1176
          %v1193 = vpack.c.b16 %v1177, %v1177
          %v1194 = vpack.c.b16 %v1178, %v1178
          %1211 = vst [vmem:[%s320] sm:$0xf] %v1179
          %1212 = vst [vmem:[%s320 + $0x4] sm:$0xf] %v1180
          %1213 = vst [vmem:[%s320 + $0x8] sm:$0xf] %v1181
          %1214 = vst [vmem:[%s320 + $0xc] sm:$0xf] %v1182
          %1215 = vst [vmem:[%s320 + $0x10] sm:$0xf] %v1183
          %1216 = vst [vmem:[%s320 + $0x14] sm:$0xf] %v1184
          %1217 = vst [vmem:[%s320 + $0x18] sm:$0xf] %v1185
          %1218 = vst [vmem:[%s320 + $0x1c] sm:$0xf] %v1186
          %1219 = vst [vmem:[%s320 + $0x20] sm:$0xf] %v1187
          %1220 = vst [vmem:[%s320 + $0x24] sm:$0xf] %v1188
          %1221 = vst [vmem:[%s320 + $0x28] sm:$0xf] %v1189
          %1222 = vst [vmem:[%s320 + $0x2c] sm:$0xf] %v1190
          %1223 = vst [vmem:[%s320 + $0x30] sm:$0xf] %v1191
          %1224 = vst [vmem:[%s320 + $0x34] sm:$0xf] %v1192
          %1225 = vst [vmem:[%s320 + $0x38] sm:$0xf] %v1193
          %1226 = vst [vmem:[%s320 + $0x3c] sm:$0xf] %v1194
        $region67: #{discriminator_forward.6} parent=54 // pred_fallthru
          _
        %s1227 = smul.u32 16, %s19
        %p1228 = scmp.lt.s32.totalorder %s1227, 15
        %s1229 = scalar_select %p1228, %s1227, 15
        %s1230 = smul.addr %s1229, 4
        %s1231 = scalar_lea.vmem %s4, %s1230
        // Predicated region
        $region68: #{discriminator_forward.6} parent=54 // pred_check
          %p1232 = pneg %p141
        $region69: #{discriminator_forward.6} parent=54 // pred_check_branch
          %1234 = sbr.rel (%p1232) target = $region71
        $region70: #{discriminator_forward.6} parent=54 // pred_region
          %s1235 = smul.u32 16, %s19
        $region71: #{discriminator_forward.6} parent=54 // pred_fallthru
          _
        // Predicated region
        $region72: #{discriminator_forward.6} parent=54 // pred_check
          %p1236 = pneg %p141
        $region73: #{discriminator_forward.6} parent=54 // pred_check_branch
          %1238 = sbr.rel (%p1236) target = $region75
        $region74: #{discriminator_forward.6} parent=54 // pred_region
          %s1239 = smul.u32 16, %s19
          %p1240 = scmp.lt.s32.totalorder %s1239, 15
          %s1241 = scalar_select %p1240, %s1239, 15
          %s1242 = smul.addr %s1241, 4
          %s1243 = scalar_lea.vmem %s4, %s1242
        $region75: #{discriminator_forward.6} parent=54 // pred_fallthru
          _
      $region55: #{discriminator_forward.6} parent=5 // pred_fallthru
        _
      %p1244 = scmp.le.s32.totalorder 2, %s10
      // Predicated region
      $region76: #{discriminator_forward.6} parent=5 // pred_check
        %p1245 = pneg %p1244
      $region77: #{discriminator_forward.6} parent=5 // pred_check_branch
        %1247 = sbr.rel (%p1245) target = $region79
      $region78: #{discriminator_forward.6} parent=5 // pred_region
        %s1248 = ssub.s32 %s10, 2
      $region79: #{discriminator_forward.6} parent=5 // pred_fallthru
        _
    $region6: #{discriminator_forward.6} parent=1 // loop_footer
      %s14 = sadd.s32 1, %s10
    $region7: #{discriminator_forward.6} parent=1 // loop_footer_branch
      %9 = sbr.rel target = $region3
    $region8: #{discriminator_forward.6} parent=1 // loop_exit
      _

// kernel: discriminator_forward.7
$region0: #{discriminator_forward.7}
  #allocation0 [shape = 'u32[]', space=smem, size = 0x4, offset = 0x4, fixed_abs, tag = 'smem constant byte address 0x4 - core index']
  #allocation1 [shape = 'u32[144,128]{1,0:T(1,128)}', space=vmem, size = 0x12000, scoped, tag = 'internal scratch']
  #allocation2 [shape = 'f32[32,256]{1,0:T(8,128)}', space=vmem, size = 0x8000, scoped, tag = 'scratch operand']
  %s0 = inlined_call_operand.vmem [shape: bf16[32,2048], index: 0, kind: input, shape index: {}]
  %s1 = inlined_call_operand.vmem [shape: bf16[2048,256], index: 1, kind: input, shape index: {}]
  %s2 = inlined_call_operand.vmem [shape: f32[1,256], index: 2, kind: input, shape index: {}]
  %s3 = inlined_call_operand.vmem [shape: f32[1,256], index: 3, kind: input, shape index: {}]
  %s4 = inlined_call_operand.vmem [shape: bf16[32,256], index: 4, kind: output, shape index: {}]
  %s5 = sld [smem:[#allocation0]]
  $region80: #{discriminator_forward.7} parent=0
    _
  %s7 = ssub.s32 1, %s5
  %s8 = scalar_select 0, %s7, %s5
  $region1: #{discriminator_forward.7} parent=0
    #allocation3 [shape = 'u8[65536]{0}', space=vmem, size = 0x10000, scoped, tag = 'input window, operand 0']
    loop: start=0, step=1, limit=6
    $region2: #{discriminator_forward.7} parent=1 // loop_pre_header
      _
    $region3: #{discriminator_forward.7} parent=1 // loop_header
      %s10 = sphi 0, %s14
      %p11 = scmp.ge.s32.totalorder %s10, 6
      %s17 = sphi 0, %s29
      %s18 = sphi 0, %s25
      %s19 = sphi 0, %s17
      %s20 = sphi 0, %s18
      %s21 = sphi 0, %s19
      %s22 = sphi 0, %s20
      %s34 = sphi 0, %s36
      %s37 = sphi 0, %s34
      %s38 = sphi 0, %s37
      %s54 = sphi 0, %s38
      %s60 = sphi 0, %s62
      %s63 = sphi 0, %s60
      %s64 = sphi 0, %s63
      %s80 = sphi 0, %s64
      %s84 = sphi 0, %s84
      %s86 = sphi 0, %s84
      %s87 = sphi 0, %s86
      %s101 = sphi 0, %s87
      %s105 = sphi 0, %s105
      %s107 = sphi 0, %s105
      %s108 = sphi 0, %s107
      %s122 = sphi 0, %s108
      %s128 = sphi 0, %s130
      %s131 = sphi 0, %s128
      %s132 = sphi 0, %s131
      %s148 = sphi 0, %s132
    $region4: #{discriminator_forward.7} parent=1 // loop_header_branch
      %13 = sbr.rel (%p11) target = $region8
    $region5: #{discriminator_forward.7} parent=1 // loop_body
      %s15 = ssub.s32 %s10, 1
      %s16 = ssub.s32 %s10, 2
      %s23 = sadd.s32 1, %s18
      %p24 = scmp.ge.s32.totalorder %s23, 4
      %s25 = scalar_select %p24, 0, %s23
      %s26 = sadd.s32 1, %s17
      %s27 = scalar_select %p24, %s26, %s17
      %p28 = scmp.ge.s32.totalorder %s27, 1
      %s29 = scalar_select %p28, 0, %s27
      %s30 = ssub.s32 %s17, %s29
      %s31 = ssub.s32 %s18, %s25
      %s32 = sor.u32 %s30, %s31
      %p33 = scmp.eq.s32.totalorder %s32, 0
      %s35 = sadd.s32 %s34, 1
      %s36 = scalar_select %p33, %s34, %s35
      %p39 = pneg %p33
      %p40 = scmp.eq.s32.totalorder %s10, 3
      %p41 = por %p39, %p40
      %p42 = scmp.ne.s32.totalorder %s34, %s37
      %p43 = scmp.eq.s32.totalorder %s10, 0
      %p44 = por %p42, %p43
      %p45 = scmp.ne.s32.totalorder %s34, %s37
      %p46 = scmp.eq.s32.totalorder %s15, 3
      %p47 = por %p45, %p46
      %p48 = scmp.ne.s32.totalorder %s37, %s38
      %p49 = scmp.eq.s32.totalorder %s15, 0
      %p50 = por %p48, %p49
      %p51 = scmp.ne.s32.totalorder %s37, %s38
      %p52 = scmp.eq.s32.totalorder %s16, 3
      %p53 = por %p51, %p52
      %p55 = scmp.ne.s32.totalorder %s38, %s54
      %p56 = scmp.eq.s32.totalorder %s16, 0
      %p57 = por %p55, %p56
      %s58 = ssub.s32 %s18, %s25
      %p59 = scmp.eq.s32.totalorder %s58, 0
      %s61 = sadd.s32 %s60, 1
      %s62 = scalar_select %p59, %s60, %s61
      %p65 = pneg %p59
      %p66 = scmp.eq.s32.totalorder %s10, 3
      %p67 = por %p65, %p66
      %p68 = scmp.ne.s32.totalorder %s60, %s63
      %p69 = scmp.eq.s32.totalorder %s10, 0
      %p70 = por %p68, %p69
      %p71 = scmp.ne.s32.totalorder %s60, %s63
      %p72 = scmp.eq.s32.totalorder %s15, 3
      %p73 = por %p71, %p72
      %p74 = scmp.ne.s32.totalorder %s63, %s64
      %p75 = scmp.eq.s32.totalorder %s15, 0
      %p76 = por %p74, %p75
      %p77 = scmp.ne.s32.totalorder %s63, %s64
      %p78 = scmp.eq.s32.totalorder %s16, 3
      %p79 = por %p77, %p78
      %p81 = scmp.ne.s32.totalorder %s64, %s80
      %p82 = scmp.eq.s32.totalorder %s16, 0
      %p83 = por %p81, %p82
      %s85 = sadd.s32 %s84, 1
      %p88 = scmp.eq.s32.totalorder %s10, 3
      %p89 = scmp.ne.s32.totalorder %s84, %s86
      %p90 = scmp.eq.s32.totalorder %s10, 0
      %p91 = por %p89, %p90
      %p92 = scmp.ne.s32.totalorder %s84, %s86
      %p93 = scmp.eq.s32.totalorder %s15, 3
      %p94 = por %p92, %p93
      %p95 = scmp.ne.s32.totalorder %s86, %s87
      %p96 = scmp.eq.s32.totalorder %s15, 0
      %p97 = por %p95, %p96
      %p98 = scmp.ne.s32.totalorder %s86, %s87
      %p99 = scmp.eq.s32.totalorder %s16, 3
      %p100 = por %p98, %p99
      %p102 = scmp.ne.s32.totalorder %s87, %s101
      %p103 = scmp.eq.s32.totalorder %s16, 0
      %p104 = por %p102, %p103
      %s106 = sadd.s32 %s105, 1
      %p109 = scmp.eq.s32.totalorder %s10, 3
      %p110 = scmp.ne.s32.totalorder %s105, %s107
      %p111 = scmp.eq.s32.totalorder %s10, 0
      %p112 = por %p110, %p111
      %p113 = scmp.ne.s32.totalorder %s105, %s107
      %p114 = scmp.eq.s32.totalorder %s15, 3
      %p115 = por %p113, %p114
      %p116 = scmp.ne.s32.totalorder %s107, %s108
      %p117 = scmp.eq.s32.totalorder %s15, 0
      %p118 = por %p116, %p117
      %p119 = scmp.ne.s32.totalorder %s107, %s108
      %p120 = scmp.eq.s32.totalorder %s16, 3
      %p121 = por %p119, %p120
      %p123 = scmp.ne.s32.totalorder %s108, %s122
      %p124 = scmp.eq.s32.totalorder %s16, 0
      %p125 = por %p123, %p124
      %s126 = ssub.s32 %s17, %s29
      %p127 = scmp.eq.s32.totalorder %s126, 0
      %s129 = sadd.s32 %s128, 1
      %s130 = scalar_select %p127, %s128, %s129
      %p133 = pneg %p127
      %p134 = scmp.eq.s32.totalorder %s10, 3
      %p135 = por %p133, %p134
      %p136 = scmp.ne.s32.totalorder %s128, %s131
      %p137 = scmp.eq.s32.totalorder %s10, 0
      %p138 = por %p136, %p137
      %p139 = scmp.ne.s32.totalorder %s128, %s131
      %p140 = scmp.eq.s32.totalorder %s15, 3
      %p141 = por %p139, %p140
      %p142 = scmp.ne.s32.totalorder %s131, %s132
      %p143 = scmp.eq.s32.totalorder %s15, 0
      %p144 = por %p142, %p143
      %p145 = scmp.ne.s32.totalorder %s131, %s132
      %p146 = scmp.eq.s32.totalorder %s16, 3
      %p147 = por %p145, %p146
      %p149 = scmp.ne.s32.totalorder %s132, %s148
      %p150 = scmp.eq.s32.totalorder %s16, 0
      %p151 = por %p149, %p150
      %p152 = scmp.le.s32.totalorder 1, %s10
      %p153 = scmp.lt.s32.totalorder %s10, 5
      %p154 = pnand %p152, %p153
      %p155 = pneg %p154
      // Predicated region
      $region9: #{discriminator_forward.7} parent=5 // pred_check
        _
      $region10: #{discriminator_forward.7} parent=5 // pred_check_branch
        %157 = sbr.rel (%p154) target = $region12
      $region11: #{discriminator_forward.7} parent=5 // pred_region
        %s158 = ssub.s32 %s10, 1
        // Predicated region
        $region13: #{discriminator_forward.7} parent=11 // pred_check
          %p159 = pneg %p97
        $region14: #{discriminator_forward.7} parent=11 // pred_check_branch
          %161 = sbr.rel (%p159) target = $region16
        $region15: #{discriminator_forward.7} parent=11 // pred_region
          _
        $region16: #{discriminator_forward.7} parent=11 // pred_fallthru
          _
        // Predicated region
        $region17: #{discriminator_forward.7} parent=11 // pred_check
          %p162 = pneg %p118
        $region18: #{discriminator_forward.7} parent=11 // pred_check_branch
          %164 = sbr.rel (%p162) target = $region20
        $region19: #{discriminator_forward.7} parent=11 // pred_region
          _
        $region20: #{discriminator_forward.7} parent=11 // pred_fallthru
          _
      $region12: #{discriminator_forward.7} parent=5 // pred_fallthru
        _
      %p165 = scmp.lt.s32.totalorder %s10, 4
      // Predicated region
      $region21: #{discriminator_forward.7} parent=5 // pred_check
        %p166 = pneg %p165
      $region22: #{discriminator_forward.7} parent=5 // pred_check_branch
        %168 = sbr.rel (%p166) target = $region24
      $region23: #{discriminator_forward.7} parent=5 // pred_region
        // Predicated region
        $region25: #{discriminator_forward.7} parent=23 // pred_check
          %p169 = pneg %p44
        $region26: #{discriminator_forward.7} parent=23 // pred_check_branch
          %171 = sbr.rel (%p169) target = $region28
        $region27: #{discriminator_forward.7} parent=23 // pred_region
          %s172 = sand.u32 %s34, 1
          %s173 = sand.u32 %s34, 1
          %s174 = smul.addr %s173, 64
          %s175 = scalar_lea.vmem [#allocation3], %s174
          %s176 = smul.u32 4, %s17
          %s177 = smul.u32 4, %s18
          %s178 = smul.addr %s176, 16
          %s179 = sadd.s32 %s177, %s178
          %s180 = smul.addr %s179, 4
          %s181 = scalar_lea.vmem %s0, %s180
          // Predicated region
          $region29: #{discriminator_forward.7} parent=27 // pred_check
            _
          $region30: #{discriminator_forward.7} parent=27 // pred_check_branch
            %183 = sbr.rel (0) target = $region32
          $region31: #{discriminator_forward.7} parent=27 // pred_region
            // Predicated region
            $region33: #{discriminator_forward.7} parent=31 // pred_check
              _
            $region34: #{discriminator_forward.7} parent=31 // pred_check_branch
              %185 = sbr.rel (0) target = $region36
            $region35: #{discriminator_forward.7} parent=31 // pred_region
              loop: start=0, step=1, limit=1
              $region37: #{discriminator_forward.7} parent=35 // loop_pre_header
                _
              $region38: #{discriminator_forward.7} parent=35 // loop_header
                %s187 = sphi 0, %s191
                %p188 = scmp.ge.s32.totalorder %s187, 1
                %s192 = sphi %s181, %s181
                %s193 = sphi %s175, %s175
              $region39: #{discriminator_forward.7} parent=35 // loop_header_branch
                %190 = sbr.rel (%p188) target = $region43
              $region40: #{discriminator_forward.7} parent=35 // loop_body
                %v194 = vld [vmem:[%s192] sm:$0xff]
                %195 = vst [vmem:[%s193] sm:$0xff] %v194
                %v196 = vld [vmem:[%s192 + $0x8] sm:$0xff]
                %197 = vst [vmem:[%s193 + $0x8] sm:$0xff] %v196
                %v198 = vld [vmem:[%s192 + $0x40] sm:$0xff]
                %199 = vst [vmem:[%s193 + $0x10] sm:$0xff] %v198
                %v200 = vld [vmem:[%s192 + $0x48] sm:$0xff]
                %201 = vst [vmem:[%s193 + $0x18] sm:$0xff] %v200
                %v202 = vld [vmem:[%s192 + $0x80] sm:$0xff]
                %203 = vst [vmem:[%s193 + $0x20] sm:$0xff] %v202
                %v204 = vld [vmem:[%s192 + $0x88] sm:$0xff]
                %205 = vst [vmem:[%s193 + $0x28] sm:$0xff] %v204
                %v206 = vld [vmem:[%s192 + $0xc0] sm:$0xff]
                %207 = vst [vmem:[%s193 + $0x30] sm:$0xff] %v206
                %v208 = vld [vmem:[%s192 + $0xc8] sm:$0xff]
                %209 = vst [vmem:[%s193 + $0x38] sm:$0xff] %v208
              $region41: #{discriminator_forward.7} parent=35 // loop_footer
                %s191 = sadd.s32 1, %s187
              $region42: #{discriminator_forward.7} parent=35 // loop_footer_branch
                %186 = sbr.rel target = $region38
              $region43: #{discriminator_forward.7} parent=35 // loop_exit
                _
            $region36: #{discriminator_forward.7} parent=31 // pred_fallthru
              _
            // Predicated region
            $region44: #{discriminator_forward.7} parent=31 // pred_check
              _
            $region45: #{discriminator_forward.7} parent=31 // pred_check_branch
              %211 = sbr.rel target = $region47
            $region46: #{discriminator_forward.7} parent=31 // pred_region
              _
            $region47: #{discriminator_forward.7} parent=31 // pred_fallthru
              _
          $region32: #{discriminator_forward.7} parent=27 // pred_fallthru
            _
          %212 = vnop
        $region28: #{discriminator_forward.7} parent=23 // pred_fallthru
          _
        // Predicated region
        $region48: #{discriminator_forward.7} parent=23 // pred_check
          %p213 = pneg %p70
        $region49: #{discriminator_forward.7} parent=23 // pred_check_branch
          %215 = sbr.rel (%p213) target = $region51
        $region50: #{discriminator_forward.7} parent=23 // pred_region
          %s216 = smul.u32 64, %s18
          %p217 = scmp.lt.s32.totalorder %s216, 255
          %s218 = scalar_select %p217, %s216, 255
          %s219 = smul.addr %s218, 2
          %s220 = smul.addr %s219, 4
          %s221 = scalar_lea.vmem %s1, %s220
          %s222 = smul.u32 64, %s18
        $region51: #{discriminator_forward.7} parent=23 // pred_fallthru
          _
      $region24: #{discriminator_forward.7} parent=5 // pred_fallthru
        _
      %p223 = scmp.le.s32.totalorder 1, %s10
      %p224 = scmp.lt.s32.totalorder %s10, 5
      %p225 = pnand %p223, %p224
      %p226 = pneg %p225
      // Predicated region
      $region52: #{discriminator_forward.7} parent=5 // pred_check
        _
      $region53: #{discriminator_forward.7} parent=5 // pred_check_branch
        %228 = sbr.rel (%p225) target = $region55
      $region54: #{discriminator_forward.7} parent=5 // pred_region
        %s229 = ssub.s32 %s10, 1
        %s230 = sand.u32 %s37, 1
        %s231 = sand.u32 %s37, 1
        %s232 = smul.addr %s231, 64
        %s233 = scalar_lea.vmem [#allocation3], %s232
        // Predicated region
        $region56: #{discriminator_forward.7} parent=54 // pred_check
          %p234 = pneg %p50
        $region57: #{discriminator_forward.7} parent=54 // pred_check_branch
          %236 = sbr.rel (%p234) target = $region59
        $region58: #{discriminator_forward.7} parent=54 // pred_region
          _
        $region59: #{discriminator_forward.7} parent=54 // pred_fallthru
          _
        %s237 = sand.u32 %s37, 1
        %s238 = sand.u32 %s37, 1
        %s239 = smul.addr %s238, 64
        %s240 = scalar_lea.vmem [#allocation3], %s239
        %p241 = pneg %p50
        %p242 = pneg %p47
        %s243 = smul.u32 64, %s20
        %p244 = scmp.lt.s32.totalorder %s243, 255
        %s245 = scalar_select %p244, %s243, 255
        %s246 = smul.addr %s245, 2
        %s247 = smul.addr %s246, 4
        %s248 = scalar_lea.vmem %s1, %s247
        %p249 = pneg %p76
        %p250 = pneg %p73
        %p251 = pneg %p97
        %p252 = pneg %p94
        %p253 = pneg %p118
        %p254 = pneg %p115
        %p255 = pneg %p144
        %p256 = pneg %p141
        %s257 = smul.u32 4, %s19
        %p258 = scmp.lt.s32.totalorder %s257, 3
        %s259 = scalar_select %p258, %s257, 3
        %s260 = smul.addr %s259, 2
        %s261 = smul.addr %s260, 4
        %s262 = scalar_lea.vmem %s4, %s261
        %s263 = smul.u32 4, %s19
        %s264 = smul.u32 4, %s20
        %s265 = smul.u32 64, %s20
        %p266 = scmp.lt.s32.totalorder %s265, 255
        %s267 = scalar_select %p266, %s265, 255
        %s268 = smul.addr %s267, 2
        %s269 = smul.addr %s268, 4
        %s270 = scalar_lea.vmem %s1, %s269
        %s271 = smul.u32 64, %s20
        %s272 = smul.u32 4, %s19
        %p273 = scmp.lt.s32.totalorder %s272, 3
        %s274 = scalar_select %p273, %s272, 3
        %s275 = smul.addr %s274, 2
        %s276 = smul.addr %s275, 4
        %s277 = scalar_lea.vmem %s4, %s276
        %s278 = smul.u32 4, %s19
        %p279 = scmp.eq.s32.totalorder %s20, 0
        // Predicated region
        $region60: #{discriminator_forward.7} parent=54 // pred_check
          %p280 = pneg %p279
        $region61: #{discriminator_forward.7} parent=54 // pred_check_branch
          %282 = sbr.rel (%p280) target = $region63
        $region62: #{discriminator_forward.7} parent=54 // pred_region
          %283 = vst [vmem:[#allocation2] sm:$0xff] 0.0
          %284 = vst [vmem:[#allocation2 + $0x8] sm:$0xff] 0.0
          %285 = vst [vmem:[#allocation2 + $0x10] sm:$0xff] 0.0
          %286 = vst [vmem:[#allocation2 + $0x18] sm:$0xff] 0.0
          %287 = vst [vmem:[#allocation2 + $0x20] sm:$0xff] 0.0
          %288 = vst [vmem:[#allocation2 + $0x28] sm:$0xff] 0.0
          %289 = vst [vmem:[#allocation2 + $0x30] sm:$0xff] 0.0
          %290 = vst [vmem:[#allocation2 + $0x38] sm:$0xff] 0.0
        $region63: #{discriminator_forward.7} parent=54 // pred_fallthru
          _
        %v291 = vld [vmem:[#allocation2] sm:$0xff]
        %v292 = vld [vmem:[#allocation2 + $0x8] sm:$0xff]
        %v293 = vld [vmem:[#allocation2 + $0x10] sm:$0xff]
        %v294 = vld [vmem:[#allocation2 + $0x18] sm:$0xff]
        %v295 = vld [vmem:[#allocation2 + $0x20] sm:$0xff]
        %v296 = vld [vmem:[#allocation2 + $0x28] sm:$0xff]
        %v297 = vld [vmem:[#allocation2 + $0x30] sm:$0xff]
        %v298 = vld [vmem:[#allocation2 + $0x38] sm:$0xff]
        %v299 = vld [vmem:[%s233] sm:$0xff]
        %v300 = vld [vmem:[%s233 + $0x8] sm:$0xff]
        %v301 = vld [vmem:[%s233 + $0x10] sm:$0xff]
        %v302 = vld [vmem:[%s233 + $0x18] sm:$0xff]
        %v303 = vld [vmem:[%s233 + $0x20] sm:$0xff]
        %v304 = vld [vmem:[%s233 + $0x28] sm:$0xff]
        %v305 = vld [vmem:[%s233 + $0x30] sm:$0xff]
        %v306 = vld [vmem:[%s233 + $0x38] sm:$0xff]
        %v307 = vld [vmem:[%s270] sm:$0xff]
        %v308 = vld [vmem:[%s270 + $0x8] sm:$0xff]
        %v309 = vld [vmem:[%s270 + $0x10] sm:$0xff]
        %v310 = vld [vmem:[%s270 + $0x18] sm:$0xff]
        %v311 = vld [vmem:[%s270 + $0x20] sm:$0xff]
        %v312 = vld [vmem:[%s270 + $0x28] sm:$0xff]
        %v313 = vld [vmem:[%s270 + $0x30] sm:$0xff]
        %v314 = vld [vmem:[%s270 + $0x38] sm:$0xff]
        %v315 = vld [vmem:[%s270 + $0x40] sm:$0xff]
        %v316 = vld [vmem:[%s270 + $0x48] sm:$0xff]
        %v317 = vld [vmem:[%s270 + $0x50] sm:$0xff]
        %v318 = vld [vmem:[%s270 + $0x58] sm:$0xff]
        %v319 = vld [vmem:[%s270 + $0x60] sm:$0xff]
        %v320 = vld [vmem:[%s270 + $0x68] sm:$0xff]
        %v321 = vld [vmem:[%s270 + $0x70] sm:$0xff]
        %v322 = vld [vmem:[%s270 + $0x78] sm:$0xff]
        %v323 = vld [vmem:[%s270 + $0x80] sm:$0xff]
        %v324 = vld [vmem:[%s270 + $0x88] sm:$0xff]
        %v325 = vld [vmem:[%s270 + $0x90] sm:$0xff]
        %v326 = vld [vmem:[%s270 + $0x98] sm:$0xff]
        %v327 = vld [vmem:[%s270 + $0xa0] sm:$0xff]
        %v328 = vld [vmem:[%s270 + $0xa8] sm:$0xff]
        %v329 = vld [vmem:[%s270 + $0xb0] sm:$0xff]
        %v330 = vld [vmem:[%s270 + $0xb8] sm:$0xff]
        %v331 = vld [vmem:[%s270 + $0xc0] sm:$0xff]
        %v332 = vld [vmem:[%s270 + $0xc8] sm:$0xff]
        %v333 = vld [vmem:[%s270 + $0xd0] sm:$0xff]
        %v334 = vld [vmem:[%s270 + $0xd8] sm:$0xff]
        %v335 = vld [vmem:[%s270 + $0xe0] sm:$0xff]
        %v336 = vld [vmem:[%s270 + $0xe8] sm:$0xff]
        %v337 = vld [vmem:[%s270 + $0xf0] sm:$0xff]
        %v338 = vld [vmem:[%s270 + $0xf8] sm:$0xff]
        %v339 = vld [vmem:[%s270 + $0x100] sm:$0xff]
        %v340 = vld [vmem:[%s270 + $0x108] sm:$0xff]
        %v341 = vld [vmem:[%s270 + $0x110] sm:$0xff]
        %v342 = vld [vmem:[%s270 + $0x118] sm:$0xff]
        %v343 = vld [vmem:[%s270 + $0x120] sm:$0xff]
        %v344 = vld [vmem:[%s270 + $0x128] sm:$0xff]
        %v345 = vld [vmem:[%s270 + $0x130] sm:$0xff]
        %v346 = vld [vmem:[%s270 + $0x138] sm:$0xff]
        %v347 = vld [vmem:[%s270 + $0x140] sm:$0xff]
        %v348 = vld [vmem:[%s270 + $0x148] sm:$0xff]
        %v349 = vld [vmem:[%s270 + $0x150] sm:$0xff]
        %v350 = vld [vmem:[%s270 + $0x158] sm:$0xff]
        %v351 = vld [vmem:[%s270 + $0x160] sm:$0xff]
        %v352 = vld [vmem:[%s270 + $0x168] sm:$0xff]
        %v353 = vld [vmem:[%s270 + $0x170] sm:$0xff]
        %v354 = vld [vmem:[%s270 + $0x178] sm:$0xff]
        %v355 = vld [vmem:[%s270 + $0x180] sm:$0xff]
        %v356 = vld [vmem:[%s270 + $0x188] sm:$0xff]
        %v357 = vld [vmem:[%s270 + $0x190] sm:$0xff]
        %v358 = vld [vmem:[%s270 + $0x198] sm:$0xff]
        %v359 = vld [vmem:[%s270 + $0x1a0] sm:$0xff]
        %v360 = vld [vmem:[%s270 + $0x1a8] sm:$0xff]
        %v361 = vld [vmem:[%s270 + $0x1b0] sm:$0xff]
        %v362 = vld [vmem:[%s270 + $0x1b8] sm:$0xff]
        %v363 = vld [vmem:[%s270 + $0x1c0] sm:$0xff]
        %v364 = vld [vmem:[%s270 + $0x1c8] sm:$0xff]
        %v365 = vld [vmem:[%s270 + $0x1d0] sm:$0xff]
        %v366 = vld [vmem:[%s270 + $0x1d8] sm:$0xff]
        %v367 = vld [vmem:[%s270 + $0x1e0] sm:$0xff]
        %v368 = vld [vmem:[%s270 + $0x1e8] sm:$0xff]
        %v369 = vld [vmem:[%s270 + $0x1f0] sm:$0xff]
        %v370 = vld [vmem:[%s270 + $0x1f8] sm:$0xff]
        %v379 = vunpack.c.l.b16 %v299
        %v380 = vunpack.c.h.b16 %v299
        %v381 = vunpack.c.l.b16 %v300
        %v382 = vunpack.c.h.b16 %v300
        %v383 = vunpack.c.l.b16 %v301
        %v384 = vunpack.c.h.b16 %v301
        %v385 = vunpack.c.l.b16 %v302
        %v386 = vunpack.c.h.b16 %v302
        %v387 = vunpack.c.l.b16 %v303
        %v388 = vunpack.c.h.b16 %v303
        %v389 = vunpack.c.l.b16 %v304
        %v390 = vunpack.c.h.b16 %v304
        %v391 = vunpack.c.l.b16 %v305
        %v392 = vunpack.c.h.b16 %v305
        %v393 = vunpack.c.l.b16 %v306
        %v394 = vunpack.c.h.b16 %v306
        %v395 = vpack.c.b16 %v383, %v379
        %v396 = vpack.c.b16 %v384, %v380
        %v397 = vpack.c.b16 %v385, %v381
        %v398 = vpack.c.b16 %v386, %v382
        %v399 = vpack.c.b16 %v391, %v387
        %v400 = vpack.c.b16 %v392, %v388
        %v401 = vpack.c.b16 %v393, %v389
        %v402 = vpack.c.b16 %v394, %v390
        %v475 = vunpack.c.l.b16 %v307
        %v476 = vunpack.c.h.b16 %v307
        %v477 = vunpack.c.l.b16 %v308
        %v478 = vunpack.c.h.b16 %v308
        %v479 = vunpack.c.l.b16 %v309
        %v480 = vunpack.c.h.b16 %v309
        %v481 = vunpack.c.l.b16 %v310
        %v482 = vunpack.c.h.b16 %v310
        %v483 = vunpack.c.l.b16 %v311
        %v484 = vunpack.c.h.b16 %v311
        %v485 = vunpack.c.l.b16 %v312
        %v486 = vunpack.c.h.b16 %v312
        %v487 = vunpack.c.l.b16 %v313
        %v488 = vunpack.c.h.b16 %v313
        %v489 = vunpack.c.l.b16 %v314
        %v490 = vunpack.c.h.b16 %v314
        %v491 = vunpack.c.l.b16 %v315
        %v492 = vunpack.c.h.b16 %v315
        %v493 = vunpack.c.l.b16 %v316
        %v494 = vunpack.c.h.b16 %v316
        %v495 = vunpack.c.l.b16 %v317
        %v496 = vunpack.c.h.b16 %v317
        %v497 = vunpack.c.l.b16 %v318
        %v498 = vunpack.c.h.b16 %v318
        %v499 = vunpack.c.l.b16 %v319
        %v500 = vunpack.c.h.b16 %v319
        %v501 = vunpack.c.l.b16 %v320
        %v502 = vunpack.c.h.b16 %v320
        %v503 = vunpack.c.l.b16 %v321
        %v504 = vunpack.c.h.b16 %v321
        %v505 = vunpack.c.l.b16 %v322
        %v506 = vunpack.c.h.b16 %v322
        %v507 = vunpack.c.l.b16 %v323
        %v508 = vunpack.c.h.b16 %v323
        %v509 = vunpack.c.l.b16 %v324
        %v510 = vunpack.c.h.b16 %v324
        %v511 = vunpack.c.l.b16 %v325
        %v512 = vunpack.c.h.b16 %v325
        %v513 = vunpack.c.l.b16 %v326
        %v514 = vunpack.c.h.b16 %v326
        %v515 = vunpack.c.l.b16 %v327
        %v516 = vunpack.c.h.b16 %v327
        %v517 = vunpack.c.l.b16 %v328
        %v518 = vunpack.c.h.b16 %v328
        %v519 = vunpack.c.l.b16 %v329
        %v520 = vunpack.c.h.b16 %v329
        %v521 = vunpack.c.l.b16 %v330
        %v522 = vunpack.c.h.b16 %v330
        %v523 = vunpack.c.l.b16 %v331
        %v524 = vunpack.c.h.b16 %v331
        %v525 = vunpack.c.l.b16 %v332
        %v526 = vunpack.c.h.b16 %v332
        %v527 = vunpack.c.l.b16 %v333
        %v528 = vunpack.c.h.b16 %v333
        %v529 = vunpack.c.l.b16 %v334
        %v530 = vunpack.c.h.b16 %v334
        %v531 = vunpack.c.l.b16 %v335
        %v532 = vunpack.c.h.b16 %v335
        %v533 = vunpack.c.l.b16 %v336
        %v534 = vunpack.c.h.b16 %v336
        %v535 = vunpack.c.l.b16 %v337
        %v536 = vunpack.c.h.b16 %v337
        %v537 = vunpack.c.l.b16 %v338
        %v538 = vunpack.c.h.b16 %v338
        %v539 = vunpack.c.l.b16 %v339
        %v540 = vunpack.c.h.b16 %v339
        %v541 = vunpack.c.l.b16 %v340
        %v542 = vunpack.c.h.b16 %v340
        %v543 = vunpack.c.l.b16 %v341
        %v544 = vunpack.c.h.b16 %v341
        %v545 = vunpack.c.l.b16 %v342
        %v546 = vunpack.c.h.b16 %v342
        %v547 = vunpack.c.l.b16 %v343
        %v548 = vunpack.c.h.b16 %v343
        %v549 = vunpack.c.l.b16 %v344
        %v550 = vunpack.c.h.b16 %v344
        %v551 = vunpack.c.l.b16 %v345
        %v552 = vunpack.c.h.b16 %v345
        %v553 = vunpack.c.l.b16 %v346
        %v554 = vunpack.c.h.b16 %v346
        %v555 = vunpack.c.l.b16 %v347
        %v556 = vunpack.c.h.b16 %v347
        %v557 = vunpack.c.l.b16 %v348
        %v558 = vunpack.c.h.b16 %v348
        %v559 = vunpack.c.l.b16 %v349
        %v560 = vunpack.c.h.b16 %v349
        %v561 = vunpack.c.l.b16 %v350
        %v562 = vunpack.c.h.b16 %v350
        %v563 = vunpack.c.l.b16 %v351
        %v564 = vunpack.c.h.b16 %v351
        %v565 = vunpack.c.l.b16 %v352
        %v566 = vunpack.c.h.b16 %v352
        %v567 = vunpack.c.l.b16 %v353
        %v568 = vunpack.c.h.b16 %v353
        %v569 = vunpack.c.l.b16 %v354
        %v570 = vunpack.c.h.b16 %v354
        %v571 = vunpack.c.l.b16 %v355
        %v572 = vunpack.c.h.b16 %v355
        %v573 = vunpack.c.l.b16 %v356
        %v574 = vunpack.c.h.b16 %v356
        %v575 = vunpack.c.l.b16 %v357
        %v576 = vunpack.c.h.b16 %v357
        %v577 = vunpack.c.l.b16 %v358
        %v578 = vunpack.c.h.b16 %v358
        %v579 = vunpack.c.l.b16 %v359
        %v580 = vunpack.c.h.b16 %v359
        %v581 = vunpack.c.l.b16 %v360
        %v582 = vunpack.c.h.b16 %v360
        %v583 = vunpack.c.l.b16 %v361
        %v584 = vunpack.c.h.b16 %v361
        %v585 = vunpack.c.l.b16 %v362
        %v586 = vunpack.c.h.b16 %v362
        %v587 = vunpack.c.l.b16 %v363
        %v588 = vunpack.c.h.b16 %v363
        %v589 = vunpack.c.l.b16 %v364
        %v590 = vunpack.c.h.b16 %v364
        %v591 = vunpack.c.l.b16 %v365
        %v592 = vunpack.c.h.b16 %v365
        %v593 = vunpack.c.l.b16 %v366
        %v594 = vunpack.c.h.b16 %v366
        %v595 = vunpack.c.l.b16 %v367
        %v596 = vunpack.c.h.b16 %v367
        %v597 = vunpack.c.l.b16 %v368
        %v598 = vunpack.c.h.b16 %v368
        %v599 = vunpack.c.l.b16 %v369
        %v600 = vunpack.c.h.b16 %v369
        %v601 = vunpack.c.l.b16 %v370
        %v602 = vunpack.c.h.b16 %v370
        %v603 = vpack.c.b16 %v477, %v475
        %v604 = vpack.c.b16 %v478, %v476
        %v605 = vpack.c.b16 %v481, %v479
        %v606 = vpack.c.b16 %v482, %v480
        %v607 = vpack.c.b16 %v485, %v483
        %v608 = vpack.c.b16 %v486, %v484
        %v609 = vpack.c.b16 %v489, %v487
        %v610 = vpack.c.b16 %v490, %v488
        %v611 = vpack.c.b16 %v493, %v491
        %v612 = vpack.c.b16 %v494, %v492
        %v613 = vpack.c.b16 %v497, %v495
        %v614 = vpack.c.b16 %v498, %v496
        %v615 = vpack.c.b16 %v501, %v499
        %v616 = vpack.c.b16 %v502, %v500
        %v617 = vpack.c.b16 %v505, %v503
        %v618 = vpack.c.b16 %v506, %v504
        %v619 = vpack.c.b16 %v509, %v507
        %v620 = vpack.c.b16 %v510, %v508
        %v621 = vpack.c.b16 %v513, %v511
        %v622 = vpack.c.b16 %v514, %v512
        %v623 = vpack.c.b16 %v517, %v515
        %v624 = vpack.c.b16 %v518, %v516
        %v625 = vpack.c.b16 %v521, %v519
        %v626 = vpack.c.b16 %v522, %v520
        %v627 = vpack.c.b16 %v525, %v523
        %v628 = vpack.c.b16 %v526, %v524
        %v629 = vpack.c.b16 %v529, %v527
        %v630 = vpack.c.b16 %v530, %v528
        %v631 = vpack.c.b16 %v533, %v531
        %v632 = vpack.c.b16 %v534, %v532
        %v633 = vpack.c.b16 %v537, %v535
        %v634 = vpack.c.b16 %v538, %v536
        %v635 = vpack.c.b16 %v541, %v539
        %v636 = vpack.c.b16 %v542, %v540
        %v637 = vpack.c.b16 %v545, %v543
        %v638 = vpack.c.b16 %v546, %v544
        %v639 = vpack.c.b16 %v549, %v547
        %v640 = vpack.c.b16 %v550, %v548
        %v641 = vpack.c.b16 %v553, %v551
        %v642 = vpack.c.b16 %v554, %v552
        %v643 = vpack.c.b16 %v557, %v555
        %v644 = vpack.c.b16 %v558, %v556
        %v645 = vpack.c.b16 %v561, %v559
        %v646 = vpack.c.b16 %v562, %v560
        %v647 = vpack.c.b16 %v565, %v563
        %v648 = vpack.c.b16 %v566, %v564
        %v649 = vpack.c.b16 %v569, %v567
        %v650 = vpack.c.b16 %v570, %v568
        %v651 = vpack.c.b16 %v573, %v571
        %v652 = vpack.c.b16 %v574, %v572
        %v653 = vpack.c.b16 %v577, %v575
        %v654 = vpack.c.b16 %v578, %v576
        %v655 = vpack.c.b16 %v581, %v579
        %v656 = vpack.c.b16 %v582, %v580
        %v657 = vpack.c.b16 %v585, %v583
        %v658 = vpack.c.b16 %v586, %v584
        %v659 = vpack.c.b16 %v589, %v587
        %v660 = vpack.c.b16 %v590, %v588
        %v661 = vpack.c.b16 %v593, %v591
        %v662 = vpack.c.b16 %v594, %v592
        %v663 = vpack.c.b16 %v597, %v595
        %v664 = vpack.c.b16 %v598, %v596
        %v665 = vpack.c.b16 %v601, %v599
        %v666 = vpack.c.b16 %v602, %v600
        %731 = vmatprep.subr.bf16.mxu0 %v604
        %732 = vmatpush1.bf16.msra.mxu0 %v603
        %733 = vmatprep.subr.bf16.mxu0 %v606
        %734 = vmatpush1.bf16.msra.mxu0 %v605
        %735 = vmatprep.subr.bf16.mxu0 %v608
        %736 = vmatpush1.bf16.msra.mxu0 %v607
        %737 = vmatprep.subr.bf16.mxu0 %v610
        %738 = vmatpush1.bf16.msra.mxu0 %v609
        %739 = vmatprep.subr.bf16.mxu0 %v612
        %740 = vmatpush1.bf16.msra.mxu0 %v611
        %741 = vmatprep.subr.bf16.mxu0 %v614
        %742 = vmatpush1.bf16.msra.mxu0 %v613
        %743 = vmatprep.subr.bf16.mxu0 %v616
        %744 = vmatpush1.bf16.msra.mxu0 %v615
        %745 = vmatprep.subr.bf16.mxu0 %v618
        %746 = vmatpush1.bf16.msra.mxu0 %v617
        %747 = vmatprep.subr.bf16.mxu0 %v620
        %748 = vmatpush1.bf16.msra.mxu0 %v619
        %749 = vmatprep.subr.bf16.mxu0 %v622
        %750 = vmatpush1.bf16.msra.mxu0 %v621
        %751 = vmatprep.subr.bf16.mxu0 %v624
        %752 = vmatpush1.bf16.msra.mxu0 %v623
        %753 = vmatprep.subr.bf16.mxu0 %v626
        %754 = vmatpush1.bf16.msra.mxu0 %v625
        %755 = vmatprep.subr.bf16.mxu0 %v628
        %756 = vmatpush1.bf16.msra.mxu0 %v627
        %757 = vmatprep.subr.bf16.mxu0 %v630
        %758 = vmatpush1.bf16.msra.mxu0 %v629
        %759 = vmatprep.subr.bf16.mxu0 %v632
        %760 = vmatpush1.bf16.msra.mxu0 %v631
        %761 = vmatprep.subr.bf16.mxu0 %v634
        %762 = vmatpush1.bf16.msra.mxu0 %v633
        %763 = vmatprep.mubr.bf16.mxu0 %v396
        %764 = vmatmul.mubr.bf16.gmra.mrb[0].mxu0 %v395
        %v765 = vpop.f32.mrb[0].mxu0
        %v766 = vadd.f32 0.0, %v765
        %v767 = vpop.f32.mrb[0].mxu0
        %v768 = vadd.f32 0.0, %v767
        %v769 = vpop.f32.mrb[0].mxu0
        %v770 = vadd.f32 0.0, %v769
        %v771 = vpop.f32.mrb[0].mxu0
        %v772 = vadd.f32 0.0, %v771
        %773 = vmatprep.mubr.bf16.mxu0 %v400
        %774 = vmatmul.mubr.bf16.gmra.mrb[0].mxu0 %v399
        %v775 = vpop.f32.mrb[0].mxu0
        %v776 = vadd.f32 0.0, %v775
        %v777 = vpop.f32.mrb[0].mxu0
        %v778 = vadd.f32 0.0, %v777
        %v779 = vpop.f32.mrb[0].mxu0
        %v780 = vadd.f32 0.0, %v779
        %v781 = vpop.f32.mrb[0].mxu0
        %v782 = vadd.f32 0.0, %v781
        %783 = vdwg.mxu0
        %784 = vmatprep.subr.bf16.mxu0 %v636
        %785 = vmatpush1.bf16.msra.mxu0 %v635
        %786 = vmatprep.subr.bf16.mxu0 %v638
        %787 = vmatpush1.bf16.msra.mxu0 %v637
        %788 = vmatprep.subr.bf16.mxu0 %v640
        %789 = vmatpush1.bf16.msra.mxu0 %v639
        %790 = vmatprep.subr.bf16.mxu0 %v642
        %791 = vmatpush1.bf16.msra.mxu0 %v641
        %792 = vmatprep.subr.bf16.mxu0 %v644
        %793 = vmatpush1.bf16.msra.mxu0 %v643
        %794 = vmatprep.subr.bf16.mxu0 %v646
        %795 = vmatpush1.bf16.msra.mxu0 %v645
        %796 = vmatprep.subr.bf16.mxu0 %v648
        %797 = vmatpush1.bf16.msra.mxu0 %v647
        %798 = vmatprep.subr.bf16.mxu0 %v650
        %799 = vmatpush1.bf16.msra.mxu0 %v649
        %800 = vmatprep.subr.bf16.mxu0 %v652
        %801 = vmatpush1.bf16.msra.mxu0 %v651
        %802 = vmatprep.subr.bf16.mxu0 %v654
        %803 = vmatpush1.bf16.msra.mxu0 %v653
        %804 = vmatprep.subr.bf16.mxu0 %v656
        %805 = vmatpush1.bf16.msra.mxu0 %v655
        %806 = vmatprep.subr.bf16.mxu0 %v658
        %807 = vmatpush1.bf16.msra.mxu0 %v657
        %808 = vmatprep.subr.bf16.mxu0 %v660
        %809 = vmatpush1.bf16.msra.mxu0 %v659
        %810 = vmatprep.subr.bf16.mxu0 %v662
        %811 = vmatpush1.bf16.msra.mxu0 %v661
        %812 = vmatprep.subr.bf16.mxu0 %v664
        %813 = vmatpush1.bf16.msra.mxu0 %v663
        %814 = vmatprep.subr.bf16.mxu0 %v666
        %815 = vmatpush1.bf16.msra.mxu0 %v665
        %816 = vmatprep.mubr.bf16.mxu0 %v398
        %817 = vmatmul.mubr.bf16.gmra.mrb[0].mxu0 %v397
        %v818 = vpop.f32.mrb[0].mxu0
        %v819 = vadd.f32 %v766, %v818
        %v820 = vpop.f32.mrb[0].mxu0
        %v821 = vadd.f32 %v768, %v820
        %v822 = vpop.f32.mrb[0].mxu0
        %v823 = vadd.f32 %v770, %v822
        %v824 = vpop.f32.mrb[0].mxu0
        %v825 = vadd.f32 %v772, %v824
        %826 = vmatprep.mubr.bf16.mxu0 %v402
        %827 = vmatmul.mubr.bf16.gmra.mrb[0].mxu0 %v401
        %v828 = vpop.f32.mrb[0].mxu0
        %v829 = vadd.f32 %v776, %v828
        %v830 = vpop.f32.mrb[0].mxu0
        %v831 = vadd.f32 %v778, %v830
        %v832 = vpop.f32.mrb[0].mxu0
        %v833 = vadd.f32 %v780, %v832
        %v834 = vpop.f32.mrb[0].mxu0
        %v835 = vadd.f32 %v782, %v834
        %836 = vdwg.mxu0
        %v837 = vadd.f32 %v291, %v819
        %v838 = vadd.f32 %v292, %v821
        %v839 = vadd.f32 %v293, %v823
        %v840 = vadd.f32 %v294, %v825
        %v841 = vadd.f32 %v295, %v829
        %v842 = vadd.f32 %v296, %v831
        %v843 = vadd.f32 %v297, %v833
        %v844 = vadd.f32 %v298, %v835
        %845 = vst [vmem:[#allocation2] sm:$0xff] %v837
        %846 = vst [vmem:[#allocation2 + $0x8] sm:$0xff] %v838
        %847 = vst [vmem:[#allocation2 + $0x10] sm:$0xff] %v839
        %848 = vst [vmem:[#allocation2 + $0x18] sm:$0xff] %v840
        %849 = vst [vmem:[#allocation2 + $0x20] sm:$0xff] %v841
        %850 = vst [vmem:[#allocation2 + $0x28] sm:$0xff] %v842
        %851 = vst [vmem:[#allocation2 + $0x30] sm:$0xff] %v843
        %852 = vst [vmem:[#allocation2 + $0x38] sm:$0xff] %v844
        %p853 = scmp.eq.s32.totalorder %s20, 3
        // Predicated region
        $region64: #{discriminator_forward.7} parent=54 // pred_check
          %p854 = pneg %p853
        $region65: #{discriminator_forward.7} parent=54 // pred_check_branch
          %856 = sbr.rel (%p854) target = $region67
        $region66: #{discriminator_forward.7} parent=54 // pred_region
          %v857 = vld [vmem:[#allocation2] sm:$0xff]
          %v858 = vld [vmem:[#allocation2 + $0x8] sm:$0xff]
          %v859 = vld [vmem:[#allocation2 + $0x10] sm:$0xff]
          %v860 = vld [vmem:[#allocation2 + $0x18] sm:$0xff]
          %v861 = vld [vmem:[#allocation2 + $0x20] sm:$0xff]
          %v862 = vld [vmem:[#allocation2 + $0x28] sm:$0xff]
          %v863 = vld [vmem:[#allocation2 + $0x30] sm:$0xff]
          %v864 = vld [vmem:[#allocation2 + $0x38] sm:$0xff]
          %v865 = vld [vmem:[%s2] sm:$0x3]
          %v867 = vlaneseq
          %v868 = vshrl.u32 %v867, 7
          %v869 = vsub.s32 0, %v868
          %v870 = vrot.slane %v865, %v869
          %v871 = vlaneseq
          %v872 = vshrl.u32 %v871, 7
          %v873 = vsub.s32 1, %v872
          %v874 = vrot.slane %v865, %v873
          %v877 = vmul.f32 %v857, %v870
          %v878 = vmul.f32 %v858, %v874
          %v879 = vmul.f32 %v859, %v870
          %v880 = vmul.f32 %v860, %v874
          %v881 = vmul.f32 %v861, %v870
          %v882 = vmul.f32 %v862, %v874
          %v883 = vmul.f32 %v863, %v870
          %v884 = vmul.f32 %v864, %v874
          %v885 = vld [vmem:[%s3] sm:$0x3]
          %v887 = vlaneseq
          %v888 = vshrl.u32 %v887, 7
          %v889 = vsub.s32 0, %v888
          %v890 = vrot.slane %v885, %v889
          %v891 = vlaneseq
          %v892 = vshrl.u32 %v891, 7
          %v893 = vsub.s32 1, %v892
          %v894 = vrot.slane %v885, %v893
          %v897 = vadd.f32 %v877, %v890
          %v898 = vadd.f32 %v878, %v894
          %v899 = vadd.f32 %v879, %v890
          %v900 = vadd.f32 %v880, %v894
          %v901 = vadd.f32 %v881, %v890
          %v902 = vadd.f32 %v882, %v894
          %v903 = vadd.f32 %v883, %v890
          %v904 = vadd.f32 %v884, %v894
          %vm905 = vcmp.gt.f32.partialorder %v897, 0.0
          %vm906 = vcmp.gt.f32.partialorder %v898, 0.0
          %vm907 = vcmp.gt.f32.partialorder %v899, 0.0
          %vm908 = vcmp.gt.f32.partialorder %v900, 0.0
          %vm909 = vcmp.gt.f32.partialorder %v901, 0.0
          %vm910 = vcmp.gt.f32.partialorder %v902, 0.0
          %vm911 = vcmp.gt.f32.partialorder %v903, 0.0
          %vm912 = vcmp.gt.f32.partialorder %v904, 0.0
          %v913 = vmul.f32 %v897, 0.2
          %v914 = vmul.f32 %v898, 0.2
          %v915 = vmul.f32 %v899, 0.2
          %v916 = vmul.f32 %v900, 0.2
          %v917 = vmul.f32 %v901, 0.2
          %v918 = vmul.f32 %v902, 0.2
          %v919 = vmul.f32 %v903, 0.2
          %v920 = vmul.f32 %v904, 0.2
          %v921 = vsel %vm905, %v897, %v913
          %v922 = vsel %vm906, %v898, %v914
          %v923 = vsel %vm907, %v899, %v915
          %v924 = vsel %vm908, %v900, %v916
          %v925 = vsel %vm909, %v901, %v917
          %v926 = vsel %vm910, %v902, %v918
          %v927 = vsel %vm911, %v903, %v919
          %v928 = vsel %vm912, %v904, %v920
          %v929 = vpack.c.bf16 %v923, %v921
          %v930 = vpack.c.bf16 %v924, %v922
          %v931 = vpack.c.bf16 %v927, %v925
          %v932 = vpack.c.bf16 %v928, %v926
          %v937 = vunpack.c.l.b16 %v929
          %v938 = vunpack.c.l.b16 %v930
          %v939 = vunpack.c.h.b16 %v929
          %v940 = vunpack.c.h.b16 %v930
          %v941 = vunpack.c.l.b16 %v931
          %v942 = vunpack.c.l.b16 %v932
          %v943 = vunpack.c.h.b16 %v931
          %v944 = vunpack.c.h.b16 %v932
          %v945 = vpack.c.b16 %v938, %v937
          %v946 = vpack.c.b16 %v940, %v939
          %v947 = vpack.c.b16 %v942, %v941
          %v948 = vpack.c.b16 %v944, %v943
          %953 = vst [vmem:[%s277] sm:$0xff] %v945
          %954 = vst [vmem:[%s277 + $0x8] sm:$0xff] %v946
          %955 = vst [vmem:[%s277 + $0x10] sm:$0xff] %v947
          %956 = vst [vmem:[%s277 + $0x18] sm:$0xff] %v948
        $region67: #{discriminator_forward.7} parent=54 // pred_fallthru
          _
        %s957 = smul.u32 4, %s19
        %p958 = scmp.lt.s32.totalorder %s957, 3
        %s959 = scalar_select %p958, %s957, 3
        %s960 = smul.addr %s959, 2
        %s961 = smul.addr %s960, 4
        %s962 = scalar_lea.vmem %s4, %s961
        // Predicated region
        $region68: #{discriminator_forward.7} parent=54 // pred_check
          %p963 = pneg %p141
        $region69: #{discriminator_forward.7} parent=54 // pred_check_branch
          %965 = sbr.rel (%p963) target = $region71
        $region70: #{discriminator_forward.7} parent=54 // pred_region
          %s966 = smul.u32 4, %s19
        $region71: #{discriminator_forward.7} parent=54 // pred_fallthru
          _
        // Predicated region
        $region72: #{discriminator_forward.7} parent=54 // pred_check
          %p967 = pneg %p141
        $region73: #{discriminator_forward.7} parent=54 // pred_check_branch
          %969 = sbr.rel (%p967) target = $region75
        $region74: #{discriminator_forward.7} parent=54 // pred_region
          %s970 = smul.u32 4, %s19
          %p971 = scmp.lt.s32.totalorder %s970, 3
          %s972 = scalar_select %p971, %s970, 3
          %s973 = smul.addr %s972, 2
          %s974 = smul.addr %s973, 4
          %s975 = scalar_lea.vmem %s4, %s974
        $region75: #{discriminator_forward.7} parent=54 // pred_fallthru
          _
      $region55: #{discriminator_forward.7} parent=5 // pred_fallthru
        _
      %p976 = scmp.le.s32.totalorder 2, %s10
      // Predicated region
      $region76: #{discriminator_forward.7} parent=5 // pred_check
        %p977 = pneg %p976
      $region77: #{discriminator_forward.7} parent=5 // pred_check_branch
        %979 = sbr.rel (%p977) target = $region79
      $region78: #{discriminator_forward.7} parent=5 // pred_region
        %s980 = ssub.s32 %s10, 2
      $region79: #{discriminator_forward.7} parent=5 // pred_fallthru
        _
    $region6: #{discriminator_forward.7} parent=1 // loop_footer
      %s14 = sadd.s32 1, %s10
    $region7: #{discriminator_forward.7} parent=1 // loop_footer_branch
      %9 = sbr.rel target = $region3
    $region8: #{discriminator_forward.7} parent=1 // loop_exit
      _

// kernel: discriminator_forward.8
$region0: #{discriminator_forward.8}
  #allocation0 [shape = 'u32[]', space=smem, size = 0x4, offset = 0x4, fixed_abs, tag = 'smem constant byte address 0x4 - core index']
  #allocation1 [shape = 'u32[144,128]{1,0:T(1,128)}', space=vmem, size = 0x12000, scoped, tag = 'internal scratch']
  #allocation2 [shape = 'f32[8,512]{1,0:T(8,128)}', space=vmem, size = 0x4000, scoped, tag = 'scratch operand']
  %s0 = inlined_call_operand.vmem [shape: bf16[8,4096], index: 0, kind: input, shape index: {}]
  %s1 = inlined_call_operand.vmem [shape: bf16[4096,512], index: 1, kind: input, shape index: {}]
  %s2 = inlined_call_operand.vmem [shape: f32[1,512], index: 2, kind: input, shape index: {}]
  %s3 = inlined_call_operand.vmem [shape: f32[1,512], index: 3, kind: input, shape index: {}]
  %s4 = inlined_call_operand.vmem [shape: bf16[8,512], index: 4, kind: output, shape index: {}]
  %s5 = sld [smem:[#allocation0]]
  $region57: #{discriminator_forward.8} parent=0
    _
  %s7 = ssub.s32 1, %s5
  %s8 = scalar_select 0, %s7, %s5
  loop: start=0, step=1, limit=10
  $region2: #{discriminator_forward.8} parent=0 // loop_pre_header
    _
  $region3: #{discriminator_forward.8} parent=0 // loop_header
    %s10 = sphi 0, %s14
    %p11 = scmp.ge.s32.totalorder %s10, 10
    %s17 = sphi 0, %s29
    %s18 = sphi 0, %s25
    %s19 = sphi 0, %s17
    %s20 = sphi 0, %s18
    %s21 = sphi 0, %s19
    %s22 = sphi 0, %s20
    %s34 = sphi 0, %s36
    %s37 = sphi 0, %s34
    %s38 = sphi 0, %s37
    %s54 = sphi 0, %s38
    %s60 = sphi 0, %s62
    %s63 = sphi 0, %s60
    %s64 = sphi 0, %s63
    %s80 = sphi 0, %s64
    %s84 = sphi 0, %s84
    %s86 = sphi 0, %s84
    %s87 = sphi 0, %s86
    %s101 = sphi 0, %s87
    %s105 = sphi 0, %s105
    %s107 = sphi 0, %s105
    %s108 = sphi 0, %s107
    %s122 = sphi 0, %s108
    %s128 = sphi 0, %s130
    %s131 = sphi 0, %s128
    %s132 = sphi 0, %s131
    %s148 = sphi 0, %s132
  $region4: #{discriminator_forward.8} parent=0 // loop_header_branch
    %13 = sbr.rel (%p11) target = $region8
  $region5: #{discriminator_forward.8} parent=0 // loop_body
    %s15 = ssub.s32 %s10, 1
    %s16 = ssub.s32 %s10, 2
    %s23 = sadd.s32 1, %s18
    %p24 = scmp.ge.s32.totalorder %s23, 8
    %s25 = scalar_select %p24, 0, %s23
    %s26 = sadd.s32 1, %s17
    %s27 = scalar_select %p24, %s26, %s17
    %p28 = scmp.ge.s32.totalorder %s27, 1
    %s29 = scalar_select %p28, 0, %s27
    %s30 = ssub.s32 %s17, %s29
    %s31 = ssub.s32 %s18, %s25
    %s32 = sor.u32 %s30, %s31
    %p33 = scmp.eq.s32.totalorder %s32, 0
    %s35 = sadd.s32 %s34, 1
    %s36 = scalar_select %p33, %s34, %s35
    %p39 = pneg %p33
    %p40 = scmp.eq.s32.totalorder %s10, 7
    %p41 = por %p39, %p40
    %p42 = scmp.ne.s32.totalorder %s34, %s37
    %p43 = scmp.eq.s32.totalorder %s10, 0
    %p44 = por %p42, %p43
    %p45 = scmp.ne.s32.totalorder %s34, %s37
    %p46 = scmp.eq.s32.totalorder %s15, 7
    %p47 = por %p45, %p46
    %p48 = scmp.ne.s32.totalorder %s37, %s38
    %p49 = scmp.eq.s32.totalorder %s15, 0
    %p50 = por %p48, %p49
    %p51 = scmp.ne.s32.totalorder %s37, %s38
    %p52 = scmp.eq.s32.totalorder %s16, 7
    %p53 = por %p51, %p52
    %p55 = scmp.ne.s32.totalorder %s38, %s54
    %p56 = scmp.eq.s32.totalorder %s16, 0
    %p57 = por %p55, %p56
    %s58 = ssub.s32 %s18, %s25
    %p59 = scmp.eq.s32.totalorder %s58, 0
    %s61 = sadd.s32 %s60, 1
    %s62 = scalar_select %p59, %s60, %s61
    %p65 = pneg %p59
    %p66 = scmp.eq.s32.totalorder %s10, 7
    %p67 = por %p65, %p66
    %p68 = scmp.ne.s32.totalorder %s60, %s63
    %p69 = scmp.eq.s32.totalorder %s10, 0
    %p70 = por %p68, %p69
    %p71 = scmp.ne.s32.totalorder %s60, %s63
    %p72 = scmp.eq.s32.totalorder %s15, 7
    %p73 = por %p71, %p72
    %p74 = scmp.ne.s32.totalorder %s63, %s64
    %p75 = scmp.eq.s32.totalorder %s15, 0
    %p76 = por %p74, %p75
    %p77 = scmp.ne.s32.totalorder %s63, %s64
    %p78 = scmp.eq.s32.totalorder %s16, 7
    %p79 = por %p77, %p78
    %p81 = scmp.ne.s32.totalorder %s64, %s80
    %p82 = scmp.eq.s32.totalorder %s16, 0
    %p83 = por %p81, %p82
    %s85 = sadd.s32 %s84, 1
    %p88 = scmp.eq.s32.totalorder %s10, 7
    %p89 = scmp.ne.s32.totalorder %s84, %s86
    %p90 = scmp.eq.s32.totalorder %s10, 0
    %p91 = por %p89, %p90
    %p92 = scmp.ne.s32.totalorder %s84, %s86
    %p93 = scmp.eq.s32.totalorder %s15, 7
    %p94 = por %p92, %p93
    %p95 = scmp.ne.s32.totalorder %s86, %s87
    %p96 = scmp.eq.s32.totalorder %s15, 0
    %p97 = por %p95, %p96
    %p98 = scmp.ne.s32.totalorder %s86, %s87
    %p99 = scmp.eq.s32.totalorder %s16, 7
    %p100 = por %p98, %p99
    %p102 = scmp.ne.s32.totalorder %s87, %s101
    %p103 = scmp.eq.s32.totalorder %s16, 0
    %p104 = por %p102, %p103
    %s106 = sadd.s32 %s105, 1
    %p109 = scmp.eq.s32.totalorder %s10, 7
    %p110 = scmp.ne.s32.totalorder %s105, %s107
    %p111 = scmp.eq.s32.totalorder %s10, 0
    %p112 = por %p110, %p111
    %p113 = scmp.ne.s32.totalorder %s105, %s107
    %p114 = scmp.eq.s32.totalorder %s15, 7
    %p115 = por %p113, %p114
    %p116 = scmp.ne.s32.totalorder %s107, %s108
    %p117 = scmp.eq.s32.totalorder %s15, 0
    %p118 = por %p116, %p117
    %p119 = scmp.ne.s32.totalorder %s107, %s108
    %p120 = scmp.eq.s32.totalorder %s16, 7
    %p121 = por %p119, %p120
    %p123 = scmp.ne.s32.totalorder %s108, %s122
    %p124 = scmp.eq.s32.totalorder %s16, 0
    %p125 = por %p123, %p124
    %s126 = ssub.s32 %s17, %s29
    %p127 = scmp.eq.s32.totalorder %s126, 0
    %s129 = sadd.s32 %s128, 1
    %s130 = scalar_select %p127, %s128, %s129
    %p133 = pneg %p127
    %p134 = scmp.eq.s32.totalorder %s10, 7
    %p135 = por %p133, %p134
    %p136 = scmp.ne.s32.totalorder %s128, %s131
    %p137 = scmp.eq.s32.totalorder %s10, 0
    %p138 = por %p136, %p137
    %p139 = scmp.ne.s32.totalorder %s128, %s131
    %p140 = scmp.eq.s32.totalorder %s15, 7
    %p141 = por %p139, %p140
    %p142 = scmp.ne.s32.totalorder %s131, %s132
    %p143 = scmp.eq.s32.totalorder %s15, 0
    %p144 = por %p142, %p143
    %p145 = scmp.ne.s32.totalorder %s131, %s132
    %p146 = scmp.eq.s32.totalorder %s16, 7
    %p147 = por %p145, %p146
    %p149 = scmp.ne.s32.totalorder %s132, %s148
    %p150 = scmp.eq.s32.totalorder %s16, 0
    %p151 = por %p149, %p150
    %p152 = scmp.le.s32.totalorder 1, %s10
    %p153 = scmp.lt.s32.totalorder %s10, 9
    %p154 = pnand %p152, %p153
    %p155 = pneg %p154
    // Predicated region
    $region9: #{discriminator_forward.8} parent=5 // pred_check
      _
    $region10: #{discriminator_forward.8} parent=5 // pred_check_branch
      %157 = sbr.rel (%p154) target = $region12
    $region11: #{discriminator_forward.8} parent=5 // pred_region
      %s158 = ssub.s32 %s10, 1
      // Predicated region
      $region13: #{discriminator_forward.8} parent=11 // pred_check
        %p159 = pneg %p97
      $region14: #{discriminator_forward.8} parent=11 // pred_check_branch
        %161 = sbr.rel (%p159) target = $region16
      $region15: #{discriminator_forward.8} parent=11 // pred_region
        _
      $region16: #{discriminator_forward.8} parent=11 // pred_fallthru
        _
      // Predicated region
      $region17: #{discriminator_forward.8} parent=11 // pred_check
        %p162 = pneg %p118
      $region18: #{discriminator_forward.8} parent=11 // pred_check_branch
        %164 = sbr.rel (%p162) target = $region20
      $region19: #{discriminator_forward.8} parent=11 // pred_region
        _
      $region20: #{discriminator_forward.8} parent=11 // pred_fallthru
        _
    $region12: #{discriminator_forward.8} parent=5 // pred_fallthru
      _
    %p165 = scmp.lt.s32.totalorder %s10, 8
    // Predicated region
    $region21: #{discriminator_forward.8} parent=5 // pred_check
      %p166 = pneg %p165
    $region22: #{discriminator_forward.8} parent=5 // pred_check_branch
      %168 = sbr.rel (%p166) target = $region24
    $region23: #{discriminator_forward.8} parent=5 // pred_region
      // Predicated region
      $region25: #{discriminator_forward.8} parent=23 // pred_check
        %p169 = pneg %p44
      $region26: #{discriminator_forward.8} parent=23 // pred_check_branch
        %171 = sbr.rel (%p169) target = $region28
      $region27: #{discriminator_forward.8} parent=23 // pred_region
        %s172 = smul.u32 4, %s18
        %p173 = scmp.lt.s32.totalorder %s17, 0
        %s174 = scalar_select %p173, %s17, 0
        %p175 = scmp.lt.s32.totalorder %s172, 31
        %s176 = scalar_select %p175, %s172, 31
        %s177 = smul.addr %s174, 32
        %s178 = sadd.s32 %s176, %s177
        %s179 = smul.addr %s178, 4
        %s180 = scalar_lea.vmem %s0, %s179
        %s181 = smul.u32 4, %s18
      $region28: #{discriminator_forward.8} parent=23 // pred_fallthru
        _
      // Predicated region
      $region29: #{discriminator_forward.8} parent=23 // pred_check
        %p182 = pneg %p70
      $region30: #{discriminator_forward.8} parent=23 // pred_check_branch
        %184 = sbr.rel (%p182) target = $region32
      $region31: #{discriminator_forward.8} parent=23 // pred_region
        %s185 = smul.u32 64, %s18
        %p186 = scmp.lt.s32.totalorder %s185, 511
        %s187 = scalar_select %p186, %s185, 511
        %s188 = smul.addr %s187, 4
        %s189 = smul.addr %s188, 4
        %s190 = scalar_lea.vmem %s1, %s189
        %s191 = smul.u32 64, %s18
      $region32: #{discriminator_forward.8} parent=23 // pred_fallthru
        _
    $region24: #{discriminator_forward.8} parent=5 // pred_fallthru
      _
    %p192 = scmp.le.s32.totalorder 1, %s10
    %p193 = scmp.lt.s32.totalorder %s10, 9
    %p194 = pnand %p192, %p193
    %p195 = pneg %p194
    // Predicated region
    $region33: #{discriminator_forward.8} parent=5 // pred_check
      _
    $region34: #{discriminator_forward.8} parent=5 // pred_check_branch
      %197 = sbr.rel (%p194) target = $region36
    $region35: #{discriminator_forward.8} parent=5 // pred_region
      %s198 = ssub.s32 %s10, 1
      %s199 = smul.u32 4, %s20
      %p200 = scmp.lt.s32.totalorder %s19, 0
      %s201 = scalar_select %p200, %s19, 0
      %p202 = scmp.lt.s32.totalorder %s199, 31
      %s203 = scalar_select %p202, %s199, 31
      %s204 = smul.addr %s201, 32
      %s205 = sadd.s32 %s203, %s204
      %s206 = smul.addr %s205, 4
      %s207 = scalar_lea.vmem %s0, %s206
      %p208 = pneg %p50
      %p209 = pneg %p47
      %s210 = smul.u32 64, %s20
      %p211 = scmp.lt.s32.totalorder %s210, 511
      %s212 = scalar_select %p211, %s210, 511
      %s213 = smul.addr %s212, 4
      %s214 = smul.addr %s213, 4
      %s215 = scalar_lea.vmem %s1, %s214
      %p216 = pneg %p76
      %p217 = pneg %p73
      %p218 = pneg %p97
      %p219 = pneg %p94
      %p220 = pneg %p118
      %p221 = pneg %p115
      %p222 = pneg %p144
      %p223 = pneg %p141
      %p224 = scmp.lt.s32.totalorder %s19, 0
      %s225 = scalar_select %p224, %s19, 0
      %s226 = smul.addr %s225, 4
      %s227 = smul.addr %s226, 4
      %s228 = scalar_lea.vmem %s4, %s227
      %s229 = smul.u32 4, %s20
      %p230 = scmp.lt.s32.totalorder %s19, 0
      %s231 = scalar_select %p230, %s19, 0
      %p232 = scmp.lt.s32.totalorder %s229, 31
      %s233 = scalar_select %p232, %s229, 31
      %s234 = smul.addr %s231, 32
      %s235 = sadd.s32 %s233, %s234
      %s236 = smul.addr %s235, 4
      %s237 = scalar_lea.vmem %s0, %s236
      %s238 = smul.u32 4, %s20
      %s239 = smul.u32 64, %s20
      %p240 = scmp.lt.s32.totalorder %s239, 511
      %s241 = scalar_select %p240, %s239, 511
      %s242 = smul.addr %s241, 4
      %s243 = smul.addr %s242, 4
      %s244 = scalar_lea.vmem %s1, %s243
      %s245 = smul.u32 64, %s20
      %p246 = scmp.lt.s32.totalorder %s19, 0
      %s247 = scalar_select %p246, %s19, 0
      %s248 = smul.addr %s247, 4
      %s249 = smul.addr %s248, 4
      %s250 = scalar_lea.vmem %s4, %s249
      %p251 = scmp.eq.s32.totalorder %s20, 0
      // Predicated region
      $region37: #{discriminator_forward.8} parent=35 // pred_check
        %p252 = pneg %p251
      $region38: #{discriminator_forward.8} parent=35 // pred_check_branch
        %254 = sbr.rel (%p252) target = $region40
      $region39: #{discriminator_forward.8} parent=35 // pred_region
        %255 = vst [vmem:[#allocation2] sm:$0xff] 0.0
        %256 = vst [vmem:[#allocation2 + $0x8] sm:$0xff] 0.0
        %257 = vst [vmem:[#allocation2 + $0x10] sm:$0xff] 0.0
        %258 = vst [vmem:[#allocation2 + $0x18] sm:$0xff] 0.0
      $region40: #{discriminator_forward.8} parent=35 // pred_fallthru
        _
      %v259 = vld [vmem:[#allocation2] sm:$0xff]
      %v260 = vld [vmem:[#allocation2 + $0x8] sm:$0xff]
      %v261 = vld [vmem:[#allocation2 + $0x10] sm:$0xff]
      %v262 = vld [vmem:[#allocation2 + $0x18] sm:$0xff]
      %v263 = vld [vmem:[%s237] sm:$0xff]
      %v264 = vld [vmem:[%s237 + $0x8] sm:$0xff]
      %v265 = vld [vmem:[%s244] sm:$0xff]
      %v266 = vld [vmem:[%s244 + $0x8] sm:$0xff]
      %v267 = vld [vmem:[%s244 + $0x10] sm:$0xff]
      %v268 = vld [vmem:[%s244 + $0x18] sm:$0xff]
      %v269 = vld [vmem:[%s244 + $0x20] sm:$0xff]
      %v270 = vld [vmem:[%s244 + $0x28] sm:$0xff]
      %v271 = vld [vmem:[%s244 + $0x30] sm:$0xff]
      %v272 = vld [vmem:[%s244 + $0x38] sm:$0xff]
      %v273 = vld [vmem:[%s244 + $0x40] sm:$0xff]
      %v274 = vld [vmem:[%s244 + $0x48] sm:$0xff]
      %v275 = vld [vmem:[%s244 + $0x50] sm:$0xff]
      %v276 = vld [vmem:[%s244 + $0x58] sm:$0xff]
      %v277 = vld [vmem:[%s244 + $0x60] sm:$0xff]
      %v278 = vld [vmem:[%s244 + $0x68] sm:$0xff]
      %v279 = vld [vmem:[%s244 + $0x70] sm:$0xff]
      %v280 = vld [vmem:[%s244 + $0x78] sm:$0xff]
      %v281 = vld [vmem:[%s244 + $0x80] sm:$0xff]
      %v282 = vld [vmem:[%s244 + $0x88] sm:$0xff]
      %v283 = vld [vmem:[%s244 + $0x90] sm:$0xff]
      %v284 = vld [vmem:[%s244 + $0x98] sm:$0xff]
      %v285 = vld [vmem:[%s244 + $0xa0] sm:$0xff]
      %v286 = vld [vmem:[%s244 + $0xa8] sm:$0xff]
      %v287 = vld [vmem:[%s244 + $0xb0] sm:$0xff]
      %v288 = vld [vmem:[%s244 + $0xb8] sm:$0xff]
      %v289 = vld [vmem:[%s244 + $0xc0] sm:$0xff]
      %v290 = vld [vmem:[%s244 + $0xc8] sm:$0xff]
      %v291 = vld [vmem:[%s244 + $0xd0] sm:$0xff]
      %v292 = vld [vmem:[%s244 + $0xd8] sm:$0xff]
      %v293 = vld [vmem:[%s244 + $0xe0] sm:$0xff]
      %v294 = vld [vmem:[%s244 + $0xe8] sm:$0xff]
      %v295 = vld [vmem:[%s244 + $0xf0] sm:$0xff]
      %v296 = vld [vmem:[%s244 + $0xf8] sm:$0xff]
      %v297 = vld [vmem:[%s244 + $0x100] sm:$0xff]
      %v298 = vld [vmem:[%s244 + $0x108] sm:$0xff]
      %v299 = vld [vmem:[%s244 + $0x110] sm:$0xff]
      %v300 = vld [vmem:[%s244 + $0x118] sm:$0xff]
      %v301 = vld [vmem:[%s244 + $0x120] sm:$0xff]
      %v302 = vld [vmem:[%s244 + $0x128] sm:$0xff]
      %v303 = vld [vmem:[%s244 + $0x130] sm:$0xff]
      %v304 = vld [vmem:[%s244 + $0x138] sm:$0xff]
      %v305 = vld [vmem:[%s244 + $0x140] sm:$0xff]
      %v306 = vld [vmem:[%s244 + $0x148] sm:$0xff]
      %v307 = vld [vmem:[%s244 + $0x150] sm:$0xff]
      %v308 = vld [vmem:[%s244 + $0x158] sm:$0xff]
      %v309 = vld [vmem:[%s244 + $0x160] sm:$0xff]
      %v310 = vld [vmem:[%s244 + $0x168] sm:$0xff]
      %v311 = vld [vmem:[%s244 + $0x170] sm:$0xff]
      %v312 = vld [vmem:[%s244 + $0x178] sm:$0xff]
      %v313 = vld [vmem:[%s244 + $0x180] sm:$0xff]
      %v314 = vld [vmem:[%s244 + $0x188] sm:$0xff]
      %v315 = vld [vmem:[%s244 + $0x190] sm:$0xff]
      %v316 = vld [vmem:[%s244 + $0x198] sm:$0xff]
      %v317 = vld [vmem:[%s244 + $0x1a0] sm:$0xff]
      %v318 = vld [vmem:[%s244 + $0x1a8] sm:$0xff]
      %v319 = vld [vmem:[%s244 + $0x1b0] sm:$0xff]
      %v320 = vld [vmem:[%s244 + $0x1b8] sm:$0xff]
      %v321 = vld [vmem:[%s244 + $0x1c0] sm:$0xff]
      %v322 = vld [vmem:[%s244 + $0x1c8] sm:$0xff]
      %v323 = vld [vmem:[%s244 + $0x1d0] sm:$0xff]
      %v324 = vld [vmem:[%s244 + $0x1d8] sm:$0xff]
      %v325 = vld [vmem:[%s244 + $0x1e0] sm:$0xff]
      %v326 = vld [vmem:[%s244 + $0x1e8] sm:$0xff]
      %v327 = vld [vmem:[%s244 + $0x1f0] sm:$0xff]
      %v328 = vld [vmem:[%s244 + $0x1f8] sm:$0xff]
      %v329 = vld [vmem:[%s244 + $0x200] sm:$0xff]
      %v330 = vld [vmem:[%s244 + $0x208] sm:$0xff]
      %v331 = vld [vmem:[%s244 + $0x210] sm:$0xff]
      %v332 = vld [vmem:[%s244 + $0x218] sm:$0xff]
      %v333 = vld [vmem:[%s244 + $0x220] sm:$0xff]
      %v334 = vld [vmem:[%s244 + $0x228] sm:$0xff]
      %v335 = vld [vmem:[%s244 + $0x230] sm:$0xff]
      %v336 = vld [vmem:[%s244 + $0x238] sm:$0xff]
      %v337 = vld [vmem:[%s244 + $0x240] sm:$0xff]
      %v338 = vld [vmem:[%s244 + $0x248] sm:$0xff]
      %v339 = vld [vmem:[%s244 + $0x250] sm:$0xff]
      %v340 = vld [vmem:[%s244 + $0x258] sm:$0xff]
      %v341 = vld [vmem:[%s244 + $0x260] sm:$0xff]
      %v342 = vld [vmem:[%s244 + $0x268] sm:$0xff]
      %v343 = vld [vmem:[%s244 + $0x270] sm:$0xff]
      %v344 = vld [vmem:[%s244 + $0x278] sm:$0xff]
      %v345 = vld [vmem:[%s244 + $0x280] sm:$0xff]
      %v346 = vld [vmem:[%s244 + $0x288] sm:$0xff]
      %v347 = vld [vmem:[%s244 + $0x290] sm:$0xff]
      %v348 = vld [vmem:[%s244 + $0x298] sm:$0xff]
      %v349 = vld [vmem:[%s244 + $0x2a0] sm:$0xff]
      %v350 = vld [vmem:[%s244 + $0x2a8] sm:$0xff]
      %v351 = vld [vmem:[%s244 + $0x2b0] sm:$0xff]
      %v352 = vld [vmem:[%s244 + $0x2b8] sm:$0xff]
      %v353 = vld [vmem:[%s244 + $0x2c0] sm:$0xff]
      %v354 = vld [vmem:[%s244 + $0x2c8] sm:$0xff]
      %v355 = vld [vmem:[%s244 + $0x2d0] sm:$0xff]
      %v356 = vld [vmem:[%s244 + $0x2d8] sm:$0xff]
      %v357 = vld [vmem:[%s244 + $0x2e0] sm:$0xff]
      %v358 = vld [vmem:[%s244 + $0x2e8] sm:$0xff]
      %v359 = vld [vmem:[%s244 + $0x2f0] sm:$0xff]
      %v360 = vld [vmem:[%s244 + $0x2f8] sm:$0xff]
      %v361 = vld [vmem:[%s244 + $0x300] sm:$0xff]
      %v362 = vld [vmem:[%s244 + $0x308] sm:$0xff]
      %v363 = vld [vmem:[%s244 + $0x310] sm:$0xff]
      %v364 = vld [vmem:[%s244 + $0x318] sm:$0xff]
      %v365 = vld [vmem:[%s244 + $0x320] sm:$0xff]
      %v366 = vld [vmem:[%s244 + $0x328] sm:$0xff]
      %v367 = vld [vmem:[%s244 + $0x330] sm:$0xff]
      %v368 = vld [vmem:[%s244 + $0x338] sm:$0xff]
      %v369 = vld [vmem:[%s244 + $0x340] sm:$0xff]
      %v370 = vld [vmem:[%s244 + $0x348] sm:$0xff]
      %v371 = vld [vmem:[%s244 + $0x350] sm:$0xff]
      %v372 = vld [vmem:[%s244 + $0x358] sm:$0xff]
      %v373 = vld [vmem:[%s244 + $0x360] sm:$0xff]
      %v374 = vld [vmem:[%s244 + $0x368] sm:$0xff]
      %v375 = vld [vmem:[%s244 + $0x370] sm:$0xff]
      %v376 = vld [vmem:[%s244 + $0x378] sm:$0xff]
      %v377 = vld [vmem:[%s244 + $0x380] sm:$0xff]
      %v378 = vld [vmem:[%s244 + $0x388] sm:$0xff]
      %v379 = vld [vmem:[%s244 + $0x390] sm:$0xff]
      %v380 = vld [vmem:[%s244 + $0x398] sm:$0xff]
      %v381 = vld [vmem:[%s244 + $0x3a0] sm:$0xff]
      %v382 = vld [vmem:[%s244 + $0x3a8] sm:$0xff]
      %v383 = vld [vmem:[%s244 + $0x3b0] sm:$0xff]
      %v384 = vld [vmem:[%s244 + $0x3b8] sm:$0xff]
      %v385 = vld [vmem:[%s244 + $0x3c0] sm:$0xff]
      %v386 = vld [vmem:[%s244 + $0x3c8] sm:$0xff]
      %v387 = vld [vmem:[%s244 + $0x3d0] sm:$0xff]
      %v388 = vld [vmem:[%s244 + $0x3d8] sm:$0xff]
      %v389 = vld [vmem:[%s244 + $0x3e0] sm:$0xff]
      %v390 = vld [vmem:[%s244 + $0x3e8] sm:$0xff]
      %v391 = vld [vmem:[%s244 + $0x3f0] sm:$0xff]
      %v392 = vld [vmem:[%s244 + $0x3f8] sm:$0xff]
      %v395 = vunpack.c.l.b16 %v263
      %v396 = vunpack.c.h.b16 %v263
      %v397 = vunpack.c.l.b16 %v264
      %v398 = vunpack.c.h.b16 %v264
      %v399 = vpack.c.b16 %v395, %v395
      %v400 = vpack.c.b16 %v396, %v396
      %v401 = vpack.c.b16 %v397, %v397
      %v402 = vpack.c.b16 %v398, %v398
      %v535 = vunpack.c.l.b16 %v265
      %v536 = vunpack.c.h.b16 %v265
      %v537 = vunpack.c.l.b16 %v266
      %v538 = vunpack.c.h.b16 %v266
      %v539 = vunpack.c.l.b16 %v267
      %v540 = vunpack.c.h.b16 %v267
      %v541 = vunpack.c.l.b16 %v268
      %v542 = vunpack.c.h.b16 %v268
      %v543 = vunpack.c.l.b16 %v269
      %v544 = vunpack.c.h.b16 %v269
      %v545 = vunpack.c.l.b16 %v270
      %v546 = vunpack.c.h.b16 %v270
      %v547 = vunpack.c.l.b16 %v271
      %v548 = vunpack.c.h.b16 %v271
      %v549 = vunpack.c.l.b16 %v272
      %v550 = vunpack.c.h.b16 %v272
      %v551 = vunpack.c.l.b16 %v273
      %v552 = vunpack.c.h.b16 %v273
      %v553 = vunpack.c.l.b16 %v274
      %v554 = vunpack.c.h.b16 %v274
      %v555 = vunpack.c.l.b16 %v275
      %v556 = vunpack.c.h.b16 %v275
      %v557 = vunpack.c.l.b16 %v276
      %v558 = vunpack.c.h.b16 %v276
      %v559 = vunpack.c.l.b16 %v277
      %v560 = vunpack.c.h.b16 %v277
      %v561 = vunpack.c.l.b16 %v278
      %v562 = vunpack.c.h.b16 %v278
      %v563 = vunpack.c.l.b16 %v279
      %v564 = vunpack.c.h.b16 %v279
      %v565 = vunpack.c.l.b16 %v280
      %v566 = vunpack.c.h.b16 %v280
      %v567 = vunpack.c.l.b16 %v281
      %v568 = vunpack.c.h.b16 %v281
      %v569 = vunpack.c.l.b16 %v282
      %v570 = vunpack.c.h.b16 %v282
      %v571 = vunpack.c.l.b16 %v283
      %v572 = vunpack.c.h.b16 %v283
      %v573 = vunpack.c.l.b16 %v284
      %v574 = vunpack.c.h.b16 %v284
      %v575 = vunpack.c.l.b16 %v285
      %v576 = vunpack.c.h.b16 %v285
      %v577 = vunpack.c.l.b16 %v286
      %v578 = vunpack.c.h.b16 %v286
      %v579 = vunpack.c.l.b16 %v287
      %v580 = vunpack.c.h.b16 %v287
      %v581 = vunpack.c.l.b16 %v288
      %v582 = vunpack.c.h.b16 %v288
      %v583 = vunpack.c.l.b16 %v289
      %v584 = vunpack.c.h.b16 %v289
      %v585 = vunpack.c.l.b16 %v290
      %v586 = vunpack.c.h.b16 %v290
      %v587 = vunpack.c.l.b16 %v291
      %v588 = vunpack.c.h.b16 %v291
      %v589 = vunpack.c.l.b16 %v292
      %v590 = vunpack.c.h.b16 %v292
      %v591 = vunpack.c.l.b16 %v293
      %v592 = vunpack.c.h.b16 %v293
      %v593 = vunpack.c.l.b16 %v294
      %v594 = vunpack.c.h.b16 %v294
      %v595 = vunpack.c.l.b16 %v295
      %v596 = vunpack.c.h.b16 %v295
      %v597 = vunpack.c.l.b16 %v296
      %v598 = vunpack.c.h.b16 %v296
      %v599 = vunpack.c.l.b16 %v297
      %v600 = vunpack.c.h.b16 %v297
      %v601 = vunpack.c.l.b16 %v298
      %v602 = vunpack.c.h.b16 %v298
      %v603 = vunpack.c.l.b16 %v299
      %v604 = vunpack.c.h.b16 %v299
      %v605 = vunpack.c.l.b16 %v300
      %v606 = vunpack.c.h.b16 %v300
      %v607 = vunpack.c.l.b16 %v301
      %v608 = vunpack.c.h.b16 %v301
      %v609 = vunpack.c.l.b16 %v302
      %v610 = vunpack.c.h.b16 %v302
      %v611 = vunpack.c.l.b16 %v303
      %v612 = vunpack.c.h.b16 %v303
      %v613 = vunpack.c.l.b16 %v304
      %v614 = vunpack.c.h.b16 %v304
      %v615 = vunpack.c.l.b16 %v305
      %v616 = vunpack.c.h.b16 %v305
      %v617 = vunpack.c.l.b16 %v306
      %v618 = vunpack.c.h.b16 %v306
      %v619 = vunpack.c.l.b16 %v307
      %v620 = vunpack.c.h.b16 %v307
      %v621 = vunpack.c.l.b16 %v308
      %v622 = vunpack.c.h.b16 %v308
      %v623 = vunpack.c.l.b16 %v309
      %v624 = vunpack.c.h.b16 %v309
      %v625 = vunpack.c.l.b16 %v310
      %v626 = vunpack.c.h.b16 %v310
      %v627 = vunpack.c.l.b16 %v311
      %v628 = vunpack.c.h.b16 %v311
      %v629 = vunpack.c.l.b16 %v312
      %v630 = vunpack.c.h.b16 %v312
      %v631 = vunpack.c.l.b16 %v313
      %v632 = vunpack.c.h.b16 %v313
      %v633 = vunpack.c.l.b16 %v314
      %v634 = vunpack.c.h.b16 %v314
      %v635 = vunpack.c.l.b16 %v315
      %v636 = vunpack.c.h.b16 %v315
      %v637 = vunpack.c.l.b16 %v316
      %v638 = vunpack.c.h.b16 %v316
      %v639 = vunpack.c.l.b16 %v317
      %v640 = vunpack.c.h.b16 %v317
      %v641 = vunpack.c.l.b16 %v318
      %v642 = vunpack.c.h.b16 %v318
      %v643 = vunpack.c.l.b16 %v319
      %v644 = vunpack.c.h.b16 %v319
      %v645 = vunpack.c.l.b16 %v320
      %v646 = vunpack.c.h.b16 %v320
      %v647 = vunpack.c.l.b16 %v321
      %v648 = vunpack.c.h.b16 %v321
      %v649 = vunpack.c.l.b16 %v322
      %v650 = vunpack.c.h.b16 %v322
      %v651 = vunpack.c.l.b16 %v323
      %v652 = vunpack.c.h.b16 %v323
      %v653 = vunpack.c.l.b16 %v324
      %v654 = vunpack.c.h.b16 %v324
      %v655 = vunpack.c.l.b16 %v325
      %v656 = vunpack.c.h.b16 %v325
      %v657 = vunpack.c.l.b16 %v326
      %v658 = vunpack.c.h.b16 %v326
      %v659 = vunpack.c.l.b16 %v327
      %v660 = vunpack.c.h.b16 %v327
      %v661 = vunpack.c.l.b16 %v328
      %v662 = vunpack.c.h.b16 %v328
      %v663 = vunpack.c.l.b16 %v329
      %v664 = vunpack.c.h.b16 %v329
      %v665 = vunpack.c.l.b16 %v330
      %v666 = vunpack.c.h.b16 %v330
      %v667 = vunpack.c.l.b16 %v331
      %v668 = vunpack.c.h.b16 %v331
      %v669 = vunpack.c.l.b16 %v332
      %v670 = vunpack.c.h.b16 %v332
      %v671 = vunpack.c.l.b16 %v333
      %v672 = vunpack.c.h.b16 %v333
      %v673 = vunpack.c.l.b16 %v334
      %v674 = vunpack.c.h.b16 %v334
      %v675 = vunpack.c.l.b16 %v335
      %v676 = vunpack.c.h.b16 %v335
      %v677 = vunpack.c.l.b16 %v336
      %v678 = vunpack.c.h.b16 %v336
      %v679 = vunpack.c.l.b16 %v337
      %v680 = vunpack.c.h.b16 %v337
      %v681 = vunpack.c.l.b16 %v338
      %v682 = vunpack.c.h.b16 %v338
      %v683 = vunpack.c.l.b16 %v339
      %v684 = vunpack.c.h.b16 %v339
      %v685 = vunpack.c.l.b16 %v340
      %v686 = vunpack.c.h.b16 %v340
      %v687 = vunpack.c.l.b16 %v341
      %v688 = vunpack.c.h.b16 %v341
      %v689 = vunpack.c.l.b16 %v342
      %v690 = vunpack.c.h.b16 %v342
      %v691 = vunpack.c.l.b16 %v343
      %v692 = vunpack.c.h.b16 %v343
      %v693 = vunpack.c.l.b16 %v344
      %v694 = vunpack.c.h.b16 %v344
      %v695 = vunpack.c.l.b16 %v345
      %v696 = vunpack.c.h.b16 %v345
      %v697 = vunpack.c.l.b16 %v346
      %v698 = vunpack.c.h.b16 %v346
      %v699 = vunpack.c.l.b16 %v347
      %v700 = vunpack.c.h.b16 %v347
      %v701 = vunpack.c.l.b16 %v348
      %v702 = vunpack.c.h.b16 %v348
      %v703 = vunpack.c.l.b16 %v349
      %v704 = vunpack.c.h.b16 %v349
      %v705 = vunpack.c.l.b16 %v350
      %v706 = vunpack.c.h.b16 %v350
      %v707 = vunpack.c.l.b16 %v351
      %v708 = vunpack.c.h.b16 %v351
      %v709 = vunpack.c.l.b16 %v352
      %v710 = vunpack.c.h.b16 %v352
      %v711 = vunpack.c.l.b16 %v353
      %v712 = vunpack.c.h.b16 %v353
      %v713 = vunpack.c.l.b16 %v354
      %v714 = vunpack.c.h.b16 %v354
      %v715 = vunpack.c.l.b16 %v355
      %v716 = vunpack.c.h.b16 %v355
      %v717 = vunpack.c.l.b16 %v356
      %v718 = vunpack.c.h.b16 %v356
      %v719 = vunpack.c.l.b16 %v357
      %v720 = vunpack.c.h.b16 %v357
      %v721 = vunpack.c.l.b16 %v358
      %v722 = vunpack.c.h.b16 %v358
      %v723 = vunpack.c.l.b16 %v359
      %v724 = vunpack.c.h.b16 %v359
      %v725 = vunpack.c.l.b16 %v360
      %v726 = vunpack.c.h.b16 %v360
      %v727 = vunpack.c.l.b16 %v361
      %v728 = vunpack.c.h.b16 %v361
      %v729 = vunpack.c.l.b16 %v362
      %v730 = vunpack.c.h.b16 %v362
      %v731 = vunpack.c.l.b16 %v363
      %v732 = vunpack.c.h.b16 %v363
      %v733 = vunpack.c.l.b16 %v364
      %v734 = vunpack.c.h.b16 %v364
      %v735 = vunpack.c.l.b16 %v365
      %v736 = vunpack.c.h.b16 %v365
      %v737 = vunpack.c.l.b16 %v366
      %v738 = vunpack.c.h.b16 %v366
      %v739 = vunpack.c.l.b16 %v367
      %v740 = vunpack.c.h.b16 %v367
      %v741 = vunpack.c.l.b16 %v368
      %v742 = vunpack.c.h.b16 %v368
      %v743 = vunpack.c.l.b16 %v369
      %v744 = vunpack.c.h.b16 %v369
      %v745 = vunpack.c.l.b16 %v370
      %v746 = vunpack.c.h.b16 %v370
      %v747 = vunpack.c.l.b16 %v371
      %v748 = vunpack.c.h.b16 %v371
      %v749 = vunpack.c.l.b16 %v372
      %v750 = vunpack.c.h.b16 %v372
      %v751 = vunpack.c.l.b16 %v373
      %v752 = vunpack.c.h.b16 %v373
      %v753 = vunpack.c.l.b16 %v374
      %v754 = vunpack.c.h.b16 %v374
      %v755 = vunpack.c.l.b16 %v375
      %v756 = vunpack.c.h.b16 %v375
      %v757 = vunpack.c.l.b16 %v376
      %v758 = vunpack.c.h.b16 %v376
      %v759 = vunpack.c.l.b16 %v377
      %v760 = vunpack.c.h.b16 %v377
      %v761 = vunpack.c.l.b16 %v378
      %v762 = vunpack.c.h.b16 %v378
      %v763 = vunpack.c.l.b16 %v379
      %v764 = vunpack.c.h.b16 %v379
      %v765 = vunpack.c.l.b16 %v380
      %v766 = vunpack.c.h.b16 %v380
      %v767 = vunpack.c.l.b16 %v381
      %v768 = vunpack.c.h.b16 %v381
      %v769 = vunpack.c.l.b16 %v382
      %v770 = vunpack.c.h.b16 %v382
      %v771 = vunpack.c.l.b16 %v383
      %v772 = vunpack.c.h.b16 %v383
      %v773 = vunpack.c.l.b16 %v384
      %v774 = vunpack.c.h.b16 %v384
      %v775 = vunpack.c.l.b16 %v385
      %v776 = vunpack.c.h.b16 %v385
      %v777 = vunpack.c.l.b16 %v386
      %v778 = vunpack.c.h.b16 %v386
      %v779 = vunpack.c.l.b16 %v387
      %v780 = vunpack.c.h.b16 %v387
      %v781 = vunpack.c.l.b16 %v388
      %v782 = vunpack.c.h.b16 %v388
      %v783 = vunpack.c.l.b16 %v389
      %v784 = vunpack.c.h.b16 %v389
      %v785 = vunpack.c.l.b16 %v390
      %v786 = vunpack.c.h.b16 %v390
      %v787 = vunpack.c.l.b16 %v391
      %v788 = vunpack.c.h.b16 %v391
      %v789 = vunpack.c.l.b16 %v392
      %v790 = vunpack.c.h.b16 %v392
      %v791 = vpack.c.b16 %v539, %v535
      %v792 = vpack.c.b16 %v540, %v536
      %v793 = vpack.c.b16 %v541, %v537
      %v794 = vpack.c.b16 %v542, %v538
      %v795 = vpack.c.b16 %v547, %v543
      %v796 = vpack.c.b16 %v548, %v544
      %v797 = vpack.c.b16 %v549, %v545
      %v798 = vpack.c.b16 %v550, %v546
      %v799 = vpack.c.b16 %v555, %v551
      %v800 = vpack.c.b16 %v556, %v552
      %v801 = vpack.c.b16 %v557, %v553
      %v802 = vpack.c.b16 %v558, %v554
      %v803 = vpack.c.b16 %v563, %v559
      %v804 = vpack.c.b16 %v564, %v560
      %v805 = vpack.c.b16 %v565, %v561
      %v806 = vpack.c.b16 %v566, %v562
      %v807 = vpack.c.b16 %v571, %v567
      %v808 = vpack.c.b16 %v572, %v568
      %v809 = vpack.c.b16 %v573, %v569
      %v810 = vpack.c.b16 %v574, %v570
      %v811 = vpack.c.b16 %v579, %v575
      %v812 = vpack.c.b16 %v580, %v576
      %v813 = vpack.c.b16 %v581, %v577
      %v814 = vpack.c.b16 %v582, %v578
      %v815 = vpack.c.b16 %v587, %v583
      %v816 = vpack.c.b16 %v588, %v584
      %v817 = vpack.c.b16 %v589, %v585
      %v818 = vpack.c.b16 %v590, %v586
      %v819 = vpack.c.b16 %v595, %v591
      %v820 = vpack.c.b16 %v596, %v592
      %v821 = vpack.c.b16 %v597, %v593
      %v822 = vpack.c.b16 %v598, %v594
      %v823 = vpack.c.b16 %v603, %v599
      %v824 = vpack.c.b16 %v604, %v600
      %v825 = vpack.c.b16 %v605, %v601
      %v826 = vpack.c.b16 %v606, %v602
      %v827 = vpack.c.b16 %v611, %v607
      %v828 = vpack.c.b16 %v612, %v608
      %v829 = vpack.c.b16 %v613, %v609
      %v830 = vpack.c.b16 %v614, %v610
      %v831 = vpack.c.b16 %v619, %v615
      %v832 = vpack.c.b16 %v620, %v616
      %v833 = vpack.c.b16 %v621, %v617
      %v834 = vpack.c.b16 %v622, %v618
      %v835 = vpack.c.b16 %v627, %v623
      %v836 = vpack.c.b16 %v628, %v624
      %v837 = vpack.c.b16 %v629, %v625
      %v838 = vpack.c.b16 %v630, %v626
      %v839 = vpack.c.b16 %v635, %v631
      %v840 = vpack.c.b16 %v636, %v632
      %v841 = vpack.c.b16 %v637, %v633
      %v842 = vpack.c.b16 %v638, %v634
      %v843 = vpack.c.b16 %v643, %v639
      %v844 = vpack.c.b16 %v644, %v640
      %v845 = vpack.c.b16 %v645, %v641
      %v846 = vpack.c.b16 %v646, %v642
      %v847 = vpack.c.b16 %v651, %v647
      %v848 = vpack.c.b16 %v652, %v648
      %v849 = vpack.c.b16 %v653, %v649
      %v850 = vpack.c.b16 %v654, %v650
      %v851 = vpack.c.b16 %v659, %v655
      %v852 = vpack.c.b16 %v660, %v656
      %v853 = vpack.c.b16 %v661, %v657
      %v854 = vpack.c.b16 %v662, %v658
      %v855 = vpack.c.b16 %v667, %v663
      %v856 = vpack.c.b16 %v668, %v664
      %v857 = vpack.c.b16 %v669, %v665
      %v858 = vpack.c.b16 %v670, %v666
      %v859 = vpack.c.b16 %v675, %v671
      %v860 = vpack.c.b16 %v676, %v672
      %v861 = vpack.c.b16 %v677, %v673
      %v862 = vpack.c.b16 %v678, %v674
      %v863 = vpack.c.b16 %v683, %v679
      %v864 = vpack.c.b16 %v684, %v680
      %v865 = vpack.c.b16 %v685, %v681
      %v866 = vpack.c.b16 %v686, %v682
      %v867 = vpack.c.b16 %v691, %v687
      %v868 = vpack.c.b16 %v692, %v688
      %v869 = vpack.c.b16 %v693, %v689
      %v870 = vpack.c.b16 %v694, %v690
      %v871 = vpack.c.b16 %v699, %v695
      %v872 = vpack.c.b16 %v700, %v696
      %v873 = vpack.c.b16 %v701, %v697
      %v874 = vpack.c.b16 %v702, %v698
      %v875 = vpack.c.b16 %v707, %v703
      %v876 = vpack.c.b16 %v708, %v704
      %v877 = vpack.c.b16 %v709, %v705
      %v878 = vpack.c.b16 %v710, %v706
      %v879 = vpack.c.b16 %v715, %v711
      %v880 = vpack.c.b16 %v716, %v712
      %v881 = vpack.c.b16 %v717, %v713
      %v882 = vpack.c.b16 %v718, %v714
      %v883 = vpack.c.b16 %v723, %v719
      %v884 = vpack.c.b16 %v724, %v720
      %v885 = vpack.c.b16 %v725, %v721
      %v886 = vpack.c.b16 %v726, %v722
      %v887 = vpack.c.b16 %v731, %v727
      %v888 = vpack.c.b16 %v732, %v728
      %v889 = vpack.c.b16 %v733, %v729
      %v890 = vpack.c.b16 %v734, %v730
      %v891 = vpack.c.b16 %v739, %v735
      %v892 = vpack.c.b16 %v740, %v736
      %v893 = vpack.c.b16 %v741, %v737
      %v894 = vpack.c.b16 %v742, %v738
      %v895 = vpack.c.b16 %v747, %v743
      %v896 = vpack.c.b16 %v748, %v744
      %v897 = vpack.c.b16 %v749, %v745
      %v898 = vpack.c.b16 %v750, %v746
      %v899 = vpack.c.b16 %v755, %v751
      %v900 = vpack.c.b16 %v756, %v752
      %v901 = vpack.c.b16 %v757, %v753
      %v902 = vpack.c.b16 %v758, %v754
      %v903 = vpack.c.b16 %v763, %v759
      %v904 = vpack.c.b16 %v764, %v760
      %v905 = vpack.c.b16 %v765, %v761
      %v906 = vpack.c.b16 %v766, %v762
      %v907 = vpack.c.b16 %v771, %v767
      %v908 = vpack.c.b16 %v772, %v768
      %v909 = vpack.c.b16 %v773, %v769
      %v910 = vpack.c.b16 %v774, %v770
      %v911 = vpack.c.b16 %v779, %v775
      %v912 = vpack.c.b16 %v780, %v776
      %v913 = vpack.c.b16 %v781, %v777
      %v914 = vpack.c.b16 %v782, %v778
      %v915 = vpack.c.b16 %v787, %v783
      %v916 = vpack.c.b16 %v788, %v784
      %v917 = vpack.c.b16 %v789, %v785
      %v918 = vpack.c.b16 %v790, %v786
      %1047 = vmatprep.subr.bf16.mxu0 %v792
      %1048 = vmatpush1.bf16.msra.mxu0 %v791
      %1049 = vmatprep.subr.bf16.mxu0 %v796
      %1050 = vmatpush1.bf16.msra.mxu0 %v795
      %1051 = vmatprep.subr.bf16.mxu0 %v800
      %1052 = vmatpush1.bf16.msra.mxu0 %v799
      %1053 = vmatprep.subr.bf16.mxu0 %v804
      %1054 = vmatpush1.bf16.msra.mxu0 %v803
      %1055 = vmatprep.subr.bf16.mxu0 %v808
      %1056 = vmatpush1.bf16.msra.mxu0 %v807
      %1057 = vmatprep.subr.bf16.mxu0 %v812
      %1058 = vmatpush1.bf16.msra.mxu0 %v811
      %1059 = vmatprep.subr.bf16.mxu0 %v816
      %1060 = vmatpush1.bf16.msra.mxu0 %v815
      %1061 = vmatprep.subr.bf16.mxu0 %v820
      %1062 = vmatpush1.bf16.msra.mxu0 %v819
      %1063 = vmatprep.subr.bf16.mxu0 %v824
      %1064 = vmatpush1.bf16.msra.mxu0 %v823
      %1065 = vmatprep.subr.bf16.mxu0 %v828
      %1066 = vmatpush1.bf16.msra.mxu0 %v827
      %1067 = vmatprep.subr.bf16.mxu0 %v832
      %1068 = vmatpush1.bf16.msra.mxu0 %v831
      %1069 = vmatprep.subr.bf16.mxu0 %v836
      %1070 = vmatpush1.bf16.msra.mxu0 %v835
      %1071 = vmatprep.subr.bf16.mxu0 %v840
      %1072 = vmatpush1.bf16.msra.mxu0 %v839
      %1073 = vmatprep.subr.bf16.mxu0 %v844
      %1074 = vmatpush1.bf16.msra.mxu0 %v843
      %1075 = vmatprep.subr.bf16.mxu0 %v848
      %1076 = vmatpush1.bf16.msra.mxu0 %v847
      %1077 = vmatprep.subr.bf16.mxu0 %v852
      %1078 = vmatpush1.bf16.msra.mxu0 %v851
      %1079 = vmatprep.mubr.bf16.mxu0 %v400
      %1080 = vmatmul.mubr.bf16.gmra.mrb[0].mxu0 %v399
      %v1081 = vpop.f32.mrb[0].mxu0
      %v1082 = vadd.f32 0.0, %v1081
      %v1083 = vpop.f32.mrb[0].mxu0
      %v1084 = vadd.f32 0.0, %v1083
      %v1085 = vpop.f32.mrb[0].mxu0
      %v1086 = vpop.f32.mrb[0].mxu0
      %1087 = vdwg.mxu0
      %1088 = vmatprep.subr.bf16.mxu0 %v856
      %1089 = vmatpush1.bf16.msra.mxu0 %v855
      %1090 = vmatprep.subr.bf16.mxu0 %v860
      %1091 = vmatpush1.bf16.msra.mxu0 %v859
      %1092 = vmatprep.subr.bf16.mxu0 %v864
      %1093 = vmatpush1.bf16.msra.mxu0 %v863
      %1094 = vmatprep.subr.bf16.mxu0 %v868
      %1095 = vmatpush1.bf16.msra.mxu0 %v867
      %1096 = vmatprep.subr.bf16.mxu0 %v872
      %1097 = vmatpush1.bf16.msra.mxu0 %v871
      %1098 = vmatprep.subr.bf16.mxu0 %v876
      %1099 = vmatpush1.bf16.msra.mxu0 %v875
      %1100 = vmatprep.subr.bf16.mxu0 %v880
      %1101 = vmatpush1.bf16.msra.mxu0 %v879
      %1102 = vmatprep.subr.bf16.mxu0 %v884
      %1103 = vmatpush1.bf16.msra.mxu0 %v883
      %1104 = vmatprep.subr.bf16.mxu0 %v888
      %1105 = vmatpush1.bf16.msra.mxu0 %v887
      %1106 = vmatprep.subr.bf16.mxu0 %v892
      %1107 = vmatpush1.bf16.msra.mxu0 %v891
      %1108 = vmatprep.subr.bf16.mxu0 %v896
      %1109 = vmatpush1.bf16.msra.mxu0 %v895
      %1110 = vmatprep.subr.bf16.mxu0 %v900
      %1111 = vmatpush1.bf16.msra.mxu0 %v899
      %1112 = vmatprep.subr.bf16.mxu0 %v904
      %1113 = vmatpush1.bf16.msra.mxu0 %v903
      %1114 = vmatprep.subr.bf16.mxu0 %v908
      %1115 = vmatpush1.bf16.msra.mxu0 %v907
      %1116 = vmatprep.subr.bf16.mxu0 %v912
      %1117 = vmatpush1.bf16.msra.mxu0 %v911
      %1118 = vmatprep.subr.bf16.mxu0 %v916
      %1119 = vmatpush1.bf16.msra.mxu0 %v915
      %1120 = vmatprep.mubr.bf16.mxu0 %v402
      %1121 = vmatmul.mubr.bf16.gmra.mrb[0].mxu0 %v401
      %v1122 = vpop.f32.mrb[0].mxu0
      %v1123 = vadd.f32 %v1082, %v1122
      %v1124 = vpop.f32.mrb[0].mxu0
      %v1125 = vadd.f32 %v1084, %v1124
      %v1126 = vpop.f32.mrb[0].mxu0
      %v1127 = vpop.f32.mrb[0].mxu0
      %1128 = vdwg.mxu0
      %1129 = vmatprep.subr.bf16.mxu0 %v794
      %1130 = vmatpush1.bf16.msra.mxu0 %v793
      %1131 = vmatprep.subr.bf16.mxu0 %v798
      %1132 = vmatpush1.bf16.msra.mxu0 %v797
      %1133 = vmatprep.subr.bf16.mxu0 %v802
      %1134 = vmatpush1.bf16.msra.mxu0 %v801
      %1135 = vmatprep.subr.bf16.mxu0 %v806
      %1136 = vmatpush1.bf16.msra.mxu0 %v805
      %1137 = vmatprep.subr.bf16.mxu0 %v810
      %1138 = vmatpush1.bf16.msra.mxu0 %v809
      %1139 = vmatprep.subr.bf16.mxu0 %v814
      %1140 = vmatpush1.bf16.msra.mxu0 %v813
      %1141 = vmatprep.subr.bf16.mxu0 %v818
      %1142 = vmatpush1.bf16.msra.mxu0 %v817
      %1143 = vmatprep.subr.bf16.mxu0 %v822
      %1144 = vmatpush1.bf16.msra.mxu0 %v821
      %1145 = vmatprep.subr.bf16.mxu0 %v826
      %1146 = vmatpush1.bf16.msra.mxu0 %v825
      %1147 = vmatprep.subr.bf16.mxu0 %v830
      %1148 = vmatpush1.bf16.msra.mxu0 %v829
      %1149 = vmatprep.subr.bf16.mxu0 %v834
      %1150 = vmatpush1.bf16.msra.mxu0 %v833
      %1151 = vmatprep.subr.bf16.mxu0 %v838
      %1152 = vmatpush1.bf16.msra.mxu0 %v837
      %1153 = vmatprep.subr.bf16.mxu0 %v842
      %1154 = vmatpush1.bf16.msra.mxu0 %v841
      %1155 = vmatprep.subr.bf16.mxu0 %v846
      %1156 = vmatpush1.bf16.msra.mxu0 %v845
      %1157 = vmatprep.subr.bf16.mxu0 %v850
      %1158 = vmatpush1.bf16.msra.mxu0 %v849
      %1159 = vmatprep.subr.bf16.mxu0 %v854
      %1160 = vmatpush1.bf16.msra.mxu0 %v853
      %1161 = vmatprep.mubr.bf16.mxu0 %v400
      %1162 = vmatmul.mubr.bf16.gmra.mrb[0].mxu0 %v399
      %v1163 = vpop.f32.mrb[0].mxu0
      %v1164 = vadd.f32 0.0, %v1163
      %v1165 = vpop.f32.mrb[0].mxu0
      %v1166 = vadd.f32 0.0, %v1165
      %v1167 = vpop.f32.mrb[0].mxu0
      %v1168 = vpop.f32.mrb[0].mxu0
      %1169 = vdwg.mxu0
      %1170 = vmatprep.subr.bf16.mxu0 %v858
      %1171 = vmatpush1.bf16.msra.mxu0 %v857
      %1172 = vmatprep.subr.bf16.mxu0 %v862
      %1173 = vmatpush1.bf16.msra.mxu0 %v861
      %1174 = vmatprep.subr.bf16.mxu0 %v866
      %1175 = vmatpush1.bf16.msra.mxu0 %v865
      %1176 = vmatprep.subr.bf16.mxu0 %v870
      %1177 = vmatpush1.bf16.msra.mxu0 %v869
      %1178 = vmatprep.subr.bf16.mxu0 %v874
      %1179 = vmatpush1.bf16.msra.mxu0 %v873
      %1180 = vmatprep.subr.bf16.mxu0 %v878
      %1181 = vmatpush1.bf16.msra.mxu0 %v877
      %1182 = vmatprep.subr.bf16.mxu0 %v882
      %1183 = vmatpush1.bf16.msra.mxu0 %v881
      %1184 = vmatprep.subr.bf16.mxu0 %v886
      %1185 = vmatpush1.bf16.msra.mxu0 %v885
      %1186 = vmatprep.subr.bf16.mxu0 %v890
      %1187 = vmatpush1.bf16.msra.mxu0 %v889
      %1188 = vmatprep.subr.bf16.mxu0 %v894
      %1189 = vmatpush1.bf16.msra.mxu0 %v893
      %1190 = vmatprep.subr.bf16.mxu0 %v898
      %1191 = vmatpush1.bf16.msra.mxu0 %v897
      %1192 = vmatprep.subr.bf16.mxu0 %v902
      %1193 = vmatpush1.bf16.msra.mxu0 %v901
      %1194 = vmatprep.subr.bf16.mxu0 %v906
      %1195 = vmatpush1.bf16.msra.mxu0 %v905
      %1196 = vmatprep.subr.bf16.mxu0 %v910
      %1197 = vmatpush1.bf16.msra.mxu0 %v909
      %1198 = vmatprep.subr.bf16.mxu0 %v914
      %1199 = vmatpush1.bf16.msra.mxu0 %v913
      %1200 = vmatprep.subr.bf16.mxu0 %v918
      %1201 = vmatpush1.bf16.msra.mxu0 %v917
      %1202 = vmatprep.mubr.bf16.mxu0 %v402
      %1203 = vmatmul.mubr.bf16.gmra.mrb[0].mxu0 %v401
      %v1204 = vpop.f32.mrb[0].mxu0
      %v1205 = vadd.f32 %v1164, %v1204
      %v1206 = vpop.f32.mrb[0].mxu0
      %v1207 = vadd.f32 %v1166, %v1206
      %v1208 = vpop.f32.mrb[0].mxu0
      %v1209 = vpop.f32.mrb[0].mxu0
      %1210 = vdwg.mxu0
      %v1211 = vadd.f32 %v259, %v1123
      %v1212 = vadd.f32 %v260, %v1125
      %v1213 = vadd.f32 %v261, %v1205
      %v1214 = vadd.f32 %v262, %v1207
      %1215 = vst [vmem:[#allocation2] sm:$0xff] %v1211
      %1216 = vst [vmem:[#allocation2 + $0x8] sm:$0xff] %v1212
      %1217 = vst [vmem:[#allocation2 + $0x10] sm:$0xff] %v1213
      %1218 = vst [vmem:[#allocation2 + $0x18] sm:$0xff] %v1214
      %p1219 = scmp.eq.s32.totalorder %s20, 7
      // Predicated region
      $region41: #{discriminator_forward.8} parent=35 // pred_check
        %p1220 = pneg %p1219
      $region42: #{discriminator_forward.8} parent=35 // pred_check_branch
        %1222 = sbr.rel (%p1220) target = $region44
      $region43: #{discriminator_forward.8} parent=35 // pred_region
        %v1223 = vld [vmem:[#allocation2] sm:$0xff]
        %v1224 = vld [vmem:[#allocation2 + $0x8] sm:$0xff]
        %v1225 = vld [vmem:[#allocation2 + $0x10] sm:$0xff]
        %v1226 = vld [vmem:[#allocation2 + $0x18] sm:$0xff]
        %v1227 = vld [vmem:[%s2] sm:$0xf]
        %v1229 = vlaneseq
        %v1230 = vshrl.u32 %v1229, 7
        %v1231 = vsub.s32 0, %v1230
        %v1232 = vrot.slane %v1227, %v1231
        %v1233 = vlaneseq
        %v1234 = vshrl.u32 %v1233, 7
        %v1235 = vsub.s32 1, %v1234
        %v1236 = vrot.slane %v1227, %v1235
        %v1237 = vlaneseq
        %v1238 = vshrl.u32 %v1237, 7
        %v1239 = vsub.s32 2, %v1238
        %v1240 = vrot.slane %v1227, %v1239
        %v1241 = vlaneseq
        %v1242 = vshrl.u32 %v1241, 7
        %v1243 = vsub.s32 3, %v1242
        %v1244 = vrot.slane %v1227, %v1243
        %v1249 = vmul.f32 %v1223, %v1232
        %v1250 = vmul.f32 %v1224, %v1236
        %v1251 = vmul.f32 %v1225, %v1240
        %v1252 = vmul.f32 %v1226, %v1244
        %v1253 = vld [vmem:[%s3] sm:$0xf]
        %v1255 = vlaneseq
        %v1256 = vshrl.u32 %v1255, 7
        %v1257 = vsub.s32 0, %v1256
        %v1258 = vrot.slane %v1253, %v1257
        %v1259 = vlaneseq
        %v1260 = vshrl.u32 %v1259, 7
        %v1261 = vsub.s32 1, %v1260
        %v1262 = vrot.slane %v1253, %v1261
        %v1263 = vlaneseq
        %v1264 = vshrl.u32 %v1263, 7
        %v1265 = vsub.s32 2, %v1264
        %v1266 = vrot.slane %v1253, %v1265
        %v1267 = vlaneseq
        %v1268 = vshrl.u32 %v1267, 7
        %v1269 = vsub.s32 3, %v1268
        %v1270 = vrot.slane %v1253, %v1269
        %v1275 = vadd.f32 %v1249, %v1258
        %v1276 = vadd.f32 %v1250, %v1262
        %v1277 = vadd.f32 %v1251, %v1266
        %v1278 = vadd.f32 %v1252, %v1270
        %vm1279 = vcmp.gt.f32.partialorder %v1275, 0.0
        %vm1280 = vcmp.gt.f32.partialorder %v1276, 0.0
        %vm1281 = vcmp.gt.f32.partialorder %v1277, 0.0
        %vm1282 = vcmp.gt.f32.partialorder %v1278, 0.0
        %v1283 = vmul.f32 %v1275, 0.2
        %v1284 = vmul.f32 %v1276, 0.2
        %v1285 = vmul.f32 %v1277, 0.2
        %v1286 = vmul.f32 %v1278, 0.2
        %v1287 = vsel %vm1279, %v1275, %v1283
        %v1288 = vsel %vm1280, %v1276, %v1284
        %v1289 = vsel %vm1281, %v1277, %v1285
        %v1290 = vsel %vm1282, %v1278, %v1286
        %v1291 = vpack.c.bf16 %v1287, %v1287
        %v1292 = vpack.c.bf16 %v1288, %v1288
        %v1293 = vpack.c.bf16 %v1289, %v1289
        %v1294 = vpack.c.bf16 %v1290, %v1290
        %v1299 = vunpack.c.l.b16 %v1291
        %v1300 = vunpack.c.l.b16 %v1292
        %v1301 = vunpack.c.l.b16 %v1293
        %v1302 = vunpack.c.l.b16 %v1294
        %v1303 = vpack.c.b16 %v1300, %v1299
        %v1304 = vpack.c.b16 %v1302, %v1301
        %1307 = vst [vmem:[%s250] sm:$0xff] %v1303
        %1308 = vst [vmem:[%s250 + $0x8] sm:$0xff] %v1304
      $region44: #{discriminator_forward.8} parent=35 // pred_fallthru
        _
      %p1309 = scmp.lt.s32.totalorder %s19, 0
      %s1310 = scalar_select %p1309, %s19, 0
      %s1311 = smul.addr %s1310, 4
      %s1312 = smul.addr %s1311, 4
      %s1313 = scalar_lea.vmem %s4, %s1312
      // Predicated region
      $region45: #{discriminator_forward.8} parent=35 // pred_check
        %p1314 = pneg %p141
      $region46: #{discriminator_forward.8} parent=35 // pred_check_branch
        %1316 = sbr.rel (%p1314) target = $region48
      $region47: #{discriminator_forward.8} parent=35 // pred_region
        _
      $region48: #{discriminator_forward.8} parent=35 // pred_fallthru
        _
      // Predicated region
      $region49: #{discriminator_forward.8} parent=35 // pred_check
        %p1317 = pneg %p141
      $region50: #{discriminator_forward.8} parent=35 // pred_check_branch
        %1319 = sbr.rel (%p1317) target = $region52
      $region51: #{discriminator_forward.8} parent=35 // pred_region
        %p1320 = scmp.lt.s32.totalorder %s19, 0
        %s1321 = scalar_select %p1320, %s19, 0
        %s1322 = smul.addr %s1321, 4
        %s1323 = smul.addr %s1322, 4
        %s1324 = scalar_lea.vmem %s4, %s1323
      $region52: #{discriminator_forward.8} parent=35 // pred_fallthru
        _
    $region36: #{discriminator_forward.8} parent=5 // pred_fallthru
      _
    %p1325 = scmp.le.s32.totalorder 2, %s10
    // Predicated region
    $region53: #{discriminator_forward.8} parent=5 // pred_check
      %p1326 = pneg %p1325
    $region54: #{discriminator_forward.8} parent=5 // pred_check_branch
      %1328 = sbr.rel (%p1326) target = $region56
    $region55: #{discriminator_forward.8} parent=5 // pred_region
      %s1329 = ssub.s32 %s10, 2
    $region56: #{discriminator_forward.8} parent=5 // pred_fallthru
      _
  $region6: #{discriminator_forward.8} parent=0 // loop_footer
    %s14 = sadd.s32 1, %s10
  $region7: #{discriminator_forward.8} parent=0 // loop_footer_branch
    %9 = sbr.rel target = $region3
  $region8: #{discriminator_forward.8} parent=0 // loop_exit
    _

// kernel: discriminator_forward.9
$region0: #{discriminator_forward.9}
  #allocation0 [shape = 'u32[]', space=smem, size = 0x4, offset = 0x4, fixed_abs, tag = 'smem constant byte address 0x4 - core index']
  #allocation1 [shape = 'u32[144,128]{1,0:T(1,128)}', space=vmem, size = 0x12000, scoped, tag = 'internal scratch']
  #allocation2 [shape = 'f32[1,1]{1,0:T(1,128)S(1)}', space=vmem, size = 0x200, scoped, tag = 'scoped memory for discriminator_forward.9']
  %s0 = inlined_call_operand.vmem [shape: bf16[2,4,512], index: 0, kind: input, shape index: {}]
  %s1 = inlined_call_operand.vmem [shape: f32[1,512], index: 1, kind: input, shape index: {}]
  %s2 = inlined_call_operand.<no memory space> [shape: f32[1,1], index: 2, kind: input, shape index: {}]
  %s3 = inlined_call_operand.vmem [shape: f32[2,1], index: 3, kind: output, shape index: {}]
  %s4 = sld [smem:[#allocation0]]
  $region22: #{discriminator_forward.9} parent=0
    _
  %s6 = ssub.s32 1, %s4
  %s7 = scalar_select 0, %s6, %s4
  %v8 = vstv %s2
  %9 = vst [vmem:[#allocation2] sm:$0x1] %v8
  // Predicated region
  $region2: #{discriminator_forward.9} parent=0 // pred_check
    _
  $region3: #{discriminator_forward.9} parent=0 // pred_check_branch
    %11 = sbr.rel (0) target = $region5
  $region4: #{discriminator_forward.9} parent=0 // pred_region
    _
  $region5: #{discriminator_forward.9} parent=0 // pred_fallthru
    _
  // Predicated region
  $region6: #{discriminator_forward.9} parent=0 // pred_check
    _
  $region7: #{discriminator_forward.9} parent=0 // pred_check_branch
    %13 = sbr.rel (0) target = $region9
  $region8: #{discriminator_forward.9} parent=0 // pred_region
    _
  $region9: #{discriminator_forward.9} parent=0 // pred_fallthru
    _
  // Predicated region
  $region10: #{discriminator_forward.9} parent=0 // pred_check
    _
  $region11: #{discriminator_forward.9} parent=0 // pred_check_branch
    %15 = sbr.rel (0) target = $region13
  $region12: #{discriminator_forward.9} parent=0 // pred_region
    _
  $region13: #{discriminator_forward.9} parent=0 // pred_fallthru
    _
  %v16 = vld [vmem:[%s0] sm:$0xff]
  %v17 = vld [vmem:[%s0 + $0x8] sm:$0xff]
  %v18 = vunpack.c.l.bf16 %v16
  %v19 = vunpack.c.h.bf16 %v16
  %v20 = vunpack.c.l.bf16 %v17
  %v21 = vunpack.c.h.bf16 %v17
  %v26 = vcombine.high %v18, %v18
  %v27 = vcombine.high %v19, %v19
  %v28 = vcombine.high %v20, %v20
  %v29 = vcombine.high %v21, %v21
  %vm34 = vcmask 1043456
  %v35 = vsel %vm34, %v18, 0.0
  %v36 = vrot.slane %v35, 4
  %v37 = vadd.f32 %v35, %v36
  %v38 = vrot.slane %v37, 2
  %v39 = vadd.f32 %v37, %v38
  %v40 = vrot.slane %v39, 1
  %v41 = vadd.f32 %v39, %v40
  %v42 = vsel %vm34, %v26, 0.0
  %v43 = vrot.slane %v42, 4
  %v44 = vadd.f32 %v42, %v43
  %v45 = vrot.slane %v44, 2
  %v46 = vadd.f32 %v44, %v45
  %v47 = vrot.slane %v46, 1
  %v48 = vadd.f32 %v46, %v47
  %v49 = vsel %vm34, %v19, 0.0
  %v50 = vrot.slane %v49, 4
  %v51 = vadd.f32 %v49, %v50
  %v52 = vrot.slane %v51, 2
  %v53 = vadd.f32 %v51, %v52
  %v54 = vrot.slane %v53, 1
  %v55 = vadd.f32 %v53, %v54
  %v56 = vsel %vm34, %v27, 0.0
  %v57 = vrot.slane %v56, 4
  %v58 = vadd.f32 %v56, %v57
  %v59 = vrot.slane %v58, 2
  %v60 = vadd.f32 %v58, %v59
  %v61 = vrot.slane %v60, 1
  %v62 = vadd.f32 %v60, %v61
  %v63 = vsel %vm34, %v20, 0.0
  %v64 = vrot.slane %v63, 4
  %v65 = vadd.f32 %v63, %v64
  %v66 = vrot.slane %v65, 2
  %v67 = vadd.f32 %v65, %v66
  %v68 = vrot.slane %v67, 1
  %v69 = vadd.f32 %v67, %v68
  %v70 = vsel %vm34, %v28, 0.0
  %v71 = vrot.slane %v70, 4
  %v72 = vadd.f32 %v70, %v71
  %v73 = vrot.slane %v72, 2
  %v74 = vadd.f32 %v72, %v73
  %v75 = vrot.slane %v74, 1
  %v76 = vadd.f32 %v74, %v75
  %v77 = vsel %vm34, %v21, 0.0
  %v78 = vrot.slane %v77, 4
  %v79 = vadd.f32 %v77, %v78
  %v80 = vrot.slane %v79, 2
  %v81 = vadd.f32 %v79, %v80
  %v82 = vrot.slane %v81, 1
  %v83 = vadd.f32 %v81, %v82
  %v84 = vsel %vm34, %v29, 0.0
  %v85 = vrot.slane %v84, 4
  %v86 = vadd.f32 %v84, %v85
  %v87 = vrot.slane %v86, 2
  %v88 = vadd.f32 %v86, %v87
  %v89 = vrot.slane %v88, 1
  %v90 = vadd.f32 %v88, %v89
  %v91 = vrcp.pop 4.0
  %v92 = vmul.f32 %v41, %v91
  %v93 = vmul.f32 %v48, %v91
  %v94 = vmul.f32 %v55, %v91
  %v95 = vmul.f32 %v62, %v91
  %v96 = vmul.f32 %v69, %v91
  %v97 = vmul.f32 %v76, %v91
  %v98 = vmul.f32 %v83, %v91
  %v99 = vmul.f32 %v90, %v91
  %v100 = vld [vmem:[%s1] sm:$0xf]
  %v102 = vlaneseq
  %v103 = vshrl.u32 %v102, 7
  %v104 = vsub.s32 0, %v103
  %v105 = vrot.slane %v100, %v104
  %v106 = vlaneseq
  %v107 = vshrl.u32 %v106, 7
  %v108 = vsub.s32 1, %v107
  %v109 = vrot.slane %v100, %v108
  %v110 = vlaneseq
  %v111 = vshrl.u32 %v110, 7
  %v112 = vsub.s32 2, %v111
  %v113 = vrot.slane %v100, %v112
  %v114 = vlaneseq
  %v115 = vshrl.u32 %v114, 7
  %v116 = vsub.s32 3, %v115
  %v117 = vrot.slane %v100, %v116
  %v122 = vmul.f32 %v92, %v105
  %v123 = vmul.f32 %v93, %v109
  %v124 = vmul.f32 %v94, %v113
  %v125 = vmul.f32 %v95, %v117
  %v126 = vmul.f32 %v96, %v105
  %v127 = vmul.f32 %v97, %v109
  %v128 = vmul.f32 %v98, %v113
  %v129 = vmul.f32 %v99, %v117
  %v138 = vrot.slane %v126, 7
  %vm139 = vcmask 1041409
  %v140 = vsel %vm139, %v138, %v122
  %v141 = vrot.slane %v127, 7
  %v142 = vsel %vm139, %v141, %v123
  %v143 = vrot.slane %v128, 7
  %v144 = vsel %vm139, %v143, %v124
  %v145 = vrot.slane %v129, 7
  %v146 = vsel %vm139, %v145, %v125
  %vm151 = vcmask 1041408
  %v152 = vsel %vm151, %v140, 0.0
  %v153 = vsel %vm151, %v142, 0.0
  %v154 = vadd.f32 %v152, %v153
  %v155 = vsel %vm151, %v144, 0.0
  %v156 = vadd.f32 %v154, %v155
  %v157 = vsel %vm151, %v146, 0.0
  %v158 = vadd.f32 %v156, %v157
  %159 = vadd.xlane.f32.xlu0 %v158
  %v160 = vpop.xlane.xlu0 %159
  %v161 = vld [vmem:[#allocation2] sm:$0x1]
  %v163 = vlaneseq
  %v164 = vshrl.u32 %v163, 7
  %v165 = vsub.s32 0, %v164
  %v166 = vrot.slane %v161, %v165
  %v168 = vadd.f32 %v160, %v166
  %v169 = vxor.u32 %v168, 2147483648
  %v170 = vmul.f32 %v169, 1.442695
  %v171 = vpow.pop %v170
  %v172 = vadd.f32 %v171, 1.0
  %v173 = vrcp.pop %v172
  %v174 = vmul.f32 1.0, %v173
  %vm175 = vcmask 1024
  %176 = vst.msk [vmem:[%s3] sm:$0x3] %vm175, %v174
  // Predicated region
  $region14: #{discriminator_forward.9} parent=0 // pred_check
    _
  $region15: #{discriminator_forward.9} parent=0 // pred_check_branch
    %178 = sbr.rel (0) target = $region17
  $region16: #{discriminator_forward.9} parent=0 // pred_region
    _
  $region17: #{discriminator_forward.9} parent=0 // pred_fallthru
    _
  // Predicated region
  $region18: #{discriminator_forward.9} parent=0 // pred_check
    _
  $region19: #{discriminator_forward.9} parent=0 // pred_check_branch
    %180 = sbr.rel (0) target = $region21
  $region20: #{discriminator_forward.9} parent=0 // pred_region
    _
  $region21: #{discriminator_forward.9} parent=0 // pred_fallthru
    _

</llo_original>
